<compile_context>
chip_gen: v7x
topology: tpu7x:2x2x1
jax: 0.10.0
libtpu: 0.0.40
codegen_flags: <defaults>
</compile_context>

<pallas_src>
import functools

import jax
import jax.numpy as jnp
from jax import lax
from jax.experimental import pallas as pl
from jax.experimental.pallas import tpu as pltpu


def conv_relu_maxpool_kernel(x_ref, w_ref, b_ref, selr_ref, selc_ref, o_ref, *,
                             c_in, c_out, ksize, h_out, w_out, pool):
    # ---- Conv2d (valid, stride 1), vectorized over all output channels ----
    acc = jnp.zeros((c_out, h_out, w_out), dtype=jnp.float32)
    for ci in range(c_in):
        for kh in range(ksize):
            for kw in range(ksize):
                tap = (ci * ksize + kh) * ksize + kw
                patch = x_ref[0, ci, kh:kh + h_out, kw:kw + w_out]   # (h_out, w_out)
                # w_ref[tap]: (c_out, 1, w_out); broadcast over h_out sublanes.
                acc = acc + patch[None, :, :].astype(jnp.float32) * w_ref[tap]

    # ---- bias + ReLU ----
    acc = jnp.maximum(acc + b_ref[...], 0.0)                         # (c_out, h_out, w_out)

    # ---- MaxPool2d(pool), floor mode ----
    # 1) sliding-window max via pool*pool shifted unit-stride slices (VPU only)
    hw = h_out - pool + 1
    ww = w_out - pool + 1
    win = None
    for ph in range(pool):
        for pw in range(pool):
            s = acc[:, ph:ph + hw, pw:pw + ww]
            win = s if win is None else jnp.maximum(win, s)          # (c_out, hw, ww)

    # 2) stride-`pool` decimation with precomputed one-hot selectors (exact in f32)
    rows = jnp.einsum('cih,chw->ciw', selr_ref[...], win,
                      preferred_element_type=jnp.float32)            # (c_out, hp, ww)
    out = jnp.einsum('chw,cwj->chj', rows, selc_ref[...],
                     preferred_element_type=jnp.float32)             # (c_out, hp, wp)

    o_ref[0] = out.astype(o_ref.dtype)


def conv_block_forward(x, weight, bias, pool_size=2):
    """ConvBlock.forward: maxpool(relu(conv2d(x))), NCHW like PyTorch."""
    n, c_in, h, w = x.shape
    c_out, c_in_w, kh, kw = weight.shape
    assert c_in == c_in_w and kh == kw
    k = kh
    h_out = h - k + 1
    w_out = w - k + 1
    hp = h_out // pool_size
    wp = w_out // pool_size
    hw = h_out - pool_size + 1
    ww = w_out - pool_size + 1
    n_taps = c_in * k * k

    # Weights: (C_out, C_in, K, K) -> (n_taps, C_out, 1, W_out); each tap is a
    # per-output-channel scale pre-replicated across the lane (W_out) dim so the
    # kernel only broadcasts along sublanes.
    w_taps = weight.reshape(c_out, n_taps).T.reshape(n_taps, c_out, 1, 1)
    w_taps = jnp.broadcast_to(w_taps, (n_taps, c_out, 1, w_out)).astype(jnp.float32)
    b_row = jnp.broadcast_to(bias.reshape(c_out, 1, 1),
                             (c_out, 1, w_out)).astype(jnp.float32)

    # Grid-invariant 0/1 decimation selectors (hoisted out of the kernel).
    selr = (jnp.arange(hw)[None, :] ==
            (jnp.arange(hp)[:, None] * pool_size)).astype(jnp.float32)   # (hp, hw)
    selr = jnp.broadcast_to(selr[None], (c_out, hp, hw))
    selc = (jnp.arange(ww)[:, None] ==
            (jnp.arange(wp)[None, :] * pool_size)).astype(jnp.float32)   # (ww, wp)
    selc = jnp.broadcast_to(selc[None], (c_out, ww, wp))

    kernel = functools.partial(
        conv_relu_maxpool_kernel,
        c_in=c_in, c_out=c_out, ksize=k,
        h_out=h_out, w_out=w_out, pool=pool_size)

    return pl.pallas_call(
        kernel,
        out_shape=jax.ShapeDtypeStruct((n, c_out, hp, wp), x.dtype),
        grid=(n,),
        in_specs=[
            pl.BlockSpec((1, c_in, h, w), lambda i: (i, 0, 0, 0)),
            pl.BlockSpec((n_taps, c_out, 1, w_out), lambda i: (0, 0, 0, 0)),
            pl.BlockSpec((c_out, 1, w_out), lambda i: (0, 0, 0)),
            pl.BlockSpec((c_out, hp, hw), lambda i: (0, 0, 0)),
            pl.BlockSpec((c_out, ww, wp), lambda i: (0, 0, 0)),
        ],
        out_specs=pl.BlockSpec((1, c_out, hp, wp), lambda i: (i, 0, 0, 0)),
        compiler_params=pltpu.CompilerParams(
            dimension_semantics=("parallel",)),
    )(x, w_taps, b_row, selr, selc)


def reference_forward(x, weight, bias, pool=2):
    y = lax.conv_general_dilated(
        x, weight, window_strides=(1, 1), padding="VALID",
        dimension_numbers=("NCHW", "OIHW", "NCHW"))
    y = y + bias[None, :, None, None]
    y = jnp.maximum(y, 0.0)
    y = lax.reduce_window(y, -jnp.inf, lax.max,
                          (1, 1, pool, pool), (1, 1, pool, pool), "VALID")
    return y


if __name__ == "__main__":
    key = jax.random.PRNGKey(0)
    kx, kw_, kb = jax.random.split(key, 3)

    # Small shapes consistent with the module: batch=2, C_in=4, 16x16, C_out=6, k=3.
    N, C_IN, H, W = 2, 4, 16, 16
    C_OUT, K, POOL = 6, 3, 2

    x = jax.random.normal(kx, (N, C_IN, H, W), dtype=jnp.float32)

    # Deterministic params mimicking PyTorch Conv2d default U(-1/sqrt(fan_in), +).
    fan_in = C_IN * K * K
    bound = 1.0 / (fan_in ** 0.5)
    weight = jax.random.uniform(kw_, (C_OUT, C_IN, K, K), jnp.float32, -bound, bound)
    bias = jax.random.uniform(kb, (C_OUT,), jnp.float32, -bound, bound)

    out = jax.block_until_ready(conv_block_forward(x, weight, bias, pool_size=POOL))

    ref = reference_forward(x, weight, bias, pool=POOL)
    assert out.shape == (N, C_OUT, (H - K + 1) // POOL, (W - K + 1) // POOL)
    if not jnp.allclose(out, ref, atol=1e-4, rtol=1e-4):
        raise AssertionError("Pallas ConvBlock output mismatch vs reference")

    print("KERNEL_OK")
</pallas_src>

<mosaic_0001>
module attributes {stable_mosaic.version = 11 : i64} {
  func.func @conv_relu_maxpool_kernel(%arg0: i32, %arg1: memref<1x4x16x16xf32, #tpu.memory_space<vmem>>, %arg2: memref<36x6x1x14xf32, #tpu.memory_space<vmem>>, %arg3: memref<6x1x14xf32, #tpu.memory_space<vmem>>, %arg4: memref<6x7x13xf32, #tpu.memory_space<vmem>>, %arg5: memref<6x13x7xf32, #tpu.memory_space<vmem>>, %arg6: memref<1x6x7x7xf32, #tpu.memory_space<vmem>>) attributes {dimension_semantics = [#tpu.dimension_semantics<parallel>], iteration_bounds = array<i64: 2>, scalar_prefetch = 0 : i64, scratch_operands = 0 : i64, tpu.core_type = #tpu.core_type<tc>, window_params = [{transform_indices = @transform_0, window_bounds = array<i64: 1, 4, 16, 16>}, {pipeline_mode = #tpu.pipeline_mode<synchronous>, transform_indices = @transform_1, window_bounds = array<i64: 36, 6, 1, 14>}, {pipeline_mode = #tpu.pipeline_mode<synchronous>, transform_indices = @transform_2, window_bounds = array<i64: 6, 1, 14>}, {pipeline_mode = #tpu.pipeline_mode<synchronous>, transform_indices = @transform_3, window_bounds = array<i64: 6, 7, 13>}, {pipeline_mode = #tpu.pipeline_mode<synchronous>, transform_indices = @transform_4, window_bounds = array<i64: 6, 13, 7>}, {transform_indices = @transform_5, window_bounds = array<i64: 1, 6, 7, 7>}]} {
    %cst = arith.constant 0.000000e+00 : f32
    %0 = vector.broadcast %cst : f32 to vector<6x14x14xf32>
    %c0 = arith.constant 0 : index
    %c0_0 = arith.constant 0 : index
    %c0_1 = arith.constant 0 : index
    %c0_2 = arith.constant 0 : index
    %1 = vector.load %arg1[%c0, %c0_0, %c0_1, %c0_2] : memref<1x4x16x16xf32, #tpu.memory_space<vmem>>, vector<1x1x14x14xf32>
    %2 = vector.shape_cast %1 : vector<1x1x14x14xf32> to vector<14x14xf32>
    %3 = vector.shape_cast %2 : vector<14x14xf32> to vector<1x14x14xf32>
    %c0_3 = arith.constant 0 : index
    %c0_4 = arith.constant 0 : index
    %c0_5 = arith.constant 0 : index
    %c0_6 = arith.constant 0 : index
    %4 = vector.load %arg2[%c0_3, %c0_4, %c0_5, %c0_6] : memref<36x6x1x14xf32, #tpu.memory_space<vmem>>, vector<1x6x1x14xf32>
    %5 = vector.shape_cast %4 : vector<1x6x1x14xf32> to vector<6x1x14xf32>
    %6 = vector.broadcast %3 : vector<1x14x14xf32> to vector<6x14x14xf32>
    %7 = vector.broadcast %5 : vector<6x1x14xf32> to vector<6x14x14xf32>
    %8 = arith.mulf %6, %7 : vector<6x14x14xf32>
    %9 = arith.addf %0, %8 : vector<6x14x14xf32>
    %c0_7 = arith.constant 0 : index
    %c0_8 = arith.constant 0 : index
    %c0_9 = arith.constant 0 : index
    %c1 = arith.constant 1 : index
    %10 = vector.load %arg1[%c0_7, %c0_8, %c0_9, %c1] : memref<1x4x16x16xf32, #tpu.memory_space<vmem>>, vector<1x1x14x14xf32>
    %11 = vector.shape_cast %10 : vector<1x1x14x14xf32> to vector<14x14xf32>
    %12 = vector.shape_cast %11 : vector<14x14xf32> to vector<1x14x14xf32>
    %c1_10 = arith.constant 1 : index
    %c0_11 = arith.constant 0 : index
    %c0_12 = arith.constant 0 : index
    %c0_13 = arith.constant 0 : index
    %13 = vector.load %arg2[%c1_10, %c0_11, %c0_12, %c0_13] : memref<36x6x1x14xf32, #tpu.memory_space<vmem>>, vector<1x6x1x14xf32>
    %14 = vector.shape_cast %13 : vector<1x6x1x14xf32> to vector<6x1x14xf32>
    %15 = vector.broadcast %12 : vector<1x14x14xf32> to vector<6x14x14xf32>
    %16 = vector.broadcast %14 : vector<6x1x14xf32> to vector<6x14x14xf32>
    %17 = arith.mulf %15, %16 : vector<6x14x14xf32>
    %18 = arith.addf %9, %17 : vector<6x14x14xf32>
    %c0_14 = arith.constant 0 : index
    %c0_15 = arith.constant 0 : index
    %c0_16 = arith.constant 0 : index
    %c2 = arith.constant 2 : index
    %19 = vector.load %arg1[%c0_14, %c0_15, %c0_16, %c2] : memref<1x4x16x16xf32, #tpu.memory_space<vmem>>, vector<1x1x14x14xf32>
    %20 = vector.shape_cast %19 : vector<1x1x14x14xf32> to vector<14x14xf32>
    %21 = vector.shape_cast %20 : vector<14x14xf32> to vector<1x14x14xf32>
    %c2_17 = arith.constant 2 : index
    %c0_18 = arith.constant 0 : index
    %c0_19 = arith.constant 0 : index
    %c0_20 = arith.constant 0 : index
    %22 = vector.load %arg2[%c2_17, %c0_18, %c0_19, %c0_20] : memref<36x6x1x14xf32, #tpu.memory_space<vmem>>, vector<1x6x1x14xf32>
    %23 = vector.shape_cast %22 : vector<1x6x1x14xf32> to vector<6x1x14xf32>
    %24 = vector.broadcast %21 : vector<1x14x14xf32> to vector<6x14x14xf32>
    %25 = vector.broadcast %23 : vector<6x1x14xf32> to vector<6x14x14xf32>
    %26 = arith.mulf %24, %25 : vector<6x14x14xf32>
    %27 = arith.addf %18, %26 : vector<6x14x14xf32>
    %c0_21 = arith.constant 0 : index
    %c0_22 = arith.constant 0 : index
    %c1_23 = arith.constant 1 : index
    %c0_24 = arith.constant 0 : index
    %28 = vector.load %arg1[%c0_21, %c0_22, %c1_23, %c0_24] : memref<1x4x16x16xf32, #tpu.memory_space<vmem>>, vector<1x1x14x14xf32>
    %29 = vector.shape_cast %28 : vector<1x1x14x14xf32> to vector<14x14xf32>
    %30 = vector.shape_cast %29 : vector<14x14xf32> to vector<1x14x14xf32>
    %c3 = arith.constant 3 : index
    %c0_25 = arith.constant 0 : index
    %c0_26 = arith.constant 0 : index
    %c0_27 = arith.constant 0 : index
    %31 = vector.load %arg2[%c3, %c0_25, %c0_26, %c0_27] : memref<36x6x1x14xf32, #tpu.memory_space<vmem>>, vector<1x6x1x14xf32>
    %32 = vector.shape_cast %31 : vector<1x6x1x14xf32> to vector<6x1x14xf32>
    %33 = vector.broadcast %30 : vector<1x14x14xf32> to vector<6x14x14xf32>
    %34 = vector.broadcast %32 : vector<6x1x14xf32> to vector<6x14x14xf32>
    %35 = arith.mulf %33, %34 : vector<6x14x14xf32>
    %36 = arith.addf %27, %35 : vector<6x14x14xf32>
    %c0_28 = arith.constant 0 : index
    %c0_29 = arith.constant 0 : index
    %c1_30 = arith.constant 1 : index
    %c1_31 = arith.constant 1 : index
    %37 = vector.load %arg1[%c0_28, %c0_29, %c1_30, %c1_31] : memref<1x4x16x16xf32, #tpu.memory_space<vmem>>, vector<1x1x14x14xf32>
    %38 = vector.shape_cast %37 : vector<1x1x14x14xf32> to vector<14x14xf32>
    %39 = vector.shape_cast %38 : vector<14x14xf32> to vector<1x14x14xf32>
    %c4 = arith.constant 4 : index
    %c0_32 = arith.constant 0 : index
    %c0_33 = arith.constant 0 : index
    %c0_34 = arith.constant 0 : index
    %40 = vector.load %arg2[%c4, %c0_32, %c0_33, %c0_34] : memref<36x6x1x14xf32, #tpu.memory_space<vmem>>, vector<1x6x1x14xf32>
    %41 = vector.shape_cast %40 : vector<1x6x1x14xf32> to vector<6x1x14xf32>
    %42 = vector.broadcast %39 : vector<1x14x14xf32> to vector<6x14x14xf32>
    %43 = vector.broadcast %41 : vector<6x1x14xf32> to vector<6x14x14xf32>
    %44 = arith.mulf %42, %43 : vector<6x14x14xf32>
    %45 = arith.addf %36, %44 : vector<6x14x14xf32>
    %c0_35 = arith.constant 0 : index
    %c0_36 = arith.constant 0 : index
    %c1_37 = arith.constant 1 : index
    %c2_38 = arith.constant 2 : index
    %46 = vector.load %arg1[%c0_35, %c0_36, %c1_37, %c2_38] : memref<1x4x16x16xf32, #tpu.memory_space<vmem>>, vector<1x1x14x14xf32>
    %47 = vector.shape_cast %46 : vector<1x1x14x14xf32> to vector<14x14xf32>
    %48 = vector.shape_cast %47 : vector<14x14xf32> to vector<1x14x14xf32>
    %c5 = arith.constant 5 : index
    %c0_39 = arith.constant 0 : index
    %c0_40 = arith.constant 0 : index
    %c0_41 = arith.constant 0 : index
    %49 = vector.load %arg2[%c5, %c0_39, %c0_40, %c0_41] : memref<36x6x1x14xf32, #tpu.memory_space<vmem>>, vector<1x6x1x14xf32>
    %50 = vector.shape_cast %49 : vector<1x6x1x14xf32> to vector<6x1x14xf32>
    %51 = vector.broadcast %48 : vector<1x14x14xf32> to vector<6x14x14xf32>
    %52 = vector.broadcast %50 : vector<6x1x14xf32> to vector<6x14x14xf32>
    %53 = arith.mulf %51, %52 : vector<6x14x14xf32>
    %54 = arith.addf %45, %53 : vector<6x14x14xf32>
    %c0_42 = arith.constant 0 : index
    %c0_43 = arith.constant 0 : index
    %c2_44 = arith.constant 2 : index
    %c0_45 = arith.constant 0 : index
    %55 = vector.load %arg1[%c0_42, %c0_43, %c2_44, %c0_45] : memref<1x4x16x16xf32, #tpu.memory_space<vmem>>, vector<1x1x14x14xf32>
    %56 = vector.shape_cast %55 : vector<1x1x14x14xf32> to vector<14x14xf32>
    %57 = vector.shape_cast %56 : vector<14x14xf32> to vector<1x14x14xf32>
    %c6 = arith.constant 6 : index
    %c0_46 = arith.constant 0 : index
    %c0_47 = arith.constant 0 : index
    %c0_48 = arith.constant 0 : index
    %58 = vector.load %arg2[%c6, %c0_46, %c0_47, %c0_48] : memref<36x6x1x14xf32, #tpu.memory_space<vmem>>, vector<1x6x1x14xf32>
    %59 = vector.shape_cast %58 : vector<1x6x1x14xf32> to vector<6x1x14xf32>
    %60 = vector.broadcast %57 : vector<1x14x14xf32> to vector<6x14x14xf32>
    %61 = vector.broadcast %59 : vector<6x1x14xf32> to vector<6x14x14xf32>
    %62 = arith.mulf %60, %61 : vector<6x14x14xf32>
    %63 = arith.addf %54, %62 : vector<6x14x14xf32>
    %c0_49 = arith.constant 0 : index
    %c0_50 = arith.constant 0 : index
    %c2_51 = arith.constant 2 : index
    %c1_52 = arith.constant 1 : index
    %64 = vector.load %arg1[%c0_49, %c0_50, %c2_51, %c1_52] : memref<1x4x16x16xf32, #tpu.memory_space<vmem>>, vector<1x1x14x14xf32>
    %65 = vector.shape_cast %64 : vector<1x1x14x14xf32> to vector<14x14xf32>
    %66 = vector.shape_cast %65 : vector<14x14xf32> to vector<1x14x14xf32>
    %c7 = arith.constant 7 : index
    %c0_53 = arith.constant 0 : index
    %c0_54 = arith.constant 0 : index
    %c0_55 = arith.constant 0 : index
    %67 = vector.load %arg2[%c7, %c0_53, %c0_54, %c0_55] : memref<36x6x1x14xf32, #tpu.memory_space<vmem>>, vector<1x6x1x14xf32>
    %68 = vector.shape_cast %67 : vector<1x6x1x14xf32> to vector<6x1x14xf32>
    %69 = vector.broadcast %66 : vector<1x14x14xf32> to vector<6x14x14xf32>
    %70 = vector.broadcast %68 : vector<6x1x14xf32> to vector<6x14x14xf32>
    %71 = arith.mulf %69, %70 : vector<6x14x14xf32>
    %72 = arith.addf %63, %71 : vector<6x14x14xf32>
    %c0_56 = arith.constant 0 : index
    %c0_57 = arith.constant 0 : index
    %c2_58 = arith.constant 2 : index
    %c2_59 = arith.constant 2 : index
    %73 = vector.load %arg1[%c0_56, %c0_57, %c2_58, %c2_59] : memref<1x4x16x16xf32, #tpu.memory_space<vmem>>, vector<1x1x14x14xf32>
    %74 = vector.shape_cast %73 : vector<1x1x14x14xf32> to vector<14x14xf32>
    %75 = vector.shape_cast %74 : vector<14x14xf32> to vector<1x14x14xf32>
    %c8 = arith.constant 8 : index
    %c0_60 = arith.constant 0 : index
    %c0_61 = arith.constant 0 : index
    %c0_62 = arith.constant 0 : index
    %76 = vector.load %arg2[%c8, %c0_60, %c0_61, %c0_62] : memref<36x6x1x14xf32, #tpu.memory_space<vmem>>, vector<1x6x1x14xf32>
    %77 = vector.shape_cast %76 : vector<1x6x1x14xf32> to vector<6x1x14xf32>
    %78 = vector.broadcast %75 : vector<1x14x14xf32> to vector<6x14x14xf32>
    %79 = vector.broadcast %77 : vector<6x1x14xf32> to vector<6x14x14xf32>
    %80 = arith.mulf %78, %79 : vector<6x14x14xf32>
    %81 = arith.addf %72, %80 : vector<6x14x14xf32>
    %c0_63 = arith.constant 0 : index
    %c1_64 = arith.constant 1 : index
    %c0_65 = arith.constant 0 : index
    %c0_66 = arith.constant 0 : index
    %82 = vector.load %arg1[%c0_63, %c1_64, %c0_65, %c0_66] : memref<1x4x16x16xf32, #tpu.memory_space<vmem>>, vector<1x1x14x14xf32>
    %83 = vector.shape_cast %82 : vector<1x1x14x14xf32> to vector<14x14xf32>
    %84 = vector.shape_cast %83 : vector<14x14xf32> to vector<1x14x14xf32>
    %c9 = arith.constant 9 : index
    %c0_67 = arith.constant 0 : index
    %c0_68 = arith.constant 0 : index
    %c0_69 = arith.constant 0 : index
    %85 = vector.load %arg2[%c9, %c0_67, %c0_68, %c0_69] : memref<36x6x1x14xf32, #tpu.memory_space<vmem>>, vector<1x6x1x14xf32>
    %86 = vector.shape_cast %85 : vector<1x6x1x14xf32> to vector<6x1x14xf32>
    %87 = vector.broadcast %84 : vector<1x14x14xf32> to vector<6x14x14xf32>
    %88 = vector.broadcast %86 : vector<6x1x14xf32> to vector<6x14x14xf32>
    %89 = arith.mulf %87, %88 : vector<6x14x14xf32>
    %90 = arith.addf %81, %89 : vector<6x14x14xf32>
    %c0_70 = arith.constant 0 : index
    %c1_71 = arith.constant 1 : index
    %c0_72 = arith.constant 0 : index
    %c1_73 = arith.constant 1 : index
    %91 = vector.load %arg1[%c0_70, %c1_71, %c0_72, %c1_73] : memref<1x4x16x16xf32, #tpu.memory_space<vmem>>, vector<1x1x14x14xf32>
    %92 = vector.shape_cast %91 : vector<1x1x14x14xf32> to vector<14x14xf32>
    %93 = vector.shape_cast %92 : vector<14x14xf32> to vector<1x14x14xf32>
    %c10 = arith.constant 10 : index
    %c0_74 = arith.constant 0 : index
    %c0_75 = arith.constant 0 : index
    %c0_76 = arith.constant 0 : index
    %94 = vector.load %arg2[%c10, %c0_74, %c0_75, %c0_76] : memref<36x6x1x14xf32, #tpu.memory_space<vmem>>, vector<1x6x1x14xf32>
    %95 = vector.shape_cast %94 : vector<1x6x1x14xf32> to vector<6x1x14xf32>
    %96 = vector.broadcast %93 : vector<1x14x14xf32> to vector<6x14x14xf32>
    %97 = vector.broadcast %95 : vector<6x1x14xf32> to vector<6x14x14xf32>
    %98 = arith.mulf %96, %97 : vector<6x14x14xf32>
    %99 = arith.addf %90, %98 : vector<6x14x14xf32>
    %c0_77 = arith.constant 0 : index
    %c1_78 = arith.constant 1 : index
    %c0_79 = arith.constant 0 : index
    %c2_80 = arith.constant 2 : index
    %100 = vector.load %arg1[%c0_77, %c1_78, %c0_79, %c2_80] : memref<1x4x16x16xf32, #tpu.memory_space<vmem>>, vector<1x1x14x14xf32>
    %101 = vector.shape_cast %100 : vector<1x1x14x14xf32> to vector<14x14xf32>
    %102 = vector.shape_cast %101 : vector<14x14xf32> to vector<1x14x14xf32>
    %c11 = arith.constant 11 : index
    %c0_81 = arith.constant 0 : index
    %c0_82 = arith.constant 0 : index
    %c0_83 = arith.constant 0 : index
    %103 = vector.load %arg2[%c11, %c0_81, %c0_82, %c0_83] : memref<36x6x1x14xf32, #tpu.memory_space<vmem>>, vector<1x6x1x14xf32>
    %104 = vector.shape_cast %103 : vector<1x6x1x14xf32> to vector<6x1x14xf32>
    %105 = vector.broadcast %102 : vector<1x14x14xf32> to vector<6x14x14xf32>
    %106 = vector.broadcast %104 : vector<6x1x14xf32> to vector<6x14x14xf32>
    %107 = arith.mulf %105, %106 : vector<6x14x14xf32>
    %108 = arith.addf %99, %107 : vector<6x14x14xf32>
    %c0_84 = arith.constant 0 : index
    %c1_85 = arith.constant 1 : index
    %c1_86 = arith.constant 1 : index
    %c0_87 = arith.constant 0 : index
    %109 = vector.load %arg1[%c0_84, %c1_85, %c1_86, %c0_87] : memref<1x4x16x16xf32, #tpu.memory_space<vmem>>, vector<1x1x14x14xf32>
    %110 = vector.shape_cast %109 : vector<1x1x14x14xf32> to vector<14x14xf32>
    %111 = vector.shape_cast %110 : vector<14x14xf32> to vector<1x14x14xf32>
    %c12 = arith.constant 12 : index
    %c0_88 = arith.constant 0 : index
    %c0_89 = arith.constant 0 : index
    %c0_90 = arith.constant 0 : index
    %112 = vector.load %arg2[%c12, %c0_88, %c0_89, %c0_90] : memref<36x6x1x14xf32, #tpu.memory_space<vmem>>, vector<1x6x1x14xf32>
    %113 = vector.shape_cast %112 : vector<1x6x1x14xf32> to vector<6x1x14xf32>
    %114 = vector.broadcast %111 : vector<1x14x14xf32> to vector<6x14x14xf32>
    %115 = vector.broadcast %113 : vector<6x1x14xf32> to vector<6x14x14xf32>
    %116 = arith.mulf %114, %115 : vector<6x14x14xf32>
    %117 = arith.addf %108, %116 : vector<6x14x14xf32>
    %c0_91 = arith.constant 0 : index
    %c1_92 = arith.constant 1 : index
    %c1_93 = arith.constant 1 : index
    %c1_94 = arith.constant 1 : index
    %118 = vector.load %arg1[%c0_91, %c1_92, %c1_93, %c1_94] : memref<1x4x16x16xf32, #tpu.memory_space<vmem>>, vector<1x1x14x14xf32>
    %119 = vector.shape_cast %118 : vector<1x1x14x14xf32> to vector<14x14xf32>
    %120 = vector.shape_cast %119 : vector<14x14xf32> to vector<1x14x14xf32>
    %c13 = arith.constant 13 : index
    %c0_95 = arith.constant 0 : index
    %c0_96 = arith.constant 0 : index
    %c0_97 = arith.constant 0 : index
    %121 = vector.load %arg2[%c13, %c0_95, %c0_96, %c0_97] : memref<36x6x1x14xf32, #tpu.memory_space<vmem>>, vector<1x6x1x14xf32>
    %122 = vector.shape_cast %121 : vector<1x6x1x14xf32> to vector<6x1x14xf32>
    %123 = vector.broadcast %120 : vector<1x14x14xf32> to vector<6x14x14xf32>
    %124 = vector.broadcast %122 : vector<6x1x14xf32> to vector<6x14x14xf32>
    %125 = arith.mulf %123, %124 : vector<6x14x14xf32>
    %126 = arith.addf %117, %125 : vector<6x14x14xf32>
    %c0_98 = arith.constant 0 : index
    %c1_99 = arith.constant 1 : index
    %c1_100 = arith.constant 1 : index
    %c2_101 = arith.constant 2 : index
    %127 = vector.load %arg1[%c0_98, %c1_99, %c1_100, %c2_101] : memref<1x4x16x16xf32, #tpu.memory_space<vmem>>, vector<1x1x14x14xf32>
    %128 = vector.shape_cast %127 : vector<1x1x14x14xf32> to vector<14x14xf32>
    %129 = vector.shape_cast %128 : vector<14x14xf32> to vector<1x14x14xf32>
    %c14 = arith.constant 14 : index
    %c0_102 = arith.constant 0 : index
    %c0_103 = arith.constant 0 : index
    %c0_104 = arith.constant 0 : index
    %130 = vector.load %arg2[%c14, %c0_102, %c0_103, %c0_104] : memref<36x6x1x14xf32, #tpu.memory_space<vmem>>, vector<1x6x1x14xf32>
    %131 = vector.shape_cast %130 : vector<1x6x1x14xf32> to vector<6x1x14xf32>
    %132 = vector.broadcast %129 : vector<1x14x14xf32> to vector<6x14x14xf32>
    %133 = vector.broadcast %131 : vector<6x1x14xf32> to vector<6x14x14xf32>
    %134 = arith.mulf %132, %133 : vector<6x14x14xf32>
    %135 = arith.addf %126, %134 : vector<6x14x14xf32>
    %c0_105 = arith.constant 0 : index
    %c1_106 = arith.constant 1 : index
    %c2_107 = arith.constant 2 : index
    %c0_108 = arith.constant 0 : index
    %136 = vector.load %arg1[%c0_105, %c1_106, %c2_107, %c0_108] : memref<1x4x16x16xf32, #tpu.memory_space<vmem>>, vector<1x1x14x14xf32>
    %137 = vector.shape_cast %136 : vector<1x1x14x14xf32> to vector<14x14xf32>
    %138 = vector.shape_cast %137 : vector<14x14xf32> to vector<1x14x14xf32>
    %c15 = arith.constant 15 : index
    %c0_109 = arith.constant 0 : index
    %c0_110 = arith.constant 0 : index
    %c0_111 = arith.constant 0 : index
    %139 = vector.load %arg2[%c15, %c0_109, %c0_110, %c0_111] : memref<36x6x1x14xf32, #tpu.memory_space<vmem>>, vector<1x6x1x14xf32>
    %140 = vector.shape_cast %139 : vector<1x6x1x14xf32> to vector<6x1x14xf32>
    %141 = vector.broadcast %138 : vector<1x14x14xf32> to vector<6x14x14xf32>
    %142 = vector.broadcast %140 : vector<6x1x14xf32> to vector<6x14x14xf32>
    %143 = arith.mulf %141, %142 : vector<6x14x14xf32>
    %144 = arith.addf %135, %143 : vector<6x14x14xf32>
    %c0_112 = arith.constant 0 : index
    %c1_113 = arith.constant 1 : index
    %c2_114 = arith.constant 2 : index
    %c1_115 = arith.constant 1 : index
    %145 = vector.load %arg1[%c0_112, %c1_113, %c2_114, %c1_115] : memref<1x4x16x16xf32, #tpu.memory_space<vmem>>, vector<1x1x14x14xf32>
    %146 = vector.shape_cast %145 : vector<1x1x14x14xf32> to vector<14x14xf32>
    %147 = vector.shape_cast %146 : vector<14x14xf32> to vector<1x14x14xf32>
    %c16 = arith.constant 16 : index
    %c0_116 = arith.constant 0 : index
    %c0_117 = arith.constant 0 : index
    %c0_118 = arith.constant 0 : index
    %148 = vector.load %arg2[%c16, %c0_116, %c0_117, %c0_118] : memref<36x6x1x14xf32, #tpu.memory_space<vmem>>, vector<1x6x1x14xf32>
    %149 = vector.shape_cast %148 : vector<1x6x1x14xf32> to vector<6x1x14xf32>
    %150 = vector.broadcast %147 : vector<1x14x14xf32> to vector<6x14x14xf32>
    %151 = vector.broadcast %149 : vector<6x1x14xf32> to vector<6x14x14xf32>
    %152 = arith.mulf %150, %151 : vector<6x14x14xf32>
    %153 = arith.addf %144, %152 : vector<6x14x14xf32>
    %c0_119 = arith.constant 0 : index
    %c1_120 = arith.constant 1 : index
    %c2_121 = arith.constant 2 : index
    %c2_122 = arith.constant 2 : index
    %154 = vector.load %arg1[%c0_119, %c1_120, %c2_121, %c2_122] : memref<1x4x16x16xf32, #tpu.memory_space<vmem>>, vector<1x1x14x14xf32>
    %155 = vector.shape_cast %154 : vector<1x1x14x14xf32> to vector<14x14xf32>
    %156 = vector.shape_cast %155 : vector<14x14xf32> to vector<1x14x14xf32>
    %c17 = arith.constant 17 : index
    %c0_123 = arith.constant 0 : index
    %c0_124 = arith.constant 0 : index
    %c0_125 = arith.constant 0 : index
    %157 = vector.load %arg2[%c17, %c0_123, %c0_124, %c0_125] : memref<36x6x1x14xf32, #tpu.memory_space<vmem>>, vector<1x6x1x14xf32>
    %158 = vector.shape_cast %157 : vector<1x6x1x14xf32> to vector<6x1x14xf32>
    %159 = vector.broadcast %156 : vector<1x14x14xf32> to vector<6x14x14xf32>
    %160 = vector.broadcast %158 : vector<6x1x14xf32> to vector<6x14x14xf32>
    %161 = arith.mulf %159, %160 : vector<6x14x14xf32>
    %162 = arith.addf %153, %161 : vector<6x14x14xf32>
    %c0_126 = arith.constant 0 : index
    %c2_127 = arith.constant 2 : index
    %c0_128 = arith.constant 0 : index
    %c0_129 = arith.constant 0 : index
    %163 = vector.load %arg1[%c0_126, %c2_127, %c0_128, %c0_129] : memref<1x4x16x16xf32, #tpu.memory_space<vmem>>, vector<1x1x14x14xf32>
    %164 = vector.shape_cast %163 : vector<1x1x14x14xf32> to vector<14x14xf32>
    %165 = vector.shape_cast %164 : vector<14x14xf32> to vector<1x14x14xf32>
    %c18 = arith.constant 18 : index
    %c0_130 = arith.constant 0 : index
    %c0_131 = arith.constant 0 : index
    %c0_132 = arith.constant 0 : index
    %166 = vector.load %arg2[%c18, %c0_130, %c0_131, %c0_132] : memref<36x6x1x14xf32, #tpu.memory_space<vmem>>, vector<1x6x1x14xf32>
    %167 = vector.shape_cast %166 : vector<1x6x1x14xf32> to vector<6x1x14xf32>
    %168 = vector.broadcast %165 : vector<1x14x14xf32> to vector<6x14x14xf32>
    %169 = vector.broadcast %167 : vector<6x1x14xf32> to vector<6x14x14xf32>
    %170 = arith.mulf %168, %169 : vector<6x14x14xf32>
    %171 = arith.addf %162, %170 : vector<6x14x14xf32>
    %c0_133 = arith.constant 0 : index
    %c2_134 = arith.constant 2 : index
    %c0_135 = arith.constant 0 : index
    %c1_136 = arith.constant 1 : index
    %172 = vector.load %arg1[%c0_133, %c2_134, %c0_135, %c1_136] : memref<1x4x16x16xf32, #tpu.memory_space<vmem>>, vector<1x1x14x14xf32>
    %173 = vector.shape_cast %172 : vector<1x1x14x14xf32> to vector<14x14xf32>
    %174 = vector.shape_cast %173 : vector<14x14xf32> to vector<1x14x14xf32>
    %c19 = arith.constant 19 : index
    %c0_137 = arith.constant 0 : index
    %c0_138 = arith.constant 0 : index
    %c0_139 = arith.constant 0 : index
    %175 = vector.load %arg2[%c19, %c0_137, %c0_138, %c0_139] : memref<36x6x1x14xf32, #tpu.memory_space<vmem>>, vector<1x6x1x14xf32>
    %176 = vector.shape_cast %175 : vector<1x6x1x14xf32> to vector<6x1x14xf32>
    %177 = vector.broadcast %174 : vector<1x14x14xf32> to vector<6x14x14xf32>
    %178 = vector.broadcast %176 : vector<6x1x14xf32> to vector<6x14x14xf32>
    %179 = arith.mulf %177, %178 : vector<6x14x14xf32>
    %180 = arith.addf %171, %179 : vector<6x14x14xf32>
    %c0_140 = arith.constant 0 : index
    %c2_141 = arith.constant 2 : index
    %c0_142 = arith.constant 0 : index
    %c2_143 = arith.constant 2 : index
    %181 = vector.load %arg1[%c0_140, %c2_141, %c0_142, %c2_143] : memref<1x4x16x16xf32, #tpu.memory_space<vmem>>, vector<1x1x14x14xf32>
    %182 = vector.shape_cast %181 : vector<1x1x14x14xf32> to vector<14x14xf32>
    %183 = vector.shape_cast %182 : vector<14x14xf32> to vector<1x14x14xf32>
    %c20 = arith.constant 20 : index
    %c0_144 = arith.constant 0 : index
    %c0_145 = arith.constant 0 : index
    %c0_146 = arith.constant 0 : index
    %184 = vector.load %arg2[%c20, %c0_144, %c0_145, %c0_146] : memref<36x6x1x14xf32, #tpu.memory_space<vmem>>, vector<1x6x1x14xf32>
    %185 = vector.shape_cast %184 : vector<1x6x1x14xf32> to vector<6x1x14xf32>
    %186 = vector.broadcast %183 : vector<1x14x14xf32> to vector<6x14x14xf32>
    %187 = vector.broadcast %185 : vector<6x1x14xf32> to vector<6x14x14xf32>
    %188 = arith.mulf %186, %187 : vector<6x14x14xf32>
    %189 = arith.addf %180, %188 : vector<6x14x14xf32>
    %c0_147 = arith.constant 0 : index
    %c2_148 = arith.constant 2 : index
    %c1_149 = arith.constant 1 : index
    %c0_150 = arith.constant 0 : index
    %190 = vector.load %arg1[%c0_147, %c2_148, %c1_149, %c0_150] : memref<1x4x16x16xf32, #tpu.memory_space<vmem>>, vector<1x1x14x14xf32>
    %191 = vector.shape_cast %190 : vector<1x1x14x14xf32> to vector<14x14xf32>
    %192 = vector.shape_cast %191 : vector<14x14xf32> to vector<1x14x14xf32>
    %c21 = arith.constant 21 : index
    %c0_151 = arith.constant 0 : index
    %c0_152 = arith.constant 0 : index
    %c0_153 = arith.constant 0 : index
    %193 = vector.load %arg2[%c21, %c0_151, %c0_152, %c0_153] : memref<36x6x1x14xf32, #tpu.memory_space<vmem>>, vector<1x6x1x14xf32>
    %194 = vector.shape_cast %193 : vector<1x6x1x14xf32> to vector<6x1x14xf32>
    %195 = vector.broadcast %192 : vector<1x14x14xf32> to vector<6x14x14xf32>
    %196 = vector.broadcast %194 : vector<6x1x14xf32> to vector<6x14x14xf32>
    %197 = arith.mulf %195, %196 : vector<6x14x14xf32>
    %198 = arith.addf %189, %197 : vector<6x14x14xf32>
    %c0_154 = arith.constant 0 : index
    %c2_155 = arith.constant 2 : index
    %c1_156 = arith.constant 1 : index
    %c1_157 = arith.constant 1 : index
    %199 = vector.load %arg1[%c0_154, %c2_155, %c1_156, %c1_157] : memref<1x4x16x16xf32, #tpu.memory_space<vmem>>, vector<1x1x14x14xf32>
    %200 = vector.shape_cast %199 : vector<1x1x14x14xf32> to vector<14x14xf32>
    %201 = vector.shape_cast %200 : vector<14x14xf32> to vector<1x14x14xf32>
    %c22 = arith.constant 22 : index
    %c0_158 = arith.constant 0 : index
    %c0_159 = arith.constant 0 : index
    %c0_160 = arith.constant 0 : index
    %202 = vector.load %arg2[%c22, %c0_158, %c0_159, %c0_160] : memref<36x6x1x14xf32, #tpu.memory_space<vmem>>, vector<1x6x1x14xf32>
    %203 = vector.shape_cast %202 : vector<1x6x1x14xf32> to vector<6x1x14xf32>
    %204 = vector.broadcast %201 : vector<1x14x14xf32> to vector<6x14x14xf32>
    %205 = vector.broadcast %203 : vector<6x1x14xf32> to vector<6x14x14xf32>
    %206 = arith.mulf %204, %205 : vector<6x14x14xf32>
    %207 = arith.addf %198, %206 : vector<6x14x14xf32>
    %c0_161 = arith.constant 0 : index
    %c2_162 = arith.constant 2 : index
    %c1_163 = arith.constant 1 : index
    %c2_164 = arith.constant 2 : index
    %208 = vector.load %arg1[%c0_161, %c2_162, %c1_163, %c2_164] : memref<1x4x16x16xf32, #tpu.memory_space<vmem>>, vector<1x1x14x14xf32>
    %209 = vector.shape_cast %208 : vector<1x1x14x14xf32> to vector<14x14xf32>
    %210 = vector.shape_cast %209 : vector<14x14xf32> to vector<1x14x14xf32>
    %c23 = arith.constant 23 : index
    %c0_165 = arith.constant 0 : index
    %c0_166 = arith.constant 0 : index
    %c0_167 = arith.constant 0 : index
    %211 = vector.load %arg2[%c23, %c0_165, %c0_166, %c0_167] : memref<36x6x1x14xf32, #tpu.memory_space<vmem>>, vector<1x6x1x14xf32>
    %212 = vector.shape_cast %211 : vector<1x6x1x14xf32> to vector<6x1x14xf32>
    %213 = vector.broadcast %210 : vector<1x14x14xf32> to vector<6x14x14xf32>
    %214 = vector.broadcast %212 : vector<6x1x14xf32> to vector<6x14x14xf32>
    %215 = arith.mulf %213, %214 : vector<6x14x14xf32>
    %216 = arith.addf %207, %215 : vector<6x14x14xf32>
    %c0_168 = arith.constant 0 : index
    %c2_169 = arith.constant 2 : index
    %c2_170 = arith.constant 2 : index
    %c0_171 = arith.constant 0 : index
    %217 = vector.load %arg1[%c0_168, %c2_169, %c2_170, %c0_171] : memref<1x4x16x16xf32, #tpu.memory_space<vmem>>, vector<1x1x14x14xf32>
    %218 = vector.shape_cast %217 : vector<1x1x14x14xf32> to vector<14x14xf32>
    %219 = vector.shape_cast %218 : vector<14x14xf32> to vector<1x14x14xf32>
    %c24 = arith.constant 24 : index
    %c0_172 = arith.constant 0 : index
    %c0_173 = arith.constant 0 : index
    %c0_174 = arith.constant 0 : index
    %220 = vector.load %arg2[%c24, %c0_172, %c0_173, %c0_174] : memref<36x6x1x14xf32, #tpu.memory_space<vmem>>, vector<1x6x1x14xf32>
    %221 = vector.shape_cast %220 : vector<1x6x1x14xf32> to vector<6x1x14xf32>
    %222 = vector.broadcast %219 : vector<1x14x14xf32> to vector<6x14x14xf32>
    %223 = vector.broadcast %221 : vector<6x1x14xf32> to vector<6x14x14xf32>
    %224 = arith.mulf %222, %223 : vector<6x14x14xf32>
    %225 = arith.addf %216, %224 : vector<6x14x14xf32>
    %c0_175 = arith.constant 0 : index
    %c2_176 = arith.constant 2 : index
    %c2_177 = arith.constant 2 : index
    %c1_178 = arith.constant 1 : index
    %226 = vector.load %arg1[%c0_175, %c2_176, %c2_177, %c1_178] : memref<1x4x16x16xf32, #tpu.memory_space<vmem>>, vector<1x1x14x14xf32>
    %227 = vector.shape_cast %226 : vector<1x1x14x14xf32> to vector<14x14xf32>
    %228 = vector.shape_cast %227 : vector<14x14xf32> to vector<1x14x14xf32>
    %c25 = arith.constant 25 : index
    %c0_179 = arith.constant 0 : index
    %c0_180 = arith.constant 0 : index
    %c0_181 = arith.constant 0 : index
    %229 = vector.load %arg2[%c25, %c0_179, %c0_180, %c0_181] : memref<36x6x1x14xf32, #tpu.memory_space<vmem>>, vector<1x6x1x14xf32>
    %230 = vector.shape_cast %229 : vector<1x6x1x14xf32> to vector<6x1x14xf32>
    %231 = vector.broadcast %228 : vector<1x14x14xf32> to vector<6x14x14xf32>
    %232 = vector.broadcast %230 : vector<6x1x14xf32> to vector<6x14x14xf32>
    %233 = arith.mulf %231, %232 : vector<6x14x14xf32>
    %234 = arith.addf %225, %233 : vector<6x14x14xf32>
    %c0_182 = arith.constant 0 : index
    %c2_183 = arith.constant 2 : index
    %c2_184 = arith.constant 2 : index
    %c2_185 = arith.constant 2 : index
    %235 = vector.load %arg1[%c0_182, %c2_183, %c2_184, %c2_185] : memref<1x4x16x16xf32, #tpu.memory_space<vmem>>, vector<1x1x14x14xf32>
    %236 = vector.shape_cast %235 : vector<1x1x14x14xf32> to vector<14x14xf32>
    %237 = vector.shape_cast %236 : vector<14x14xf32> to vector<1x14x14xf32>
    %c26 = arith.constant 26 : index
    %c0_186 = arith.constant 0 : index
    %c0_187 = arith.constant 0 : index
    %c0_188 = arith.constant 0 : index
    %238 = vector.load %arg2[%c26, %c0_186, %c0_187, %c0_188] : memref<36x6x1x14xf32, #tpu.memory_space<vmem>>, vector<1x6x1x14xf32>
    %239 = vector.shape_cast %238 : vector<1x6x1x14xf32> to vector<6x1x14xf32>
    %240 = vector.broadcast %237 : vector<1x14x14xf32> to vector<6x14x14xf32>
    %241 = vector.broadcast %239 : vector<6x1x14xf32> to vector<6x14x14xf32>
    %242 = arith.mulf %240, %241 : vector<6x14x14xf32>
    %243 = arith.addf %234, %242 : vector<6x14x14xf32>
    %c0_189 = arith.constant 0 : index
    %c3_190 = arith.constant 3 : index
    %c0_191 = arith.constant 0 : index
    %c0_192 = arith.constant 0 : index
    %244 = vector.load %arg1[%c0_189, %c3_190, %c0_191, %c0_192] : memref<1x4x16x16xf32, #tpu.memory_space<vmem>>, vector<1x1x14x14xf32>
    %245 = vector.shape_cast %244 : vector<1x1x14x14xf32> to vector<14x14xf32>
    %246 = vector.shape_cast %245 : vector<14x14xf32> to vector<1x14x14xf32>
    %c27 = arith.constant 27 : index
    %c0_193 = arith.constant 0 : index
    %c0_194 = arith.constant 0 : index
    %c0_195 = arith.constant 0 : index
    %247 = vector.load %arg2[%c27, %c0_193, %c0_194, %c0_195] : memref<36x6x1x14xf32, #tpu.memory_space<vmem>>, vector<1x6x1x14xf32>
    %248 = vector.shape_cast %247 : vector<1x6x1x14xf32> to vector<6x1x14xf32>
    %249 = vector.broadcast %246 : vector<1x14x14xf32> to vector<6x14x14xf32>
    %250 = vector.broadcast %248 : vector<6x1x14xf32> to vector<6x14x14xf32>
    %251 = arith.mulf %249, %250 : vector<6x14x14xf32>
    %252 = arith.addf %243, %251 : vector<6x14x14xf32>
    %c0_196 = arith.constant 0 : index
    %c3_197 = arith.constant 3 : index
    %c0_198 = arith.constant 0 : index
    %c1_199 = arith.constant 1 : index
    %253 = vector.load %arg1[%c0_196, %c3_197, %c0_198, %c1_199] : memref<1x4x16x16xf32, #tpu.memory_space<vmem>>, vector<1x1x14x14xf32>
    %254 = vector.shape_cast %253 : vector<1x1x14x14xf32> to vector<14x14xf32>
    %255 = vector.shape_cast %254 : vector<14x14xf32> to vector<1x14x14xf32>
    %c28 = arith.constant 28 : index
    %c0_200 = arith.constant 0 : index
    %c0_201 = arith.constant 0 : index
    %c0_202 = arith.constant 0 : index
    %256 = vector.load %arg2[%c28, %c0_200, %c0_201, %c0_202] : memref<36x6x1x14xf32, #tpu.memory_space<vmem>>, vector<1x6x1x14xf32>
    %257 = vector.shape_cast %256 : vector<1x6x1x14xf32> to vector<6x1x14xf32>
    %258 = vector.broadcast %255 : vector<1x14x14xf32> to vector<6x14x14xf32>
    %259 = vector.broadcast %257 : vector<6x1x14xf32> to vector<6x14x14xf32>
    %260 = arith.mulf %258, %259 : vector<6x14x14xf32>
    %261 = arith.addf %252, %260 : vector<6x14x14xf32>
    %c0_203 = arith.constant 0 : index
    %c3_204 = arith.constant 3 : index
    %c0_205 = arith.constant 0 : index
    %c2_206 = arith.constant 2 : index
    %262 = vector.load %arg1[%c0_203, %c3_204, %c0_205, %c2_206] : memref<1x4x16x16xf32, #tpu.memory_space<vmem>>, vector<1x1x14x14xf32>
    %263 = vector.shape_cast %262 : vector<1x1x14x14xf32> to vector<14x14xf32>
    %264 = vector.shape_cast %263 : vector<14x14xf32> to vector<1x14x14xf32>
    %c29 = arith.constant 29 : index
    %c0_207 = arith.constant 0 : index
    %c0_208 = arith.constant 0 : index
    %c0_209 = arith.constant 0 : index
    %265 = vector.load %arg2[%c29, %c0_207, %c0_208, %c0_209] : memref<36x6x1x14xf32, #tpu.memory_space<vmem>>, vector<1x6x1x14xf32>
    %266 = vector.shape_cast %265 : vector<1x6x1x14xf32> to vector<6x1x14xf32>
    %267 = vector.broadcast %264 : vector<1x14x14xf32> to vector<6x14x14xf32>
    %268 = vector.broadcast %266 : vector<6x1x14xf32> to vector<6x14x14xf32>
    %269 = arith.mulf %267, %268 : vector<6x14x14xf32>
    %270 = arith.addf %261, %269 : vector<6x14x14xf32>
    %c0_210 = arith.constant 0 : index
    %c3_211 = arith.constant 3 : index
    %c1_212 = arith.constant 1 : index
    %c0_213 = arith.constant 0 : index
    %271 = vector.load %arg1[%c0_210, %c3_211, %c1_212, %c0_213] : memref<1x4x16x16xf32, #tpu.memory_space<vmem>>, vector<1x1x14x14xf32>
    %272 = vector.shape_cast %271 : vector<1x1x14x14xf32> to vector<14x14xf32>
    %273 = vector.shape_cast %272 : vector<14x14xf32> to vector<1x14x14xf32>
    %c30 = arith.constant 30 : index
    %c0_214 = arith.constant 0 : index
    %c0_215 = arith.constant 0 : index
    %c0_216 = arith.constant 0 : index
    %274 = vector.load %arg2[%c30, %c0_214, %c0_215, %c0_216] : memref<36x6x1x14xf32, #tpu.memory_space<vmem>>, vector<1x6x1x14xf32>
    %275 = vector.shape_cast %274 : vector<1x6x1x14xf32> to vector<6x1x14xf32>
    %276 = vector.broadcast %273 : vector<1x14x14xf32> to vector<6x14x14xf32>
    %277 = vector.broadcast %275 : vector<6x1x14xf32> to vector<6x14x14xf32>
    %278 = arith.mulf %276, %277 : vector<6x14x14xf32>
    %279 = arith.addf %270, %278 : vector<6x14x14xf32>
    %c0_217 = arith.constant 0 : index
    %c3_218 = arith.constant 3 : index
    %c1_219 = arith.constant 1 : index
    %c1_220 = arith.constant 1 : index
    %280 = vector.load %arg1[%c0_217, %c3_218, %c1_219, %c1_220] : memref<1x4x16x16xf32, #tpu.memory_space<vmem>>, vector<1x1x14x14xf32>
    %281 = vector.shape_cast %280 : vector<1x1x14x14xf32> to vector<14x14xf32>
    %282 = vector.shape_cast %281 : vector<14x14xf32> to vector<1x14x14xf32>
    %c31 = arith.constant 31 : index
    %c0_221 = arith.constant 0 : index
    %c0_222 = arith.constant 0 : index
    %c0_223 = arith.constant 0 : index
    %283 = vector.load %arg2[%c31, %c0_221, %c0_222, %c0_223] : memref<36x6x1x14xf32, #tpu.memory_space<vmem>>, vector<1x6x1x14xf32>
    %284 = vector.shape_cast %283 : vector<1x6x1x14xf32> to vector<6x1x14xf32>
    %285 = vector.broadcast %282 : vector<1x14x14xf32> to vector<6x14x14xf32>
    %286 = vector.broadcast %284 : vector<6x1x14xf32> to vector<6x14x14xf32>
    %287 = arith.mulf %285, %286 : vector<6x14x14xf32>
    %288 = arith.addf %279, %287 : vector<6x14x14xf32>
    %c0_224 = arith.constant 0 : index
    %c3_225 = arith.constant 3 : index
    %c1_226 = arith.constant 1 : index
    %c2_227 = arith.constant 2 : index
    %289 = vector.load %arg1[%c0_224, %c3_225, %c1_226, %c2_227] : memref<1x4x16x16xf32, #tpu.memory_space<vmem>>, vector<1x1x14x14xf32>
    %290 = vector.shape_cast %289 : vector<1x1x14x14xf32> to vector<14x14xf32>
    %291 = vector.shape_cast %290 : vector<14x14xf32> to vector<1x14x14xf32>
    %c32 = arith.constant 32 : index
    %c0_228 = arith.constant 0 : index
    %c0_229 = arith.constant 0 : index
    %c0_230 = arith.constant 0 : index
    %292 = vector.load %arg2[%c32, %c0_228, %c0_229, %c0_230] : memref<36x6x1x14xf32, #tpu.memory_space<vmem>>, vector<1x6x1x14xf32>
    %293 = vector.shape_cast %292 : vector<1x6x1x14xf32> to vector<6x1x14xf32>
    %294 = vector.broadcast %291 : vector<1x14x14xf32> to vector<6x14x14xf32>
    %295 = vector.broadcast %293 : vector<6x1x14xf32> to vector<6x14x14xf32>
    %296 = arith.mulf %294, %295 : vector<6x14x14xf32>
    %297 = arith.addf %288, %296 : vector<6x14x14xf32>
    %c0_231 = arith.constant 0 : index
    %c3_232 = arith.constant 3 : index
    %c2_233 = arith.constant 2 : index
    %c0_234 = arith.constant 0 : index
    %298 = vector.load %arg1[%c0_231, %c3_232, %c2_233, %c0_234] : memref<1x4x16x16xf32, #tpu.memory_space<vmem>>, vector<1x1x14x14xf32>
    %299 = vector.shape_cast %298 : vector<1x1x14x14xf32> to vector<14x14xf32>
    %300 = vector.shape_cast %299 : vector<14x14xf32> to vector<1x14x14xf32>
    %c33 = arith.constant 33 : index
    %c0_235 = arith.constant 0 : index
    %c0_236 = arith.constant 0 : index
    %c0_237 = arith.constant 0 : index
    %301 = vector.load %arg2[%c33, %c0_235, %c0_236, %c0_237] : memref<36x6x1x14xf32, #tpu.memory_space<vmem>>, vector<1x6x1x14xf32>
    %302 = vector.shape_cast %301 : vector<1x6x1x14xf32> to vector<6x1x14xf32>
    %303 = vector.broadcast %300 : vector<1x14x14xf32> to vector<6x14x14xf32>
    %304 = vector.broadcast %302 : vector<6x1x14xf32> to vector<6x14x14xf32>
    %305 = arith.mulf %303, %304 : vector<6x14x14xf32>
    %306 = arith.addf %297, %305 : vector<6x14x14xf32>
    %c0_238 = arith.constant 0 : index
    %c3_239 = arith.constant 3 : index
    %c2_240 = arith.constant 2 : index
    %c1_241 = arith.constant 1 : index
    %307 = vector.load %arg1[%c0_238, %c3_239, %c2_240, %c1_241] : memref<1x4x16x16xf32, #tpu.memory_space<vmem>>, vector<1x1x14x14xf32>
    %308 = vector.shape_cast %307 : vector<1x1x14x14xf32> to vector<14x14xf32>
    %309 = vector.shape_cast %308 : vector<14x14xf32> to vector<1x14x14xf32>
    %c34 = arith.constant 34 : index
    %c0_242 = arith.constant 0 : index
    %c0_243 = arith.constant 0 : index
    %c0_244 = arith.constant 0 : index
    %310 = vector.load %arg2[%c34, %c0_242, %c0_243, %c0_244] : memref<36x6x1x14xf32, #tpu.memory_space<vmem>>, vector<1x6x1x14xf32>
    %311 = vector.shape_cast %310 : vector<1x6x1x14xf32> to vector<6x1x14xf32>
    %312 = vector.broadcast %309 : vector<1x14x14xf32> to vector<6x14x14xf32>
    %313 = vector.broadcast %311 : vector<6x1x14xf32> to vector<6x14x14xf32>
    %314 = arith.mulf %312, %313 : vector<6x14x14xf32>
    %315 = arith.addf %306, %314 : vector<6x14x14xf32>
    %c0_245 = arith.constant 0 : index
    %c3_246 = arith.constant 3 : index
    %c2_247 = arith.constant 2 : index
    %c2_248 = arith.constant 2 : index
    %316 = vector.load %arg1[%c0_245, %c3_246, %c2_247, %c2_248] : memref<1x4x16x16xf32, #tpu.memory_space<vmem>>, vector<1x1x14x14xf32>
    %317 = vector.shape_cast %316 : vector<1x1x14x14xf32> to vector<14x14xf32>
    %318 = vector.shape_cast %317 : vector<14x14xf32> to vector<1x14x14xf32>
    %c35 = arith.constant 35 : index
    %c0_249 = arith.constant 0 : index
    %c0_250 = arith.constant 0 : index
    %c0_251 = arith.constant 0 : index
    %319 = vector.load %arg2[%c35, %c0_249, %c0_250, %c0_251] : memref<36x6x1x14xf32, #tpu.memory_space<vmem>>, vector<1x6x1x14xf32>
    %320 = vector.shape_cast %319 : vector<1x6x1x14xf32> to vector<6x1x14xf32>
    %321 = vector.broadcast %318 : vector<1x14x14xf32> to vector<6x14x14xf32>
    %322 = vector.broadcast %320 : vector<6x1x14xf32> to vector<6x14x14xf32>
    %323 = arith.mulf %321, %322 : vector<6x14x14xf32>
    %324 = arith.addf %315, %323 : vector<6x14x14xf32>
    %c0_252 = arith.constant 0 : index
    %c0_253 = arith.constant 0 : index
    %c0_254 = arith.constant 0 : index
    %325 = vector.load %arg3[%c0_252, %c0_253, %c0_254] : memref<6x1x14xf32, #tpu.memory_space<vmem>>, vector<6x1x14xf32>
    %326 = vector.broadcast %325 : vector<6x1x14xf32> to vector<6x14x14xf32>
    %327 = arith.addf %324, %326 : vector<6x14x14xf32>
    %cst_255 = arith.constant 0.000000e+00 : f32
    %328 = vector.broadcast %cst_255 : f32 to vector<6x14x14xf32>
    %329 = arith.maximumf %327, %328 : vector<6x14x14xf32>
    %330 = vector.extract_strided_slice %329 {offsets = [0, 0, 0], sizes = [6, 13, 13], strides = [1, 1, 1]} : vector<6x14x14xf32> to vector<6x13x13xf32>
    %331 = vector.extract_strided_slice %329 {offsets = [0, 0, 1], sizes = [6, 13, 13], strides = [1, 1, 1]} : vector<6x14x14xf32> to vector<6x13x13xf32>
    %332 = arith.maximumf %330, %331 : vector<6x13x13xf32>
    %333 = vector.extract_strided_slice %329 {offsets = [0, 1, 0], sizes = [6, 13, 13], strides = [1, 1, 1]} : vector<6x14x14xf32> to vector<6x13x13xf32>
    %334 = arith.maximumf %332, %333 : vector<6x13x13xf32>
    %335 = vector.extract_strided_slice %329 {offsets = [0, 1, 1], sizes = [6, 13, 13], strides = [1, 1, 1]} : vector<6x14x14xf32> to vector<6x13x13xf32>
    %336 = arith.maximumf %334, %335 : vector<6x13x13xf32>
    %c0_256 = arith.constant 0 : index
    %c0_257 = arith.constant 0 : index
    %c0_258 = arith.constant 0 : index
    %337 = vector.load %arg4[%c0_256, %c0_257, %c0_258] : memref<6x7x13xf32, #tpu.memory_space<vmem>>, vector<6x7x13xf32>
    "tpu.trace_start"() <{level = 10 : i32, message = "cih,chw->ciw"}> : () -> ()
    %cst_259 = arith.constant dense<0.000000e+00> : vector<6x7x13xf32>
    %338 = tpu.matmul %337, %336, %cst_259 {dimension_numbers = #tpu.dot_dimension_numbers<[2], [1], [1], [2], [0, 0, 0, 1, 1, 2], [0], [0]>} : vector<6x7x13xf32>, vector<6x13x13xf32>, vector<6x7x13xf32> -> vector<6x7x13xf32>
    "tpu.trace_stop"() : () -> ()
    %c0_260 = arith.constant 0 : index
    %c0_261 = arith.constant 0 : index
    %c0_262 = arith.constant 0 : index
    %339 = vector.load %arg5[%c0_260, %c0_261, %c0_262] : memref<6x13x7xf32, #tpu.memory_space<vmem>>, vector<6x13x7xf32>
    "tpu.trace_start"() <{level = 10 : i32, message = "chw,cwj->chj"}> : () -> ()
    %cst_263 = arith.constant dense<0.000000e+00> : vector<6x7x7xf32>
    %340 = tpu.matmul %338, %339, %cst_263 {dimension_numbers = #tpu.dot_dimension_numbers<[2], [1], [1], [2], [0, 0, 0, 1, 1, 2], [0], [0]>} : vector<6x7x13xf32>, vector<6x13x7xf32>, vector<6x7x7xf32> -> vector<6x7x7xf32>
    "tpu.trace_stop"() : () -> ()
    %c0_264 = arith.constant 0 : index
    %c0_265 = arith.constant 0 : index
    %c0_266 = arith.constant 0 : index
    %c0_267 = arith.constant 0 : index
    %341 = vector.load %arg6[%c0_264, %c0_265, %c0_266, %c0_267] : memref<1x6x7x7xf32, #tpu.memory_space<vmem>>, vector<1x6x7x7xf32>
    %342 = vector.shape_cast %341 : vector<1x6x7x7xf32> to vector<6x7x7xf32>
    %343 = vector.shape_cast %340 : vector<6x7x7xf32> to vector<1x6x7x7xf32>
    tpu.vector_store %arg6[%c0_264, %c0_265, %c0_266, %c0_267], %343 {strides = array<i32>} : memref<1x6x7x7xf32, #tpu.memory_space<vmem>>, vector<1x6x7x7xf32>,
    return
  }
  func.func @transform_0(%arg0: i32) -> (i32, i32, i32, i32) {
    %c0_i32 = arith.constant 0 : i32
    %c0_i32_0 = arith.constant 0 : i32
    %c0_i32_1 = arith.constant 0 : i32
    %c0_i32_2 = arith.constant 0 : i32
    return %arg0, %c0_i32, %c0_i32_0, %c0_i32_1 : i32, i32, i32, i32
  }
  func.func @transform_1(%arg0: i32) -> (i32, i32, i32, i32) {
    %c0_i32 = arith.constant 0 : i32
    %c0_i32_0 = arith.constant 0 : i32
    %c0_i32_1 = arith.constant 0 : i32
    %c0_i32_2 = arith.constant 0 : i32
    %c0_i32_3 = arith.constant 0 : i32
    return %c0_i32, %c0_i32_0, %c0_i32_1, %c0_i32_2 : i32, i32, i32, i32
  }
  func.func @transform_2(%arg0: i32) -> (i32, i32, i32) {
    %c0_i32 = arith.constant 0 : i32
    %c0_i32_0 = arith.constant 0 : i32
    %c0_i32_1 = arith.constant 0 : i32
    %c0_i32_2 = arith.constant 0 : i32
    return %c0_i32, %c0_i32_0, %c0_i32_1 : i32, i32, i32
  }
  func.func @transform_3(%arg0: i32) -> (i32, i32, i32) {
    %c0_i32 = arith.constant 0 : i32
    %c0_i32_0 = arith.constant 0 : i32
    %c0_i32_1 = arith.constant 0 : i32
    %c0_i32_2 = arith.constant 0 : i32
    return %c0_i32, %c0_i32_0, %c0_i32_1 : i32, i32, i32
  }
  func.func @transform_4(%arg0: i32) -> (i32, i32, i32) {
    %c0_i32 = arith.constant 0 : i32
    %c0_i32_0 = arith.constant 0 : i32
    %c0_i32_1 = arith.constant 0 : i32
    %c0_i32_2 = arith.constant 0 : i32
    return %c0_i32, %c0_i32_0, %c0_i32_1 : i32, i32, i32
  }
  func.func @transform_5(%arg0: i32) -> (i32, i32, i32, i32) {
    %c0_i32 = arith.constant 0 : i32
    %c0_i32_0 = arith.constant 0 : i32
    %c0_i32_1 = arith.constant 0 : i32
    %c0_i32_2 = arith.constant 0 : i32
    return %arg0, %c0_i32, %c0_i32_0, %c0_i32_1 : i32, i32, i32, i32
  }
}

</mosaic_0001>

<llo_original>
// kernel: tpu_custom_call.1
$region0: #{tpu_custom_call.1}
  #allocation0 [shape = 'u32[]', space=smem, size = 0x4, offset = 0x4, fixed_abs, tag = 'smem constant byte address 0x4 - core index']
  #allocation1 [shape = 'u32[144,128]{1,0:T(1,128)}', space=vmem, size = 0x12000, scoped, tag = 'internal scratch']
  %s0 = inlined_call_operand.vmem [shape: f32[2,4,16,16], index: 0, kind: input, shape index: {}]
  %s1 = inlined_call_operand.vmem [shape: f32[36,6,1,14], index: 1, kind: input, shape index: {}]
  %s2 = inlined_call_operand.vmem [shape: f32[6,1,14], index: 2, kind: input, shape index: {}]
  %s3 = inlined_call_operand.vmem [shape: f32[6,7,13], index: 3, kind: input, shape index: {}]
  %s4 = inlined_call_operand.vmem [shape: f32[6,13,7], index: 4, kind: input, shape index: {}]
  %s5 = inlined_call_operand.vmem [shape: f32[2,6,7,7], index: 5, kind: output, shape index: {}]
  %s6 = sld [smem:[#allocation0]]
  $region53: #{tpu_custom_call.1} parent=0
    _
  %s8 = ssub.s32 1, %s6
  %s9 = scalar_select 0, %s8, %s6
  loop: start=0, step=1, limit=4
  $region2: #{tpu_custom_call.1} parent=0 // loop_pre_header
    _
  $region3: #{tpu_custom_call.1} parent=0 // loop_header
    %s11 = sphi 0, %s15
    %p12 = scmp.ge.s32.totalorder %s11, 4
    %s21 = sphi 0, %s23
    %s24 = sphi 0, %s21
    %s25 = sphi 0, %s24
    %s41 = sphi 0, %s25
    %s45 = sphi 0, %s45
    %s47 = sphi 0, %s45
    %s48 = sphi 0, %s47
    %s62 = sphi 0, %s48
    %s66 = sphi 0, %s66
    %s68 = sphi 0, %s66
    %s69 = sphi 0, %s68
    %s83 = sphi 0, %s69
    %s87 = sphi 0, %s87
    %s89 = sphi 0, %s87
    %s90 = sphi 0, %s89
    %s104 = sphi 0, %s90
    %s108 = sphi 0, %s108
    %s110 = sphi 0, %s108
    %s111 = sphi 0, %s110
    %s125 = sphi 0, %s111
    %s131 = sphi 0, %s133
    %s134 = sphi 0, %s131
    %s135 = sphi 0, %s134
    %s151 = sphi 0, %s135
  $region4: #{tpu_custom_call.1} parent=0 // loop_header_branch
    %14 = sbr.rel (%p12) target = $region8
  $region5: #{tpu_custom_call.1} parent=0 // loop_body
    %s16 = ssub.s32 %s11, 1
    %s17 = ssub.s32 %s11, 2
    %s18 = sadd.s32 %s11, 1
    %s19 = ssub.s32 %s11, %s18
    %p20 = scmp.eq.s32.totalorder %s19, 0
    %s22 = sadd.s32 %s21, 1
    %s23 = scalar_select %p20, %s21, %s22
    %p26 = pneg %p20
    %p27 = scmp.eq.s32.totalorder %s11, 1
    %p28 = por %p26, %p27
    %p29 = scmp.ne.s32.totalorder %s21, %s24
    %p30 = scmp.eq.s32.totalorder %s11, 0
    %p31 = por %p29, %p30
    %p32 = scmp.ne.s32.totalorder %s21, %s24
    %p33 = scmp.eq.s32.totalorder %s16, 1
    %p34 = por %p32, %p33
    %p35 = scmp.ne.s32.totalorder %s24, %s25
    %p36 = scmp.eq.s32.totalorder %s16, 0
    %p37 = por %p35, %p36
    %p38 = scmp.ne.s32.totalorder %s24, %s25
    %p39 = scmp.eq.s32.totalorder %s17, 1
    %p40 = por %p38, %p39
    %p42 = scmp.ne.s32.totalorder %s25, %s41
    %p43 = scmp.eq.s32.totalorder %s17, 0
    %p44 = por %p42, %p43
    %s46 = sadd.s32 %s45, 1
    %p49 = scmp.eq.s32.totalorder %s11, 1
    %p50 = scmp.ne.s32.totalorder %s45, %s47
    %p51 = scmp.eq.s32.totalorder %s11, 0
    %p52 = por %p50, %p51
    %p53 = scmp.ne.s32.totalorder %s45, %s47
    %p54 = scmp.eq.s32.totalorder %s16, 1
    %p55 = por %p53, %p54
    %p56 = scmp.ne.s32.totalorder %s47, %s48
    %p57 = scmp.eq.s32.totalorder %s16, 0
    %p58 = por %p56, %p57
    %p59 = scmp.ne.s32.totalorder %s47, %s48
    %p60 = scmp.eq.s32.totalorder %s17, 1
    %p61 = por %p59, %p60
    %p63 = scmp.ne.s32.totalorder %s48, %s62
    %p64 = scmp.eq.s32.totalorder %s17, 0
    %p65 = por %p63, %p64
    %s67 = sadd.s32 %s66, 1
    %p70 = scmp.eq.s32.totalorder %s11, 1
    %p71 = scmp.ne.s32.totalorder %s66, %s68
    %p72 = scmp.eq.s32.totalorder %s11, 0
    %p73 = por %p71, %p72
    %p74 = scmp.ne.s32.totalorder %s66, %s68
    %p75 = scmp.eq.s32.totalorder %s16, 1
    %p76 = por %p74, %p75
    %p77 = scmp.ne.s32.totalorder %s68, %s69
    %p78 = scmp.eq.s32.totalorder %s16, 0
    %p79 = por %p77, %p78
    %p80 = scmp.ne.s32.totalorder %s68, %s69
    %p81 = scmp.eq.s32.totalorder %s17, 1
    %p82 = por %p80, %p81
    %p84 = scmp.ne.s32.totalorder %s69, %s83
    %p85 = scmp.eq.s32.totalorder %s17, 0
    %p86 = por %p84, %p85
    %s88 = sadd.s32 %s87, 1
    %p91 = scmp.eq.s32.totalorder %s11, 1
    %p92 = scmp.ne.s32.totalorder %s87, %s89
    %p93 = scmp.eq.s32.totalorder %s11, 0
    %p94 = por %p92, %p93
    %p95 = scmp.ne.s32.totalorder %s87, %s89
    %p96 = scmp.eq.s32.totalorder %s16, 1
    %p97 = por %p95, %p96
    %p98 = scmp.ne.s32.totalorder %s89, %s90
    %p99 = scmp.eq.s32.totalorder %s16, 0
    %p100 = por %p98, %p99
    %p101 = scmp.ne.s32.totalorder %s89, %s90
    %p102 = scmp.eq.s32.totalorder %s17, 1
    %p103 = por %p101, %p102
    %p105 = scmp.ne.s32.totalorder %s90, %s104
    %p106 = scmp.eq.s32.totalorder %s17, 0
    %p107 = por %p105, %p106
    %s109 = sadd.s32 %s108, 1
    %p112 = scmp.eq.s32.totalorder %s11, 1
    %p113 = scmp.ne.s32.totalorder %s108, %s110
    %p114 = scmp.eq.s32.totalorder %s11, 0
    %p115 = por %p113, %p114
    %p116 = scmp.ne.s32.totalorder %s108, %s110
    %p117 = scmp.eq.s32.totalorder %s16, 1
    %p118 = por %p116, %p117
    %p119 = scmp.ne.s32.totalorder %s110, %s111
    %p120 = scmp.eq.s32.totalorder %s16, 0
    %p121 = por %p119, %p120
    %p122 = scmp.ne.s32.totalorder %s110, %s111
    %p123 = scmp.eq.s32.totalorder %s17, 1
    %p124 = por %p122, %p123
    %p126 = scmp.ne.s32.totalorder %s111, %s125
    %p127 = scmp.eq.s32.totalorder %s17, 0
    %p128 = por %p126, %p127
    %s129 = ssub.s32 %s11, %s18
    %p130 = scmp.eq.s32.totalorder %s129, 0
    %s132 = sadd.s32 %s131, 1
    %s133 = scalar_select %p130, %s131, %s132
    %p136 = pneg %p130
    %p137 = scmp.eq.s32.totalorder %s11, 1
    %p138 = por %p136, %p137
    %p139 = scmp.ne.s32.totalorder %s131, %s134
    %p140 = scmp.eq.s32.totalorder %s11, 0
    %p141 = por %p139, %p140
    %p142 = scmp.ne.s32.totalorder %s131, %s134
    %p143 = scmp.eq.s32.totalorder %s16, 1
    %p144 = por %p142, %p143
    %p145 = scmp.ne.s32.totalorder %s134, %s135
    %p146 = scmp.eq.s32.totalorder %s16, 0
    %p147 = por %p145, %p146
    %p148 = scmp.ne.s32.totalorder %s134, %s135
    %p149 = scmp.eq.s32.totalorder %s17, 1
    %p150 = por %p148, %p149
    %p152 = scmp.ne.s32.totalorder %s135, %s151
    %p153 = scmp.eq.s32.totalorder %s17, 0
    %p154 = por %p152, %p153
    %p155 = scmp.le.s32.totalorder 1, %s11
    %p156 = scmp.lt.s32.totalorder %s11, 3
    %p157 = pnand %p155, %p156
    %p158 = pneg %p157
    // Predicated region
    $region9: #{tpu_custom_call.1} parent=5 // pred_check
      _
    $region10: #{tpu_custom_call.1} parent=5 // pred_check_branch
      %160 = sbr.rel (%p157) target = $region12
    $region11: #{tpu_custom_call.1} parent=5 // pred_region
      %s161 = ssub.s32 %s11, 1
      // Predicated region
      $region13: #{tpu_custom_call.1} parent=11 // pred_check
        %p162 = pneg %p58
      $region14: #{tpu_custom_call.1} parent=11 // pred_check_branch
        %164 = sbr.rel (%p162) target = $region16
      $region15: #{tpu_custom_call.1} parent=11 // pred_region
        _
      $region16: #{tpu_custom_call.1} parent=11 // pred_fallthru
        _
      // Predicated region
      $region17: #{tpu_custom_call.1} parent=11 // pred_check
        %p165 = pneg %p79
      $region18: #{tpu_custom_call.1} parent=11 // pred_check_branch
        %167 = sbr.rel (%p165) target = $region20
      $region19: #{tpu_custom_call.1} parent=11 // pred_region
        _
      $region20: #{tpu_custom_call.1} parent=11 // pred_fallthru
        _
      // Predicated region
      $region21: #{tpu_custom_call.1} parent=11 // pred_check
        %p168 = pneg %p100
      $region22: #{tpu_custom_call.1} parent=11 // pred_check_branch
        %170 = sbr.rel (%p168) target = $region24
      $region23: #{tpu_custom_call.1} parent=11 // pred_region
        _
      $region24: #{tpu_custom_call.1} parent=11 // pred_fallthru
        _
      // Predicated region
      $region25: #{tpu_custom_call.1} parent=11 // pred_check
        %p171 = pneg %p121
      $region26: #{tpu_custom_call.1} parent=11 // pred_check_branch
        %173 = sbr.rel (%p171) target = $region28
      $region27: #{tpu_custom_call.1} parent=11 // pred_region
        _
      $region28: #{tpu_custom_call.1} parent=11 // pred_fallthru
        _
    $region12: #{tpu_custom_call.1} parent=5 // pred_fallthru
      _
    %p174 = scmp.lt.s32.totalorder %s11, 2
    // Predicated region
    $region29: #{tpu_custom_call.1} parent=5 // pred_check
      %p175 = pneg %p174
    $region30: #{tpu_custom_call.1} parent=5 // pred_check_branch
      %177 = sbr.rel (%p175) target = $region32
    $region31: #{tpu_custom_call.1} parent=5 // pred_region
      // Predicated region
      $region33: #{tpu_custom_call.1} parent=31 // pred_check
        %p178 = pneg %p31
      $region34: #{tpu_custom_call.1} parent=31 // pred_check_branch
        %180 = sbr.rel (%p178) target = $region36
      $region35: #{tpu_custom_call.1} parent=31 // pred_region
        %p181 = scmp.lt.s32.totalorder %s11, 1
        %s182 = scalar_select %p181, %s11, 1
        %s183 = smul.addr %s182, 8
        %s184 = smul.addr %s183, 8
        %s185 = scalar_lea.vmem %s0, %s184
      $region36: #{tpu_custom_call.1} parent=31 // pred_fallthru
        _
    $region32: #{tpu_custom_call.1} parent=5 // pred_fallthru
      _
    %p186 = scmp.le.s32.totalorder 1, %s11
    %p187 = scmp.lt.s32.totalorder %s11, 3
    %p188 = pnand %p186, %p187
    %p189 = pneg %p188
    // Predicated region
    $region37: #{tpu_custom_call.1} parent=5 // pred_check
      _
    $region38: #{tpu_custom_call.1} parent=5 // pred_check_branch
      %191 = sbr.rel (%p188) target = $region40
    $region39: #{tpu_custom_call.1} parent=5 // pred_region
      %s192 = ssub.s32 %s11, 1
      %p193 = scmp.lt.s32.totalorder %s16, 1
      %s194 = scalar_select %p193, %s16, 1
      %s195 = smul.addr %s194, 8
      %s196 = smul.addr %s195, 8
      %s197 = scalar_lea.vmem %s0, %s196
      %p198 = pneg %p37
      %p199 = pneg %p34
      %p200 = pneg %p58
      %p201 = pneg %p55
      %p202 = pneg %p79
      %p203 = pneg %p76
      %p204 = pneg %p100
      %p205 = pneg %p97
      %p206 = pneg %p121
      %p207 = pneg %p118
      %p208 = pneg %p147
      %p209 = pneg %p144
      %p210 = scmp.lt.s32.totalorder %s16, 1
      %s211 = scalar_select %p210, %s16, 1
      %s212 = smul.addr %s211, 6
      %s213 = smul.addr %s212, 8
      %s214 = scalar_lea.vmem %s5, %s213
      %p215 = scmp.lt.s32.totalorder %s16, 1
      %s216 = scalar_select %p215, %s16, 1
      %s217 = smul.addr %s216, 8
      %s218 = smul.addr %s217, 8
      %s219 = scalar_lea.vmem %s0, %s218
      %p220 = scmp.lt.s32.totalorder %s16, 1
      %s221 = scalar_select %p220, %s16, 1
      %s222 = smul.addr %s221, 6
      %s223 = smul.addr %s222, 8
      %s224 = scalar_lea.vmem %s5, %s223
      %v225 = vld [vmem:[%s219] sm:$0xff]
      %v226 = vld [vmem:[%s219 + $0x8] sm:$0x3f]
      %v227 = vld [vmem:[%s1] sm:$0x1]
      %v228 = vld [vmem:[%s1 + $0x1] sm:$0x1]
      %v229 = vld [vmem:[%s1 + $0x2] sm:$0x1]
      %v230 = vld [vmem:[%s1 + $0x3] sm:$0x1]
      %v231 = vld [vmem:[%s1 + $0x4] sm:$0x1]
      %v232 = vld [vmem:[%s1 + $0x5] sm:$0x1]
      %v239 = vlaneseq
      %v240 = vshrl.u32 %v239, 7
      %v241 = vsub.s32 0, %v240
      %v242 = vrot.slane %v227, %v241
      %v243 = vlaneseq
      %v244 = vshrl.u32 %v243, 7
      %v245 = vsub.s32 0, %v244
      %v246 = vrot.slane %v228, %v245
      %v247 = vlaneseq
      %v248 = vshrl.u32 %v247, 7
      %v249 = vsub.s32 0, %v248
      %v250 = vrot.slane %v229, %v249
      %v251 = vlaneseq
      %v252 = vshrl.u32 %v251, 7
      %v253 = vsub.s32 0, %v252
      %v254 = vrot.slane %v230, %v253
      %v255 = vlaneseq
      %v256 = vshrl.u32 %v255, 7
      %v257 = vsub.s32 0, %v256
      %v258 = vrot.slane %v231, %v257
      %v259 = vlaneseq
      %v260 = vshrl.u32 %v259, 7
      %v261 = vsub.s32 0, %v260
      %v262 = vrot.slane %v232, %v261
      %v269 = vmul.f32 %v225, %v242
      %v270 = vmul.f32 %v226, %v242
      %v271 = vmul.f32 %v225, %v246
      %v272 = vmul.f32 %v226, %v246
      %v273 = vmul.f32 %v225, %v250
      %v274 = vmul.f32 %v226, %v250
      %v275 = vmul.f32 %v225, %v254
      %v276 = vmul.f32 %v226, %v254
      %v277 = vmul.f32 %v225, %v258
      %v278 = vmul.f32 %v226, %v258
      %v279 = vmul.f32 %v225, %v262
      %v280 = vmul.f32 %v226, %v262
      %v281 = vadd.f32 %v269, 0.0
      %v282 = vadd.f32 %v270, 0.0
      %v283 = vadd.f32 %v271, 0.0
      %v284 = vadd.f32 %v272, 0.0
      %v285 = vadd.f32 %v273, 0.0
      %v286 = vadd.f32 %v274, 0.0
      %v287 = vadd.f32 %v275, 0.0
      %v288 = vadd.f32 %v276, 0.0
      %v289 = vadd.f32 %v277, 0.0
      %v290 = vadd.f32 %v278, 0.0
      %v291 = vadd.f32 %v279, 0.0
      %v292 = vadd.f32 %v280, 0.0
      %s293 = scalar_lea.vmem %s1, 6
      %v294 = vld [vmem:[%s293] sm:$0x1]
      %v295 = vld [vmem:[%s293 + $0x1] sm:$0x1]
      %v296 = vld [vmem:[%s293 + $0x2] sm:$0x1]
      %v297 = vld [vmem:[%s293 + $0x3] sm:$0x1]
      %v298 = vld [vmem:[%s293 + $0x4] sm:$0x1]
      %v299 = vld [vmem:[%s293 + $0x5] sm:$0x1]
      %v306 = vlaneseq
      %v307 = vshrl.u32 %v306, 7
      %v308 = vsub.s32 0, %v307
      %v309 = vrot.slane %v294, %v308
      %v310 = vlaneseq
      %v311 = vshrl.u32 %v310, 7
      %v312 = vsub.s32 0, %v311
      %v313 = vrot.slane %v295, %v312
      %v314 = vlaneseq
      %v315 = vshrl.u32 %v314, 7
      %v316 = vsub.s32 0, %v315
      %v317 = vrot.slane %v296, %v316
      %v318 = vlaneseq
      %v319 = vshrl.u32 %v318, 7
      %v320 = vsub.s32 0, %v319
      %v321 = vrot.slane %v297, %v320
      %v322 = vlaneseq
      %v323 = vshrl.u32 %v322, 7
      %v324 = vsub.s32 0, %v323
      %v325 = vrot.slane %v298, %v324
      %v326 = vlaneseq
      %v327 = vshrl.u32 %v326, 7
      %v328 = vsub.s32 0, %v327
      %v329 = vrot.slane %v299, %v328
      %330 = vrot.lane.b32.xlu0 %v309, 1
      %v331 = vpop.permute.xlu0 %330
      %332 = vrot.lane.b32.xlu0 %v313, 1
      %v333 = vpop.permute.xlu0 %332
      %334 = vrot.lane.b32.xlu0 %v317, 1
      %v335 = vpop.permute.xlu0 %334
      %336 = vrot.lane.b32.xlu0 %v321, 1
      %v337 = vpop.permute.xlu0 %336
      %338 = vrot.lane.b32.xlu0 %v325, 1
      %v339 = vpop.permute.xlu0 %338
      %340 = vrot.lane.b32.xlu0 %v329, 1
      %v341 = vpop.permute.xlu0 %340
      %v348 = vmul.f32 %v225, %v331
      %v349 = vmul.f32 %v226, %v331
      %v350 = vmul.f32 %v225, %v333
      %v351 = vmul.f32 %v226, %v333
      %v352 = vmul.f32 %v225, %v335
      %v353 = vmul.f32 %v226, %v335
      %v354 = vmul.f32 %v225, %v337
      %v355 = vmul.f32 %v226, %v337
      %v356 = vmul.f32 %v225, %v339
      %v357 = vmul.f32 %v226, %v339
      %v358 = vmul.f32 %v225, %v341
      %v359 = vmul.f32 %v226, %v341
      %372 = vrot.lane.b32.xlu0 %v348, 127
      %v373 = vpop.permute.xlu0 %372
      %374 = vrot.lane.b32.xlu0 %v349, 127
      %v375 = vpop.permute.xlu0 %374
      %376 = vrot.lane.b32.xlu0 %v350, 127
      %v377 = vpop.permute.xlu0 %376
      %378 = vrot.lane.b32.xlu0 %v351, 127
      %v379 = vpop.permute.xlu0 %378
      %380 = vrot.lane.b32.xlu0 %v352, 127
      %v381 = vpop.permute.xlu0 %380
      %382 = vrot.lane.b32.xlu0 %v353, 127
      %v383 = vpop.permute.xlu0 %382
      %384 = vrot.lane.b32.xlu0 %v354, 127
      %v385 = vpop.permute.xlu0 %384
      %386 = vrot.lane.b32.xlu0 %v355, 127
      %v387 = vpop.permute.xlu0 %386
      %388 = vrot.lane.b32.xlu0 %v356, 127
      %v389 = vpop.permute.xlu0 %388
      %390 = vrot.lane.b32.xlu0 %v357, 127
      %v391 = vpop.permute.xlu0 %390
      %392 = vrot.lane.b32.xlu0 %v358, 127
      %v393 = vpop.permute.xlu0 %392
      %394 = vrot.lane.b32.xlu0 %v359, 127
      %v395 = vpop.permute.xlu0 %394
      %v408 = vadd.f32 %v281, %v373
      %v409 = vadd.f32 %v282, %v375
      %v410 = vadd.f32 %v283, %v377
      %v411 = vadd.f32 %v284, %v379
      %v412 = vadd.f32 %v285, %v381
      %v413 = vadd.f32 %v286, %v383
      %v414 = vadd.f32 %v287, %v385
      %v415 = vadd.f32 %v288, %v387
      %v416 = vadd.f32 %v289, %v389
      %v417 = vadd.f32 %v290, %v391
      %v418 = vadd.f32 %v291, %v393
      %v419 = vadd.f32 %v292, %v395
      %s420 = scalar_lea.vmem %s1, 12
      %v421 = vld [vmem:[%s420] sm:$0x1]
      %v422 = vld [vmem:[%s420 + $0x1] sm:$0x1]
      %v423 = vld [vmem:[%s420 + $0x2] sm:$0x1]
      %v424 = vld [vmem:[%s420 + $0x3] sm:$0x1]
      %v425 = vld [vmem:[%s420 + $0x4] sm:$0x1]
      %v426 = vld [vmem:[%s420 + $0x5] sm:$0x1]
      %v433 = vlaneseq
      %v434 = vshrl.u32 %v433, 7
      %v435 = vsub.s32 0, %v434
      %v436 = vrot.slane %v421, %v435
      %v437 = vlaneseq
      %v438 = vshrl.u32 %v437, 7
      %v439 = vsub.s32 0, %v438
      %v440 = vrot.slane %v422, %v439
      %v441 = vlaneseq
      %v442 = vshrl.u32 %v441, 7
      %v443 = vsub.s32 0, %v442
      %v444 = vrot.slane %v423, %v443
      %v445 = vlaneseq
      %v446 = vshrl.u32 %v445, 7
      %v447 = vsub.s32 0, %v446
      %v448 = vrot.slane %v424, %v447
      %v449 = vlaneseq
      %v450 = vshrl.u32 %v449, 7
      %v451 = vsub.s32 0, %v450
      %v452 = vrot.slane %v425, %v451
      %v453 = vlaneseq
      %v454 = vshrl.u32 %v453, 7
      %v455 = vsub.s32 0, %v454
      %v456 = vrot.slane %v426, %v455
      %457 = vrot.lane.b32.xlu0 %v436, 2
      %v458 = vpop.permute.xlu0 %457
      %459 = vrot.lane.b32.xlu0 %v440, 2
      %v460 = vpop.permute.xlu0 %459
      %461 = vrot.lane.b32.xlu0 %v444, 2
      %v462 = vpop.permute.xlu0 %461
      %463 = vrot.lane.b32.xlu0 %v448, 2
      %v464 = vpop.permute.xlu0 %463
      %465 = vrot.lane.b32.xlu0 %v452, 2
      %v466 = vpop.permute.xlu0 %465
      %467 = vrot.lane.b32.xlu0 %v456, 2
      %v468 = vpop.permute.xlu0 %467
      %v475 = vmul.f32 %v225, %v458
      %v476 = vmul.f32 %v226, %v458
      %v477 = vmul.f32 %v225, %v460
      %v478 = vmul.f32 %v226, %v460
      %v479 = vmul.f32 %v225, %v462
      %v480 = vmul.f32 %v226, %v462
      %v481 = vmul.f32 %v225, %v464
      %v482 = vmul.f32 %v226, %v464
      %v483 = vmul.f32 %v225, %v466
      %v484 = vmul.f32 %v226, %v466
      %v485 = vmul.f32 %v225, %v468
      %v486 = vmul.f32 %v226, %v468
      %499 = vrot.lane.b32.xlu0 %v475, 126
      %v500 = vpop.permute.xlu0 %499
      %501 = vrot.lane.b32.xlu0 %v476, 126
      %v502 = vpop.permute.xlu0 %501
      %503 = vrot.lane.b32.xlu0 %v477, 126
      %v504 = vpop.permute.xlu0 %503
      %505 = vrot.lane.b32.xlu0 %v478, 126
      %v506 = vpop.permute.xlu0 %505
      %507 = vrot.lane.b32.xlu0 %v479, 126
      %v508 = vpop.permute.xlu0 %507
      %509 = vrot.lane.b32.xlu0 %v480, 126
      %v510 = vpop.permute.xlu0 %509
      %511 = vrot.lane.b32.xlu0 %v481, 126
      %v512 = vpop.permute.xlu0 %511
      %513 = vrot.lane.b32.xlu0 %v482, 126
      %v514 = vpop.permute.xlu0 %513
      %515 = vrot.lane.b32.xlu0 %v483, 126
      %v516 = vpop.permute.xlu0 %515
      %517 = vrot.lane.b32.xlu0 %v484, 126
      %v518 = vpop.permute.xlu0 %517
      %519 = vrot.lane.b32.xlu0 %v485, 126
      %v520 = vpop.permute.xlu0 %519
      %521 = vrot.lane.b32.xlu0 %v486, 126
      %v522 = vpop.permute.xlu0 %521
      %v535 = vadd.f32 %v408, %v500
      %v536 = vadd.f32 %v409, %v502
      %v537 = vadd.f32 %v410, %v504
      %v538 = vadd.f32 %v411, %v506
      %v539 = vadd.f32 %v412, %v508
      %v540 = vadd.f32 %v413, %v510
      %v541 = vadd.f32 %v414, %v512
      %v542 = vadd.f32 %v415, %v514
      %v543 = vadd.f32 %v416, %v516
      %v544 = vadd.f32 %v417, %v518
      %v545 = vadd.f32 %v418, %v520
      %v546 = vadd.f32 %v419, %v522
      %v547 = vld [vmem:[%s219 + $0x1] sm:$0xff]
      %v548 = vld [vmem:[%s219 + $0x9] sm:$0x3f]
      %s549 = scalar_lea.vmem %s1, 18
      %v550 = vld [vmem:[%s549] sm:$0x1]
      %v551 = vld [vmem:[%s549 + $0x1] sm:$0x1]
      %v552 = vld [vmem:[%s549 + $0x2] sm:$0x1]
      %v553 = vld [vmem:[%s549 + $0x3] sm:$0x1]
      %v554 = vld [vmem:[%s549 + $0x4] sm:$0x1]
      %v555 = vld [vmem:[%s549 + $0x5] sm:$0x1]
      %v562 = vlaneseq
      %v563 = vshrl.u32 %v562, 7
      %v564 = vsub.s32 0, %v563
      %v565 = vrot.slane %v550, %v564
      %v566 = vlaneseq
      %v567 = vshrl.u32 %v566, 7
      %v568 = vsub.s32 0, %v567
      %v569 = vrot.slane %v551, %v568
      %v570 = vlaneseq
      %v571 = vshrl.u32 %v570, 7
      %v572 = vsub.s32 0, %v571
      %v573 = vrot.slane %v552, %v572
      %v574 = vlaneseq
      %v575 = vshrl.u32 %v574, 7
      %v576 = vsub.s32 0, %v575
      %v577 = vrot.slane %v553, %v576
      %v578 = vlaneseq
      %v579 = vshrl.u32 %v578, 7
      %v580 = vsub.s32 0, %v579
      %v581 = vrot.slane %v554, %v580
      %v582 = vlaneseq
      %v583 = vshrl.u32 %v582, 7
      %v584 = vsub.s32 0, %v583
      %v585 = vrot.slane %v555, %v584
      %v592 = vmul.f32 %v547, %v565
      %v593 = vmul.f32 %v548, %v565
      %v594 = vmul.f32 %v547, %v569
      %v595 = vmul.f32 %v548, %v569
      %v596 = vmul.f32 %v547, %v573
      %v597 = vmul.f32 %v548, %v573
      %v598 = vmul.f32 %v547, %v577
      %v599 = vmul.f32 %v548, %v577
      %v600 = vmul.f32 %v547, %v581
      %v601 = vmul.f32 %v548, %v581
      %v602 = vmul.f32 %v547, %v585
      %v603 = vmul.f32 %v548, %v585
      %v604 = vadd.f32 %v535, %v592
      %v605 = vadd.f32 %v536, %v593
      %v606 = vadd.f32 %v537, %v594
      %v607 = vadd.f32 %v538, %v595
      %v608 = vadd.f32 %v539, %v596
      %v609 = vadd.f32 %v540, %v597
      %v610 = vadd.f32 %v541, %v598
      %v611 = vadd.f32 %v542, %v599
      %v612 = vadd.f32 %v543, %v600
      %v613 = vadd.f32 %v544, %v601
      %v614 = vadd.f32 %v545, %v602
      %v615 = vadd.f32 %v546, %v603
      %s616 = scalar_lea.vmem %s1, 24
      %v617 = vld [vmem:[%s616] sm:$0x1]
      %v618 = vld [vmem:[%s616 + $0x1] sm:$0x1]
      %v619 = vld [vmem:[%s616 + $0x2] sm:$0x1]
      %v620 = vld [vmem:[%s616 + $0x3] sm:$0x1]
      %v621 = vld [vmem:[%s616 + $0x4] sm:$0x1]
      %v622 = vld [vmem:[%s616 + $0x5] sm:$0x1]
      %v629 = vlaneseq
      %v630 = vshrl.u32 %v629, 7
      %v631 = vsub.s32 0, %v630
      %v632 = vrot.slane %v617, %v631
      %v633 = vlaneseq
      %v634 = vshrl.u32 %v633, 7
      %v635 = vsub.s32 0, %v634
      %v636 = vrot.slane %v618, %v635
      %v637 = vlaneseq
      %v638 = vshrl.u32 %v637, 7
      %v639 = vsub.s32 0, %v638
      %v640 = vrot.slane %v619, %v639
      %v641 = vlaneseq
      %v642 = vshrl.u32 %v641, 7
      %v643 = vsub.s32 0, %v642
      %v644 = vrot.slane %v620, %v643
      %v645 = vlaneseq
      %v646 = vshrl.u32 %v645, 7
      %v647 = vsub.s32 0, %v646
      %v648 = vrot.slane %v621, %v647
      %v649 = vlaneseq
      %v650 = vshrl.u32 %v649, 7
      %v651 = vsub.s32 0, %v650
      %v652 = vrot.slane %v622, %v651
      %653 = vrot.lane.b32.xlu0 %v632, 1
      %v654 = vpop.permute.xlu0 %653
      %655 = vrot.lane.b32.xlu0 %v636, 1
      %v656 = vpop.permute.xlu0 %655
      %657 = vrot.lane.b32.xlu0 %v640, 1
      %v658 = vpop.permute.xlu0 %657
      %659 = vrot.lane.b32.xlu0 %v644, 1
      %v660 = vpop.permute.xlu0 %659
      %661 = vrot.lane.b32.xlu0 %v648, 1
      %v662 = vpop.permute.xlu0 %661
      %663 = vrot.lane.b32.xlu0 %v652, 1
      %v664 = vpop.permute.xlu0 %663
      %v671 = vmul.f32 %v547, %v654
      %v672 = vmul.f32 %v548, %v654
      %v673 = vmul.f32 %v547, %v656
      %v674 = vmul.f32 %v548, %v656
      %v675 = vmul.f32 %v547, %v658
      %v676 = vmul.f32 %v548, %v658
      %v677 = vmul.f32 %v547, %v660
      %v678 = vmul.f32 %v548, %v660
      %v679 = vmul.f32 %v547, %v662
      %v680 = vmul.f32 %v548, %v662
      %v681 = vmul.f32 %v547, %v664
      %v682 = vmul.f32 %v548, %v664
      %695 = vrot.lane.b32.xlu0 %v671, 127
      %v696 = vpop.permute.xlu0 %695
      %697 = vrot.lane.b32.xlu0 %v672, 127
      %v698 = vpop.permute.xlu0 %697
      %699 = vrot.lane.b32.xlu0 %v673, 127
      %v700 = vpop.permute.xlu0 %699
      %701 = vrot.lane.b32.xlu0 %v674, 127
      %v702 = vpop.permute.xlu0 %701
      %703 = vrot.lane.b32.xlu0 %v675, 127
      %v704 = vpop.permute.xlu0 %703
      %705 = vrot.lane.b32.xlu0 %v676, 127
      %v706 = vpop.permute.xlu0 %705
      %707 = vrot.lane.b32.xlu0 %v677, 127
      %v708 = vpop.permute.xlu0 %707
      %709 = vrot.lane.b32.xlu0 %v678, 127
      %v710 = vpop.permute.xlu0 %709
      %711 = vrot.lane.b32.xlu0 %v679, 127
      %v712 = vpop.permute.xlu0 %711
      %713 = vrot.lane.b32.xlu0 %v680, 127
      %v714 = vpop.permute.xlu0 %713
      %715 = vrot.lane.b32.xlu0 %v681, 127
      %v716 = vpop.permute.xlu0 %715
      %717 = vrot.lane.b32.xlu0 %v682, 127
      %v718 = vpop.permute.xlu0 %717
      %v731 = vadd.f32 %v604, %v696
      %v732 = vadd.f32 %v605, %v698
      %v733 = vadd.f32 %v606, %v700
      %v734 = vadd.f32 %v607, %v702
      %v735 = vadd.f32 %v608, %v704
      %v736 = vadd.f32 %v609, %v706
      %v737 = vadd.f32 %v610, %v708
      %v738 = vadd.f32 %v611, %v710
      %v739 = vadd.f32 %v612, %v712
      %v740 = vadd.f32 %v613, %v714
      %v741 = vadd.f32 %v614, %v716
      %v742 = vadd.f32 %v615, %v718
      %s743 = scalar_lea.vmem %s1, 30
      %v744 = vld [vmem:[%s743] sm:$0x1]
      %v745 = vld [vmem:[%s743 + $0x1] sm:$0x1]
      %v746 = vld [vmem:[%s743 + $0x2] sm:$0x1]
      %v747 = vld [vmem:[%s743 + $0x3] sm:$0x1]
      %v748 = vld [vmem:[%s743 + $0x4] sm:$0x1]
      %v749 = vld [vmem:[%s743 + $0x5] sm:$0x1]
      %v756 = vlaneseq
      %v757 = vshrl.u32 %v756, 7
      %v758 = vsub.s32 0, %v757
      %v759 = vrot.slane %v744, %v758
      %v760 = vlaneseq
      %v761 = vshrl.u32 %v760, 7
      %v762 = vsub.s32 0, %v761
      %v763 = vrot.slane %v745, %v762
      %v764 = vlaneseq
      %v765 = vshrl.u32 %v764, 7
      %v766 = vsub.s32 0, %v765
      %v767 = vrot.slane %v746, %v766
      %v768 = vlaneseq
      %v769 = vshrl.u32 %v768, 7
      %v770 = vsub.s32 0, %v769
      %v771 = vrot.slane %v747, %v770
      %v772 = vlaneseq
      %v773 = vshrl.u32 %v772, 7
      %v774 = vsub.s32 0, %v773
      %v775 = vrot.slane %v748, %v774
      %v776 = vlaneseq
      %v777 = vshrl.u32 %v776, 7
      %v778 = vsub.s32 0, %v777
      %v779 = vrot.slane %v749, %v778
      %780 = vrot.lane.b32.xlu0 %v759, 2
      %v781 = vpop.permute.xlu0 %780
      %782 = vrot.lane.b32.xlu0 %v763, 2
      %v783 = vpop.permute.xlu0 %782
      %784 = vrot.lane.b32.xlu0 %v767, 2
      %v785 = vpop.permute.xlu0 %784
      %786 = vrot.lane.b32.xlu0 %v771, 2
      %v787 = vpop.permute.xlu0 %786
      %788 = vrot.lane.b32.xlu0 %v775, 2
      %v789 = vpop.permute.xlu0 %788
      %790 = vrot.lane.b32.xlu0 %v779, 2
      %v791 = vpop.permute.xlu0 %790
      %v798 = vmul.f32 %v547, %v781
      %v799 = vmul.f32 %v548, %v781
      %v800 = vmul.f32 %v547, %v783
      %v801 = vmul.f32 %v548, %v783
      %v802 = vmul.f32 %v547, %v785
      %v803 = vmul.f32 %v548, %v785
      %v804 = vmul.f32 %v547, %v787
      %v805 = vmul.f32 %v548, %v787
      %v806 = vmul.f32 %v547, %v789
      %v807 = vmul.f32 %v548, %v789
      %v808 = vmul.f32 %v547, %v791
      %v809 = vmul.f32 %v548, %v791
      %822 = vrot.lane.b32.xlu0 %v798, 126
      %v823 = vpop.permute.xlu0 %822
      %824 = vrot.lane.b32.xlu0 %v799, 126
      %v825 = vpop.permute.xlu0 %824
      %826 = vrot.lane.b32.xlu0 %v800, 126
      %v827 = vpop.permute.xlu0 %826
      %828 = vrot.lane.b32.xlu0 %v801, 126
      %v829 = vpop.permute.xlu0 %828
      %830 = vrot.lane.b32.xlu0 %v802, 126
      %v831 = vpop.permute.xlu0 %830
      %832 = vrot.lane.b32.xlu0 %v803, 126
      %v833 = vpop.permute.xlu0 %832
      %834 = vrot.lane.b32.xlu0 %v804, 126
      %v835 = vpop.permute.xlu0 %834
      %836 = vrot.lane.b32.xlu0 %v805, 126
      %v837 = vpop.permute.xlu0 %836
      %838 = vrot.lane.b32.xlu0 %v806, 126
      %v839 = vpop.permute.xlu0 %838
      %840 = vrot.lane.b32.xlu0 %v807, 126
      %v841 = vpop.permute.xlu0 %840
      %842 = vrot.lane.b32.xlu0 %v808, 126
      %v843 = vpop.permute.xlu0 %842
      %844 = vrot.lane.b32.xlu0 %v809, 126
      %v845 = vpop.permute.xlu0 %844
      %v858 = vadd.f32 %v731, %v823
      %v859 = vadd.f32 %v732, %v825
      %v860 = vadd.f32 %v733, %v827
      %v861 = vadd.f32 %v734, %v829
      %v862 = vadd.f32 %v735, %v831
      %v863 = vadd.f32 %v736, %v833
      %v864 = vadd.f32 %v737, %v835
      %v865 = vadd.f32 %v738, %v837
      %v866 = vadd.f32 %v739, %v839
      %v867 = vadd.f32 %v740, %v841
      %v868 = vadd.f32 %v741, %v843
      %v869 = vadd.f32 %v742, %v845
      %v870 = vld [vmem:[%s219 + $0x2] sm:$0xff]
      %v871 = vld [vmem:[%s219 + $0xa] sm:$0x3f]
      %s872 = scalar_lea.vmem %s1, 36
      %v873 = vld [vmem:[%s872] sm:$0x1]
      %v874 = vld [vmem:[%s872 + $0x1] sm:$0x1]
      %v875 = vld [vmem:[%s872 + $0x2] sm:$0x1]
      %v876 = vld [vmem:[%s872 + $0x3] sm:$0x1]
      %v877 = vld [vmem:[%s872 + $0x4] sm:$0x1]
      %v878 = vld [vmem:[%s872 + $0x5] sm:$0x1]
      %v885 = vlaneseq
      %v886 = vshrl.u32 %v885, 7
      %v887 = vsub.s32 0, %v886
      %v888 = vrot.slane %v873, %v887
      %v889 = vlaneseq
      %v890 = vshrl.u32 %v889, 7
      %v891 = vsub.s32 0, %v890
      %v892 = vrot.slane %v874, %v891
      %v893 = vlaneseq
      %v894 = vshrl.u32 %v893, 7
      %v895 = vsub.s32 0, %v894
      %v896 = vrot.slane %v875, %v895
      %v897 = vlaneseq
      %v898 = vshrl.u32 %v897, 7
      %v899 = vsub.s32 0, %v898
      %v900 = vrot.slane %v876, %v899
      %v901 = vlaneseq
      %v902 = vshrl.u32 %v901, 7
      %v903 = vsub.s32 0, %v902
      %v904 = vrot.slane %v877, %v903
      %v905 = vlaneseq
      %v906 = vshrl.u32 %v905, 7
      %v907 = vsub.s32 0, %v906
      %v908 = vrot.slane %v878, %v907
      %v915 = vmul.f32 %v870, %v888
      %v916 = vmul.f32 %v871, %v888
      %v917 = vmul.f32 %v870, %v892
      %v918 = vmul.f32 %v871, %v892
      %v919 = vmul.f32 %v870, %v896
      %v920 = vmul.f32 %v871, %v896
      %v921 = vmul.f32 %v870, %v900
      %v922 = vmul.f32 %v871, %v900
      %v923 = vmul.f32 %v870, %v904
      %v924 = vmul.f32 %v871, %v904
      %v925 = vmul.f32 %v870, %v908
      %v926 = vmul.f32 %v871, %v908
      %v927 = vadd.f32 %v858, %v915
      %v928 = vadd.f32 %v859, %v916
      %v929 = vadd.f32 %v860, %v917
      %v930 = vadd.f32 %v861, %v918
      %v931 = vadd.f32 %v862, %v919
      %v932 = vadd.f32 %v863, %v920
      %v933 = vadd.f32 %v864, %v921
      %v934 = vadd.f32 %v865, %v922
      %v935 = vadd.f32 %v866, %v923
      %v936 = vadd.f32 %v867, %v924
      %v937 = vadd.f32 %v868, %v925
      %v938 = vadd.f32 %v869, %v926
      %s939 = scalar_lea.vmem %s1, 42
      %v940 = vld [vmem:[%s939] sm:$0x1]
      %v941 = vld [vmem:[%s939 + $0x1] sm:$0x1]
      %v942 = vld [vmem:[%s939 + $0x2] sm:$0x1]
      %v943 = vld [vmem:[%s939 + $0x3] sm:$0x1]
      %v944 = vld [vmem:[%s939 + $0x4] sm:$0x1]
      %v945 = vld [vmem:[%s939 + $0x5] sm:$0x1]
      %v952 = vlaneseq
      %v953 = vshrl.u32 %v952, 7
      %v954 = vsub.s32 0, %v953
      %v955 = vrot.slane %v940, %v954
      %v956 = vlaneseq
      %v957 = vshrl.u32 %v956, 7
      %v958 = vsub.s32 0, %v957
      %v959 = vrot.slane %v941, %v958
      %v960 = vlaneseq
      %v961 = vshrl.u32 %v960, 7
      %v962 = vsub.s32 0, %v961
      %v963 = vrot.slane %v942, %v962
      %v964 = vlaneseq
      %v965 = vshrl.u32 %v964, 7
      %v966 = vsub.s32 0, %v965
      %v967 = vrot.slane %v943, %v966
      %v968 = vlaneseq
      %v969 = vshrl.u32 %v968, 7
      %v970 = vsub.s32 0, %v969
      %v971 = vrot.slane %v944, %v970
      %v972 = vlaneseq
      %v973 = vshrl.u32 %v972, 7
      %v974 = vsub.s32 0, %v973
      %v975 = vrot.slane %v945, %v974
      %976 = vrot.lane.b32.xlu0 %v955, 1
      %v977 = vpop.permute.xlu0 %976
      %978 = vrot.lane.b32.xlu0 %v959, 1
      %v979 = vpop.permute.xlu0 %978
      %980 = vrot.lane.b32.xlu0 %v963, 1
      %v981 = vpop.permute.xlu0 %980
      %982 = vrot.lane.b32.xlu0 %v967, 1
      %v983 = vpop.permute.xlu0 %982
      %984 = vrot.lane.b32.xlu0 %v971, 1
      %v985 = vpop.permute.xlu0 %984
      %986 = vrot.lane.b32.xlu0 %v975, 1
      %v987 = vpop.permute.xlu0 %986
      %v994 = vmul.f32 %v870, %v977
      %v995 = vmul.f32 %v871, %v977
      %v996 = vmul.f32 %v870, %v979
      %v997 = vmul.f32 %v871, %v979
      %v998 = vmul.f32 %v870, %v981
      %v999 = vmul.f32 %v871, %v981
      %v1000 = vmul.f32 %v870, %v983
      %v1001 = vmul.f32 %v871, %v983
      %v1002 = vmul.f32 %v870, %v985
      %v1003 = vmul.f32 %v871, %v985
      %v1004 = vmul.f32 %v870, %v987
      %v1005 = vmul.f32 %v871, %v987
      %1018 = vrot.lane.b32.xlu0 %v994, 127
      %v1019 = vpop.permute.xlu0 %1018
      %1020 = vrot.lane.b32.xlu0 %v995, 127
      %v1021 = vpop.permute.xlu0 %1020
      %1022 = vrot.lane.b32.xlu0 %v996, 127
      %v1023 = vpop.permute.xlu0 %1022
      %1024 = vrot.lane.b32.xlu0 %v997, 127
      %v1025 = vpop.permute.xlu0 %1024
      %1026 = vrot.lane.b32.xlu0 %v998, 127
      %v1027 = vpop.permute.xlu0 %1026
      %1028 = vrot.lane.b32.xlu0 %v999, 127
      %v1029 = vpop.permute.xlu0 %1028
      %1030 = vrot.lane.b32.xlu0 %v1000, 127
      %v1031 = vpop.permute.xlu0 %1030
      %1032 = vrot.lane.b32.xlu0 %v1001, 127
      %v1033 = vpop.permute.xlu0 %1032
      %1034 = vrot.lane.b32.xlu0 %v1002, 127
      %v1035 = vpop.permute.xlu0 %1034
      %1036 = vrot.lane.b32.xlu0 %v1003, 127
      %v1037 = vpop.permute.xlu0 %1036
      %1038 = vrot.lane.b32.xlu0 %v1004, 127
      %v1039 = vpop.permute.xlu0 %1038
      %1040 = vrot.lane.b32.xlu0 %v1005, 127
      %v1041 = vpop.permute.xlu0 %1040
      %v1054 = vadd.f32 %v927, %v1019
      %v1055 = vadd.f32 %v928, %v1021
      %v1056 = vadd.f32 %v929, %v1023
      %v1057 = vadd.f32 %v930, %v1025
      %v1058 = vadd.f32 %v931, %v1027
      %v1059 = vadd.f32 %v932, %v1029
      %v1060 = vadd.f32 %v933, %v1031
      %v1061 = vadd.f32 %v934, %v1033
      %v1062 = vadd.f32 %v935, %v1035
      %v1063 = vadd.f32 %v936, %v1037
      %v1064 = vadd.f32 %v937, %v1039
      %v1065 = vadd.f32 %v938, %v1041
      %s1066 = scalar_lea.vmem %s1, 48
      %v1067 = vld [vmem:[%s1066] sm:$0x1]
      %v1068 = vld [vmem:[%s1066 + $0x1] sm:$0x1]
      %v1069 = vld [vmem:[%s1066 + $0x2] sm:$0x1]
      %v1070 = vld [vmem:[%s1066 + $0x3] sm:$0x1]
      %v1071 = vld [vmem:[%s1066 + $0x4] sm:$0x1]
      %v1072 = vld [vmem:[%s1066 + $0x5] sm:$0x1]
      %v1079 = vlaneseq
      %v1080 = vshrl.u32 %v1079, 7
      %v1081 = vsub.s32 0, %v1080
      %v1082 = vrot.slane %v1067, %v1081
      %v1083 = vlaneseq
      %v1084 = vshrl.u32 %v1083, 7
      %v1085 = vsub.s32 0, %v1084
      %v1086 = vrot.slane %v1068, %v1085
      %v1087 = vlaneseq
      %v1088 = vshrl.u32 %v1087, 7
      %v1089 = vsub.s32 0, %v1088
      %v1090 = vrot.slane %v1069, %v1089
      %v1091 = vlaneseq
      %v1092 = vshrl.u32 %v1091, 7
      %v1093 = vsub.s32 0, %v1092
      %v1094 = vrot.slane %v1070, %v1093
      %v1095 = vlaneseq
      %v1096 = vshrl.u32 %v1095, 7
      %v1097 = vsub.s32 0, %v1096
      %v1098 = vrot.slane %v1071, %v1097
      %v1099 = vlaneseq
      %v1100 = vshrl.u32 %v1099, 7
      %v1101 = vsub.s32 0, %v1100
      %v1102 = vrot.slane %v1072, %v1101
      %1103 = vrot.lane.b32.xlu0 %v1082, 2
      %v1104 = vpop.permute.xlu0 %1103
      %1105 = vrot.lane.b32.xlu0 %v1086, 2
      %v1106 = vpop.permute.xlu0 %1105
      %1107 = vrot.lane.b32.xlu0 %v1090, 2
      %v1108 = vpop.permute.xlu0 %1107
      %1109 = vrot.lane.b32.xlu0 %v1094, 2
      %v1110 = vpop.permute.xlu0 %1109
      %1111 = vrot.lane.b32.xlu0 %v1098, 2
      %v1112 = vpop.permute.xlu0 %1111
      %1113 = vrot.lane.b32.xlu0 %v1102, 2
      %v1114 = vpop.permute.xlu0 %1113
      %v1121 = vmul.f32 %v870, %v1104
      %v1122 = vmul.f32 %v871, %v1104
      %v1123 = vmul.f32 %v870, %v1106
      %v1124 = vmul.f32 %v871, %v1106
      %v1125 = vmul.f32 %v870, %v1108
      %v1126 = vmul.f32 %v871, %v1108
      %v1127 = vmul.f32 %v870, %v1110
      %v1128 = vmul.f32 %v871, %v1110
      %v1129 = vmul.f32 %v870, %v1112
      %v1130 = vmul.f32 %v871, %v1112
      %v1131 = vmul.f32 %v870, %v1114
      %v1132 = vmul.f32 %v871, %v1114
      %1145 = vrot.lane.b32.xlu0 %v1121, 126
      %v1146 = vpop.permute.xlu0 %1145
      %1147 = vrot.lane.b32.xlu0 %v1122, 126
      %v1148 = vpop.permute.xlu0 %1147
      %1149 = vrot.lane.b32.xlu0 %v1123, 126
      %v1150 = vpop.permute.xlu0 %1149
      %1151 = vrot.lane.b32.xlu0 %v1124, 126
      %v1152 = vpop.permute.xlu0 %1151
      %1153 = vrot.lane.b32.xlu0 %v1125, 126
      %v1154 = vpop.permute.xlu0 %1153
      %1155 = vrot.lane.b32.xlu0 %v1126, 126
      %v1156 = vpop.permute.xlu0 %1155
      %1157 = vrot.lane.b32.xlu0 %v1127, 126
      %v1158 = vpop.permute.xlu0 %1157
      %1159 = vrot.lane.b32.xlu0 %v1128, 126
      %v1160 = vpop.permute.xlu0 %1159
      %1161 = vrot.lane.b32.xlu0 %v1129, 126
      %v1162 = vpop.permute.xlu0 %1161
      %1163 = vrot.lane.b32.xlu0 %v1130, 126
      %v1164 = vpop.permute.xlu0 %1163
      %1165 = vrot.lane.b32.xlu0 %v1131, 126
      %v1166 = vpop.permute.xlu0 %1165
      %1167 = vrot.lane.b32.xlu0 %v1132, 126
      %v1168 = vpop.permute.xlu0 %1167
      %v1181 = vadd.f32 %v1054, %v1146
      %v1182 = vadd.f32 %v1055, %v1148
      %v1183 = vadd.f32 %v1056, %v1150
      %v1184 = vadd.f32 %v1057, %v1152
      %v1185 = vadd.f32 %v1058, %v1154
      %v1186 = vadd.f32 %v1059, %v1156
      %v1187 = vadd.f32 %v1060, %v1158
      %v1188 = vadd.f32 %v1061, %v1160
      %v1189 = vadd.f32 %v1062, %v1162
      %v1190 = vadd.f32 %v1063, %v1164
      %v1191 = vadd.f32 %v1064, %v1166
      %v1192 = vadd.f32 %v1065, %v1168
      %s1193 = scalar_lea.vmem %s219, 16
      %v1194 = vld [vmem:[%s1193] sm:$0xff]
      %v1195 = vld [vmem:[%s1193 + $0x8] sm:$0x3f]
      %s1196 = scalar_lea.vmem %s1, 54
      %v1197 = vld [vmem:[%s1196] sm:$0x1]
      %v1198 = vld [vmem:[%s1196 + $0x1] sm:$0x1]
      %v1199 = vld [vmem:[%s1196 + $0x2] sm:$0x1]
      %v1200 = vld [vmem:[%s1196 + $0x3] sm:$0x1]
      %v1201 = vld [vmem:[%s1196 + $0x4] sm:$0x1]
      %v1202 = vld [vmem:[%s1196 + $0x5] sm:$0x1]
      %v1209 = vlaneseq
      %v1210 = vshrl.u32 %v1209, 7
      %v1211 = vsub.s32 0, %v1210
      %v1212 = vrot.slane %v1197, %v1211
      %v1213 = vlaneseq
      %v1214 = vshrl.u32 %v1213, 7
      %v1215 = vsub.s32 0, %v1214
      %v1216 = vrot.slane %v1198, %v1215
      %v1217 = vlaneseq
      %v1218 = vshrl.u32 %v1217, 7
      %v1219 = vsub.s32 0, %v1218
      %v1220 = vrot.slane %v1199, %v1219
      %v1221 = vlaneseq
      %v1222 = vshrl.u32 %v1221, 7
      %v1223 = vsub.s32 0, %v1222
      %v1224 = vrot.slane %v1200, %v1223
      %v1225 = vlaneseq
      %v1226 = vshrl.u32 %v1225, 7
      %v1227 = vsub.s32 0, %v1226
      %v1228 = vrot.slane %v1201, %v1227
      %v1229 = vlaneseq
      %v1230 = vshrl.u32 %v1229, 7
      %v1231 = vsub.s32 0, %v1230
      %v1232 = vrot.slane %v1202, %v1231
      %v1239 = vmul.f32 %v1194, %v1212
      %v1240 = vmul.f32 %v1195, %v1212
      %v1241 = vmul.f32 %v1194, %v1216
      %v1242 = vmul.f32 %v1195, %v1216
      %v1243 = vmul.f32 %v1194, %v1220
      %v1244 = vmul.f32 %v1195, %v1220
      %v1245 = vmul.f32 %v1194, %v1224
      %v1246 = vmul.f32 %v1195, %v1224
      %v1247 = vmul.f32 %v1194, %v1228
      %v1248 = vmul.f32 %v1195, %v1228
      %v1249 = vmul.f32 %v1194, %v1232
      %v1250 = vmul.f32 %v1195, %v1232
      %v1251 = vadd.f32 %v1181, %v1239
      %v1252 = vadd.f32 %v1182, %v1240
      %v1253 = vadd.f32 %v1183, %v1241
      %v1254 = vadd.f32 %v1184, %v1242
      %v1255 = vadd.f32 %v1185, %v1243
      %v1256 = vadd.f32 %v1186, %v1244
      %v1257 = vadd.f32 %v1187, %v1245
      %v1258 = vadd.f32 %v1188, %v1246
      %v1259 = vadd.f32 %v1189, %v1247
      %v1260 = vadd.f32 %v1190, %v1248
      %v1261 = vadd.f32 %v1191, %v1249
      %v1262 = vadd.f32 %v1192, %v1250
      %s1263 = scalar_lea.vmem %s1, 60
      %v1264 = vld [vmem:[%s1263] sm:$0x1]
      %v1265 = vld [vmem:[%s1263 + $0x1] sm:$0x1]
      %v1266 = vld [vmem:[%s1263 + $0x2] sm:$0x1]
      %v1267 = vld [vmem:[%s1263 + $0x3] sm:$0x1]
      %v1268 = vld [vmem:[%s1263 + $0x4] sm:$0x1]
      %v1269 = vld [vmem:[%s1263 + $0x5] sm:$0x1]
      %v1276 = vlaneseq
      %v1277 = vshrl.u32 %v1276, 7
      %v1278 = vsub.s32 0, %v1277
      %v1279 = vrot.slane %v1264, %v1278
      %v1280 = vlaneseq
      %v1281 = vshrl.u32 %v1280, 7
      %v1282 = vsub.s32 0, %v1281
      %v1283 = vrot.slane %v1265, %v1282
      %v1284 = vlaneseq
      %v1285 = vshrl.u32 %v1284, 7
      %v1286 = vsub.s32 0, %v1285
      %v1287 = vrot.slane %v1266, %v1286
      %v1288 = vlaneseq
      %v1289 = vshrl.u32 %v1288, 7
      %v1290 = vsub.s32 0, %v1289
      %v1291 = vrot.slane %v1267, %v1290
      %v1292 = vlaneseq
      %v1293 = vshrl.u32 %v1292, 7
      %v1294 = vsub.s32 0, %v1293
      %v1295 = vrot.slane %v1268, %v1294
      %v1296 = vlaneseq
      %v1297 = vshrl.u32 %v1296, 7
      %v1298 = vsub.s32 0, %v1297
      %v1299 = vrot.slane %v1269, %v1298
      %1300 = vrot.lane.b32.xlu0 %v1279, 1
      %v1301 = vpop.permute.xlu0 %1300
      %1302 = vrot.lane.b32.xlu0 %v1283, 1
      %v1303 = vpop.permute.xlu0 %1302
      %1304 = vrot.lane.b32.xlu0 %v1287, 1
      %v1305 = vpop.permute.xlu0 %1304
      %1306 = vrot.lane.b32.xlu0 %v1291, 1
      %v1307 = vpop.permute.xlu0 %1306
      %1308 = vrot.lane.b32.xlu0 %v1295, 1
      %v1309 = vpop.permute.xlu0 %1308
      %1310 = vrot.lane.b32.xlu0 %v1299, 1
      %v1311 = vpop.permute.xlu0 %1310
      %v1318 = vmul.f32 %v1194, %v1301
      %v1319 = vmul.f32 %v1195, %v1301
      %v1320 = vmul.f32 %v1194, %v1303
      %v1321 = vmul.f32 %v1195, %v1303
      %v1322 = vmul.f32 %v1194, %v1305
      %v1323 = vmul.f32 %v1195, %v1305
      %v1324 = vmul.f32 %v1194, %v1307
      %v1325 = vmul.f32 %v1195, %v1307
      %v1326 = vmul.f32 %v1194, %v1309
      %v1327 = vmul.f32 %v1195, %v1309
      %v1328 = vmul.f32 %v1194, %v1311
      %v1329 = vmul.f32 %v1195, %v1311
      %1342 = vrot.lane.b32.xlu0 %v1318, 127
      %v1343 = vpop.permute.xlu0 %1342
      %1344 = vrot.lane.b32.xlu0 %v1319, 127
      %v1345 = vpop.permute.xlu0 %1344
      %1346 = vrot.lane.b32.xlu0 %v1320, 127
      %v1347 = vpop.permute.xlu0 %1346
      %1348 = vrot.lane.b32.xlu0 %v1321, 127
      %v1349 = vpop.permute.xlu0 %1348
      %1350 = vrot.lane.b32.xlu0 %v1322, 127
      %v1351 = vpop.permute.xlu0 %1350
      %1352 = vrot.lane.b32.xlu0 %v1323, 127
      %v1353 = vpop.permute.xlu0 %1352
      %1354 = vrot.lane.b32.xlu0 %v1324, 127
      %v1355 = vpop.permute.xlu0 %1354
      %1356 = vrot.lane.b32.xlu0 %v1325, 127
      %v1357 = vpop.permute.xlu0 %1356
      %1358 = vrot.lane.b32.xlu0 %v1326, 127
      %v1359 = vpop.permute.xlu0 %1358
      %1360 = vrot.lane.b32.xlu0 %v1327, 127
      %v1361 = vpop.permute.xlu0 %1360
      %1362 = vrot.lane.b32.xlu0 %v1328, 127
      %v1363 = vpop.permute.xlu0 %1362
      %1364 = vrot.lane.b32.xlu0 %v1329, 127
      %v1365 = vpop.permute.xlu0 %1364
      %v1378 = vadd.f32 %v1251, %v1343
      %v1379 = vadd.f32 %v1252, %v1345
      %v1380 = vadd.f32 %v1253, %v1347
      %v1381 = vadd.f32 %v1254, %v1349
      %v1382 = vadd.f32 %v1255, %v1351
      %v1383 = vadd.f32 %v1256, %v1353
      %v1384 = vadd.f32 %v1257, %v1355
      %v1385 = vadd.f32 %v1258, %v1357
      %v1386 = vadd.f32 %v1259, %v1359
      %v1387 = vadd.f32 %v1260, %v1361
      %v1388 = vadd.f32 %v1261, %v1363
      %v1389 = vadd.f32 %v1262, %v1365
      %s1390 = scalar_lea.vmem %s1, 66
      %v1391 = vld [vmem:[%s1390] sm:$0x1]
      %v1392 = vld [vmem:[%s1390 + $0x1] sm:$0x1]
      %v1393 = vld [vmem:[%s1390 + $0x2] sm:$0x1]
      %v1394 = vld [vmem:[%s1390 + $0x3] sm:$0x1]
      %v1395 = vld [vmem:[%s1390 + $0x4] sm:$0x1]
      %v1396 = vld [vmem:[%s1390 + $0x5] sm:$0x1]
      %v1403 = vlaneseq
      %v1404 = vshrl.u32 %v1403, 7
      %v1405 = vsub.s32 0, %v1404
      %v1406 = vrot.slane %v1391, %v1405
      %v1407 = vlaneseq
      %v1408 = vshrl.u32 %v1407, 7
      %v1409 = vsub.s32 0, %v1408
      %v1410 = vrot.slane %v1392, %v1409
      %v1411 = vlaneseq
      %v1412 = vshrl.u32 %v1411, 7
      %v1413 = vsub.s32 0, %v1412
      %v1414 = vrot.slane %v1393, %v1413
      %v1415 = vlaneseq
      %v1416 = vshrl.u32 %v1415, 7
      %v1417 = vsub.s32 0, %v1416
      %v1418 = vrot.slane %v1394, %v1417
      %v1419 = vlaneseq
      %v1420 = vshrl.u32 %v1419, 7
      %v1421 = vsub.s32 0, %v1420
      %v1422 = vrot.slane %v1395, %v1421
      %v1423 = vlaneseq
      %v1424 = vshrl.u32 %v1423, 7
      %v1425 = vsub.s32 0, %v1424
      %v1426 = vrot.slane %v1396, %v1425
      %1427 = vrot.lane.b32.xlu0 %v1406, 2
      %v1428 = vpop.permute.xlu0 %1427
      %1429 = vrot.lane.b32.xlu0 %v1410, 2
      %v1430 = vpop.permute.xlu0 %1429
      %1431 = vrot.lane.b32.xlu0 %v1414, 2
      %v1432 = vpop.permute.xlu0 %1431
      %1433 = vrot.lane.b32.xlu0 %v1418, 2
      %v1434 = vpop.permute.xlu0 %1433
      %1435 = vrot.lane.b32.xlu0 %v1422, 2
      %v1436 = vpop.permute.xlu0 %1435
      %1437 = vrot.lane.b32.xlu0 %v1426, 2
      %v1438 = vpop.permute.xlu0 %1437
      %v1445 = vmul.f32 %v1194, %v1428
      %v1446 = vmul.f32 %v1195, %v1428
      %v1447 = vmul.f32 %v1194, %v1430
      %v1448 = vmul.f32 %v1195, %v1430
      %v1449 = vmul.f32 %v1194, %v1432
      %v1450 = vmul.f32 %v1195, %v1432
      %v1451 = vmul.f32 %v1194, %v1434
      %v1452 = vmul.f32 %v1195, %v1434
      %v1453 = vmul.f32 %v1194, %v1436
      %v1454 = vmul.f32 %v1195, %v1436
      %v1455 = vmul.f32 %v1194, %v1438
      %v1456 = vmul.f32 %v1195, %v1438
      %1469 = vrot.lane.b32.xlu0 %v1445, 126
      %v1470 = vpop.permute.xlu0 %1469
      %1471 = vrot.lane.b32.xlu0 %v1446, 126
      %v1472 = vpop.permute.xlu0 %1471
      %1473 = vrot.lane.b32.xlu0 %v1447, 126
      %v1474 = vpop.permute.xlu0 %1473
      %1475 = vrot.lane.b32.xlu0 %v1448, 126
      %v1476 = vpop.permute.xlu0 %1475
      %1477 = vrot.lane.b32.xlu0 %v1449, 126
      %v1478 = vpop.permute.xlu0 %1477
      %1479 = vrot.lane.b32.xlu0 %v1450, 126
      %v1480 = vpop.permute.xlu0 %1479
      %1481 = vrot.lane.b32.xlu0 %v1451, 126
      %v1482 = vpop.permute.xlu0 %1481
      %1483 = vrot.lane.b32.xlu0 %v1452, 126
      %v1484 = vpop.permute.xlu0 %1483
      %1485 = vrot.lane.b32.xlu0 %v1453, 126
      %v1486 = vpop.permute.xlu0 %1485
      %1487 = vrot.lane.b32.xlu0 %v1454, 126
      %v1488 = vpop.permute.xlu0 %1487
      %1489 = vrot.lane.b32.xlu0 %v1455, 126
      %v1490 = vpop.permute.xlu0 %1489
      %1491 = vrot.lane.b32.xlu0 %v1456, 126
      %v1492 = vpop.permute.xlu0 %1491
      %v1505 = vadd.f32 %v1378, %v1470
      %v1506 = vadd.f32 %v1379, %v1472
      %v1507 = vadd.f32 %v1380, %v1474
      %v1508 = vadd.f32 %v1381, %v1476
      %v1509 = vadd.f32 %v1382, %v1478
      %v1510 = vadd.f32 %v1383, %v1480
      %v1511 = vadd.f32 %v1384, %v1482
      %v1512 = vadd.f32 %v1385, %v1484
      %v1513 = vadd.f32 %v1386, %v1486
      %v1514 = vadd.f32 %v1387, %v1488
      %v1515 = vadd.f32 %v1388, %v1490
      %v1516 = vadd.f32 %v1389, %v1492
      %v1517 = vld [vmem:[%s1193 + $0x1] sm:$0xff]
      %v1518 = vld [vmem:[%s1193 + $0x9] sm:$0x3f]
      %s1519 = scalar_lea.vmem %s1, 72
      %v1520 = vld [vmem:[%s1519] sm:$0x1]
      %v1521 = vld [vmem:[%s1519 + $0x1] sm:$0x1]
      %v1522 = vld [vmem:[%s1519 + $0x2] sm:$0x1]
      %v1523 = vld [vmem:[%s1519 + $0x3] sm:$0x1]
      %v1524 = vld [vmem:[%s1519 + $0x4] sm:$0x1]
      %v1525 = vld [vmem:[%s1519 + $0x5] sm:$0x1]
      %v1532 = vlaneseq
      %v1533 = vshrl.u32 %v1532, 7
      %v1534 = vsub.s32 0, %v1533
      %v1535 = vrot.slane %v1520, %v1534
      %v1536 = vlaneseq
      %v1537 = vshrl.u32 %v1536, 7
      %v1538 = vsub.s32 0, %v1537
      %v1539 = vrot.slane %v1521, %v1538
      %v1540 = vlaneseq
      %v1541 = vshrl.u32 %v1540, 7
      %v1542 = vsub.s32 0, %v1541
      %v1543 = vrot.slane %v1522, %v1542
      %v1544 = vlaneseq
      %v1545 = vshrl.u32 %v1544, 7
      %v1546 = vsub.s32 0, %v1545
      %v1547 = vrot.slane %v1523, %v1546
      %v1548 = vlaneseq
      %v1549 = vshrl.u32 %v1548, 7
      %v1550 = vsub.s32 0, %v1549
      %v1551 = vrot.slane %v1524, %v1550
      %v1552 = vlaneseq
      %v1553 = vshrl.u32 %v1552, 7
      %v1554 = vsub.s32 0, %v1553
      %v1555 = vrot.slane %v1525, %v1554
      %v1562 = vmul.f32 %v1517, %v1535
      %v1563 = vmul.f32 %v1518, %v1535
      %v1564 = vmul.f32 %v1517, %v1539
      %v1565 = vmul.f32 %v1518, %v1539
      %v1566 = vmul.f32 %v1517, %v1543
      %v1567 = vmul.f32 %v1518, %v1543
      %v1568 = vmul.f32 %v1517, %v1547
      %v1569 = vmul.f32 %v1518, %v1547
      %v1570 = vmul.f32 %v1517, %v1551
      %v1571 = vmul.f32 %v1518, %v1551
      %v1572 = vmul.f32 %v1517, %v1555
      %v1573 = vmul.f32 %v1518, %v1555
      %v1574 = vadd.f32 %v1505, %v1562
      %v1575 = vadd.f32 %v1506, %v1563
      %v1576 = vadd.f32 %v1507, %v1564
      %v1577 = vadd.f32 %v1508, %v1565
      %v1578 = vadd.f32 %v1509, %v1566
      %v1579 = vadd.f32 %v1510, %v1567
      %v1580 = vadd.f32 %v1511, %v1568
      %v1581 = vadd.f32 %v1512, %v1569
      %v1582 = vadd.f32 %v1513, %v1570
      %v1583 = vadd.f32 %v1514, %v1571
      %v1584 = vadd.f32 %v1515, %v1572
      %v1585 = vadd.f32 %v1516, %v1573
      %s1586 = scalar_lea.vmem %s1, 78
      %v1587 = vld [vmem:[%s1586] sm:$0x1]
      %v1588 = vld [vmem:[%s1586 + $0x1] sm:$0x1]
      %v1589 = vld [vmem:[%s1586 + $0x2] sm:$0x1]
      %v1590 = vld [vmem:[%s1586 + $0x3] sm:$0x1]
      %v1591 = vld [vmem:[%s1586 + $0x4] sm:$0x1]
      %v1592 = vld [vmem:[%s1586 + $0x5] sm:$0x1]
      %v1599 = vlaneseq
      %v1600 = vshrl.u32 %v1599, 7
      %v1601 = vsub.s32 0, %v1600
      %v1602 = vrot.slane %v1587, %v1601
      %v1603 = vlaneseq
      %v1604 = vshrl.u32 %v1603, 7
      %v1605 = vsub.s32 0, %v1604
      %v1606 = vrot.slane %v1588, %v1605
      %v1607 = vlaneseq
      %v1608 = vshrl.u32 %v1607, 7
      %v1609 = vsub.s32 0, %v1608
      %v1610 = vrot.slane %v1589, %v1609
      %v1611 = vlaneseq
      %v1612 = vshrl.u32 %v1611, 7
      %v1613 = vsub.s32 0, %v1612
      %v1614 = vrot.slane %v1590, %v1613
      %v1615 = vlaneseq
      %v1616 = vshrl.u32 %v1615, 7
      %v1617 = vsub.s32 0, %v1616
      %v1618 = vrot.slane %v1591, %v1617
      %v1619 = vlaneseq
      %v1620 = vshrl.u32 %v1619, 7
      %v1621 = vsub.s32 0, %v1620
      %v1622 = vrot.slane %v1592, %v1621
      %1623 = vrot.lane.b32.xlu0 %v1602, 1
      %v1624 = vpop.permute.xlu0 %1623
      %1625 = vrot.lane.b32.xlu0 %v1606, 1
      %v1626 = vpop.permute.xlu0 %1625
      %1627 = vrot.lane.b32.xlu0 %v1610, 1
      %v1628 = vpop.permute.xlu0 %1627
      %1629 = vrot.lane.b32.xlu0 %v1614, 1
      %v1630 = vpop.permute.xlu0 %1629
      %1631 = vrot.lane.b32.xlu0 %v1618, 1
      %v1632 = vpop.permute.xlu0 %1631
      %1633 = vrot.lane.b32.xlu0 %v1622, 1
      %v1634 = vpop.permute.xlu0 %1633
      %v1641 = vmul.f32 %v1517, %v1624
      %v1642 = vmul.f32 %v1518, %v1624
      %v1643 = vmul.f32 %v1517, %v1626
      %v1644 = vmul.f32 %v1518, %v1626
      %v1645 = vmul.f32 %v1517, %v1628
      %v1646 = vmul.f32 %v1518, %v1628
      %v1647 = vmul.f32 %v1517, %v1630
      %v1648 = vmul.f32 %v1518, %v1630
      %v1649 = vmul.f32 %v1517, %v1632
      %v1650 = vmul.f32 %v1518, %v1632
      %v1651 = vmul.f32 %v1517, %v1634
      %v1652 = vmul.f32 %v1518, %v1634
      %1665 = vrot.lane.b32.xlu0 %v1641, 127
      %v1666 = vpop.permute.xlu0 %1665
      %1667 = vrot.lane.b32.xlu0 %v1642, 127
      %v1668 = vpop.permute.xlu0 %1667
      %1669 = vrot.lane.b32.xlu0 %v1643, 127
      %v1670 = vpop.permute.xlu0 %1669
      %1671 = vrot.lane.b32.xlu0 %v1644, 127
      %v1672 = vpop.permute.xlu0 %1671
      %1673 = vrot.lane.b32.xlu0 %v1645, 127
      %v1674 = vpop.permute.xlu0 %1673
      %1675 = vrot.lane.b32.xlu0 %v1646, 127
      %v1676 = vpop.permute.xlu0 %1675
      %1677 = vrot.lane.b32.xlu0 %v1647, 127
      %v1678 = vpop.permute.xlu0 %1677
      %1679 = vrot.lane.b32.xlu0 %v1648, 127
      %v1680 = vpop.permute.xlu0 %1679
      %1681 = vrot.lane.b32.xlu0 %v1649, 127
      %v1682 = vpop.permute.xlu0 %1681
      %1683 = vrot.lane.b32.xlu0 %v1650, 127
      %v1684 = vpop.permute.xlu0 %1683
      %1685 = vrot.lane.b32.xlu0 %v1651, 127
      %v1686 = vpop.permute.xlu0 %1685
      %1687 = vrot.lane.b32.xlu0 %v1652, 127
      %v1688 = vpop.permute.xlu0 %1687
      %v1701 = vadd.f32 %v1574, %v1666
      %v1702 = vadd.f32 %v1575, %v1668
      %v1703 = vadd.f32 %v1576, %v1670
      %v1704 = vadd.f32 %v1577, %v1672
      %v1705 = vadd.f32 %v1578, %v1674
      %v1706 = vadd.f32 %v1579, %v1676
      %v1707 = vadd.f32 %v1580, %v1678
      %v1708 = vadd.f32 %v1581, %v1680
      %v1709 = vadd.f32 %v1582, %v1682
      %v1710 = vadd.f32 %v1583, %v1684
      %v1711 = vadd.f32 %v1584, %v1686
      %v1712 = vadd.f32 %v1585, %v1688
      %s1713 = scalar_lea.vmem %s1, 84
      %v1714 = vld [vmem:[%s1713] sm:$0x1]
      %v1715 = vld [vmem:[%s1713 + $0x1] sm:$0x1]
      %v1716 = vld [vmem:[%s1713 + $0x2] sm:$0x1]
      %v1717 = vld [vmem:[%s1713 + $0x3] sm:$0x1]
      %v1718 = vld [vmem:[%s1713 + $0x4] sm:$0x1]
      %v1719 = vld [vmem:[%s1713 + $0x5] sm:$0x1]
      %v1726 = vlaneseq
      %v1727 = vshrl.u32 %v1726, 7
      %v1728 = vsub.s32 0, %v1727
      %v1729 = vrot.slane %v1714, %v1728
      %v1730 = vlaneseq
      %v1731 = vshrl.u32 %v1730, 7
      %v1732 = vsub.s32 0, %v1731
      %v1733 = vrot.slane %v1715, %v1732
      %v1734 = vlaneseq
      %v1735 = vshrl.u32 %v1734, 7
      %v1736 = vsub.s32 0, %v1735
      %v1737 = vrot.slane %v1716, %v1736
      %v1738 = vlaneseq
      %v1739 = vshrl.u32 %v1738, 7
      %v1740 = vsub.s32 0, %v1739
      %v1741 = vrot.slane %v1717, %v1740
      %v1742 = vlaneseq
      %v1743 = vshrl.u32 %v1742, 7
      %v1744 = vsub.s32 0, %v1743
      %v1745 = vrot.slane %v1718, %v1744
      %v1746 = vlaneseq
      %v1747 = vshrl.u32 %v1746, 7
      %v1748 = vsub.s32 0, %v1747
      %v1749 = vrot.slane %v1719, %v1748
      %1750 = vrot.lane.b32.xlu0 %v1729, 2
      %v1751 = vpop.permute.xlu0 %1750
      %1752 = vrot.lane.b32.xlu0 %v1733, 2
      %v1753 = vpop.permute.xlu0 %1752
      %1754 = vrot.lane.b32.xlu0 %v1737, 2
      %v1755 = vpop.permute.xlu0 %1754
      %1756 = vrot.lane.b32.xlu0 %v1741, 2
      %v1757 = vpop.permute.xlu0 %1756
      %1758 = vrot.lane.b32.xlu0 %v1745, 2
      %v1759 = vpop.permute.xlu0 %1758
      %1760 = vrot.lane.b32.xlu0 %v1749, 2
      %v1761 = vpop.permute.xlu0 %1760
      %v1768 = vmul.f32 %v1517, %v1751
      %v1769 = vmul.f32 %v1518, %v1751
      %v1770 = vmul.f32 %v1517, %v1753
      %v1771 = vmul.f32 %v1518, %v1753
      %v1772 = vmul.f32 %v1517, %v1755
      %v1773 = vmul.f32 %v1518, %v1755
      %v1774 = vmul.f32 %v1517, %v1757
      %v1775 = vmul.f32 %v1518, %v1757
      %v1776 = vmul.f32 %v1517, %v1759
      %v1777 = vmul.f32 %v1518, %v1759
      %v1778 = vmul.f32 %v1517, %v1761
      %v1779 = vmul.f32 %v1518, %v1761
      %1792 = vrot.lane.b32.xlu0 %v1768, 126
      %v1793 = vpop.permute.xlu0 %1792
      %1794 = vrot.lane.b32.xlu0 %v1769, 126
      %v1795 = vpop.permute.xlu0 %1794
      %1796 = vrot.lane.b32.xlu0 %v1770, 126
      %v1797 = vpop.permute.xlu0 %1796
      %1798 = vrot.lane.b32.xlu0 %v1771, 126
      %v1799 = vpop.permute.xlu0 %1798
      %1800 = vrot.lane.b32.xlu0 %v1772, 126
      %v1801 = vpop.permute.xlu0 %1800
      %1802 = vrot.lane.b32.xlu0 %v1773, 126
      %v1803 = vpop.permute.xlu0 %1802
      %1804 = vrot.lane.b32.xlu0 %v1774, 126
      %v1805 = vpop.permute.xlu0 %1804
      %1806 = vrot.lane.b32.xlu0 %v1775, 126
      %v1807 = vpop.permute.xlu0 %1806
      %1808 = vrot.lane.b32.xlu0 %v1776, 126
      %v1809 = vpop.permute.xlu0 %1808
      %1810 = vrot.lane.b32.xlu0 %v1777, 126
      %v1811 = vpop.permute.xlu0 %1810
      %1812 = vrot.lane.b32.xlu0 %v1778, 126
      %v1813 = vpop.permute.xlu0 %1812
      %1814 = vrot.lane.b32.xlu0 %v1779, 126
      %v1815 = vpop.permute.xlu0 %1814
      %v1828 = vadd.f32 %v1701, %v1793
      %v1829 = vadd.f32 %v1702, %v1795
      %v1830 = vadd.f32 %v1703, %v1797
      %v1831 = vadd.f32 %v1704, %v1799
      %v1832 = vadd.f32 %v1705, %v1801
      %v1833 = vadd.f32 %v1706, %v1803
      %v1834 = vadd.f32 %v1707, %v1805
      %v1835 = vadd.f32 %v1708, %v1807
      %v1836 = vadd.f32 %v1709, %v1809
      %v1837 = vadd.f32 %v1710, %v1811
      %v1838 = vadd.f32 %v1711, %v1813
      %v1839 = vadd.f32 %v1712, %v1815
      %v1840 = vld [vmem:[%s1193 + $0x2] sm:$0xff]
      %v1841 = vld [vmem:[%s1193 + $0xa] sm:$0x3f]
      %s1842 = scalar_lea.vmem %s1, 90
      %v1843 = vld [vmem:[%s1842] sm:$0x1]
      %v1844 = vld [vmem:[%s1842 + $0x1] sm:$0x1]
      %v1845 = vld [vmem:[%s1842 + $0x2] sm:$0x1]
      %v1846 = vld [vmem:[%s1842 + $0x3] sm:$0x1]
      %v1847 = vld [vmem:[%s1842 + $0x4] sm:$0x1]
      %v1848 = vld [vmem:[%s1842 + $0x5] sm:$0x1]
      %v1855 = vlaneseq
      %v1856 = vshrl.u32 %v1855, 7
      %v1857 = vsub.s32 0, %v1856
      %v1858 = vrot.slane %v1843, %v1857
      %v1859 = vlaneseq
      %v1860 = vshrl.u32 %v1859, 7
      %v1861 = vsub.s32 0, %v1860
      %v1862 = vrot.slane %v1844, %v1861
      %v1863 = vlaneseq
      %v1864 = vshrl.u32 %v1863, 7
      %v1865 = vsub.s32 0, %v1864
      %v1866 = vrot.slane %v1845, %v1865
      %v1867 = vlaneseq
      %v1868 = vshrl.u32 %v1867, 7
      %v1869 = vsub.s32 0, %v1868
      %v1870 = vrot.slane %v1846, %v1869
      %v1871 = vlaneseq
      %v1872 = vshrl.u32 %v1871, 7
      %v1873 = vsub.s32 0, %v1872
      %v1874 = vrot.slane %v1847, %v1873
      %v1875 = vlaneseq
      %v1876 = vshrl.u32 %v1875, 7
      %v1877 = vsub.s32 0, %v1876
      %v1878 = vrot.slane %v1848, %v1877
      %v1885 = vmul.f32 %v1840, %v1858
      %v1886 = vmul.f32 %v1841, %v1858
      %v1887 = vmul.f32 %v1840, %v1862
      %v1888 = vmul.f32 %v1841, %v1862
      %v1889 = vmul.f32 %v1840, %v1866
      %v1890 = vmul.f32 %v1841, %v1866
      %v1891 = vmul.f32 %v1840, %v1870
      %v1892 = vmul.f32 %v1841, %v1870
      %v1893 = vmul.f32 %v1840, %v1874
      %v1894 = vmul.f32 %v1841, %v1874
      %v1895 = vmul.f32 %v1840, %v1878
      %v1896 = vmul.f32 %v1841, %v1878
      %v1897 = vadd.f32 %v1828, %v1885
      %v1898 = vadd.f32 %v1829, %v1886
      %v1899 = vadd.f32 %v1830, %v1887
      %v1900 = vadd.f32 %v1831, %v1888
      %v1901 = vadd.f32 %v1832, %v1889
      %v1902 = vadd.f32 %v1833, %v1890
      %v1903 = vadd.f32 %v1834, %v1891
      %v1904 = vadd.f32 %v1835, %v1892
      %v1905 = vadd.f32 %v1836, %v1893
      %v1906 = vadd.f32 %v1837, %v1894
      %v1907 = vadd.f32 %v1838, %v1895
      %v1908 = vadd.f32 %v1839, %v1896
      %s1909 = scalar_lea.vmem %s1, 96
      %v1910 = vld [vmem:[%s1909] sm:$0x1]
      %v1911 = vld [vmem:[%s1909 + $0x1] sm:$0x1]
      %v1912 = vld [vmem:[%s1909 + $0x2] sm:$0x1]
      %v1913 = vld [vmem:[%s1909 + $0x3] sm:$0x1]
      %v1914 = vld [vmem:[%s1909 + $0x4] sm:$0x1]
      %v1915 = vld [vmem:[%s1909 + $0x5] sm:$0x1]
      %v1922 = vlaneseq
      %v1923 = vshrl.u32 %v1922, 7
      %v1924 = vsub.s32 0, %v1923
      %v1925 = vrot.slane %v1910, %v1924
      %v1926 = vlaneseq
      %v1927 = vshrl.u32 %v1926, 7
      %v1928 = vsub.s32 0, %v1927
      %v1929 = vrot.slane %v1911, %v1928
      %v1930 = vlaneseq
      %v1931 = vshrl.u32 %v1930, 7
      %v1932 = vsub.s32 0, %v1931
      %v1933 = vrot.slane %v1912, %v1932
      %v1934 = vlaneseq
      %v1935 = vshrl.u32 %v1934, 7
      %v1936 = vsub.s32 0, %v1935
      %v1937 = vrot.slane %v1913, %v1936
      %v1938 = vlaneseq
      %v1939 = vshrl.u32 %v1938, 7
      %v1940 = vsub.s32 0, %v1939
      %v1941 = vrot.slane %v1914, %v1940
      %v1942 = vlaneseq
      %v1943 = vshrl.u32 %v1942, 7
      %v1944 = vsub.s32 0, %v1943
      %v1945 = vrot.slane %v1915, %v1944
      %1946 = vrot.lane.b32.xlu0 %v1925, 1
      %v1947 = vpop.permute.xlu0 %1946
      %1948 = vrot.lane.b32.xlu0 %v1929, 1
      %v1949 = vpop.permute.xlu0 %1948
      %1950 = vrot.lane.b32.xlu0 %v1933, 1
      %v1951 = vpop.permute.xlu0 %1950
      %1952 = vrot.lane.b32.xlu0 %v1937, 1
      %v1953 = vpop.permute.xlu0 %1952
      %1954 = vrot.lane.b32.xlu0 %v1941, 1
      %v1955 = vpop.permute.xlu0 %1954
      %1956 = vrot.lane.b32.xlu0 %v1945, 1
      %v1957 = vpop.permute.xlu0 %1956
      %v1964 = vmul.f32 %v1840, %v1947
      %v1965 = vmul.f32 %v1841, %v1947
      %v1966 = vmul.f32 %v1840, %v1949
      %v1967 = vmul.f32 %v1841, %v1949
      %v1968 = vmul.f32 %v1840, %v1951
      %v1969 = vmul.f32 %v1841, %v1951
      %v1970 = vmul.f32 %v1840, %v1953
      %v1971 = vmul.f32 %v1841, %v1953
      %v1972 = vmul.f32 %v1840, %v1955
      %v1973 = vmul.f32 %v1841, %v1955
      %v1974 = vmul.f32 %v1840, %v1957
      %v1975 = vmul.f32 %v1841, %v1957
      %1988 = vrot.lane.b32.xlu0 %v1964, 127
      %v1989 = vpop.permute.xlu0 %1988
      %1990 = vrot.lane.b32.xlu0 %v1965, 127
      %v1991 = vpop.permute.xlu0 %1990
      %1992 = vrot.lane.b32.xlu0 %v1966, 127
      %v1993 = vpop.permute.xlu0 %1992
      %1994 = vrot.lane.b32.xlu0 %v1967, 127
      %v1995 = vpop.permute.xlu0 %1994
      %1996 = vrot.lane.b32.xlu0 %v1968, 127
      %v1997 = vpop.permute.xlu0 %1996
      %1998 = vrot.lane.b32.xlu0 %v1969, 127
      %v1999 = vpop.permute.xlu0 %1998
      %2000 = vrot.lane.b32.xlu0 %v1970, 127
      %v2001 = vpop.permute.xlu0 %2000
      %2002 = vrot.lane.b32.xlu0 %v1971, 127
      %v2003 = vpop.permute.xlu0 %2002
      %2004 = vrot.lane.b32.xlu0 %v1972, 127
      %v2005 = vpop.permute.xlu0 %2004
      %2006 = vrot.lane.b32.xlu0 %v1973, 127
      %v2007 = vpop.permute.xlu0 %2006
      %2008 = vrot.lane.b32.xlu0 %v1974, 127
      %v2009 = vpop.permute.xlu0 %2008
      %2010 = vrot.lane.b32.xlu0 %v1975, 127
      %v2011 = vpop.permute.xlu0 %2010
      %v2024 = vadd.f32 %v1897, %v1989
      %v2025 = vadd.f32 %v1898, %v1991
      %v2026 = vadd.f32 %v1899, %v1993
      %v2027 = vadd.f32 %v1900, %v1995
      %v2028 = vadd.f32 %v1901, %v1997
      %v2029 = vadd.f32 %v1902, %v1999
      %v2030 = vadd.f32 %v1903, %v2001
      %v2031 = vadd.f32 %v1904, %v2003
      %v2032 = vadd.f32 %v1905, %v2005
      %v2033 = vadd.f32 %v1906, %v2007
      %v2034 = vadd.f32 %v1907, %v2009
      %v2035 = vadd.f32 %v1908, %v2011
      %s2036 = scalar_lea.vmem %s1, 102
      %v2037 = vld [vmem:[%s2036] sm:$0x1]
      %v2038 = vld [vmem:[%s2036 + $0x1] sm:$0x1]
      %v2039 = vld [vmem:[%s2036 + $0x2] sm:$0x1]
      %v2040 = vld [vmem:[%s2036 + $0x3] sm:$0x1]
      %v2041 = vld [vmem:[%s2036 + $0x4] sm:$0x1]
      %v2042 = vld [vmem:[%s2036 + $0x5] sm:$0x1]
      %v2049 = vlaneseq
      %v2050 = vshrl.u32 %v2049, 7
      %v2051 = vsub.s32 0, %v2050
      %v2052 = vrot.slane %v2037, %v2051
      %v2053 = vlaneseq
      %v2054 = vshrl.u32 %v2053, 7
      %v2055 = vsub.s32 0, %v2054
      %v2056 = vrot.slane %v2038, %v2055
      %v2057 = vlaneseq
      %v2058 = vshrl.u32 %v2057, 7
      %v2059 = vsub.s32 0, %v2058
      %v2060 = vrot.slane %v2039, %v2059
      %v2061 = vlaneseq
      %v2062 = vshrl.u32 %v2061, 7
      %v2063 = vsub.s32 0, %v2062
      %v2064 = vrot.slane %v2040, %v2063
      %v2065 = vlaneseq
      %v2066 = vshrl.u32 %v2065, 7
      %v2067 = vsub.s32 0, %v2066
      %v2068 = vrot.slane %v2041, %v2067
      %v2069 = vlaneseq
      %v2070 = vshrl.u32 %v2069, 7
      %v2071 = vsub.s32 0, %v2070
      %v2072 = vrot.slane %v2042, %v2071
      %2073 = vrot.lane.b32.xlu0 %v2052, 2
      %v2074 = vpop.permute.xlu0 %2073
      %2075 = vrot.lane.b32.xlu0 %v2056, 2
      %v2076 = vpop.permute.xlu0 %2075
      %2077 = vrot.lane.b32.xlu0 %v2060, 2
      %v2078 = vpop.permute.xlu0 %2077
      %2079 = vrot.lane.b32.xlu0 %v2064, 2
      %v2080 = vpop.permute.xlu0 %2079
      %2081 = vrot.lane.b32.xlu0 %v2068, 2
      %v2082 = vpop.permute.xlu0 %2081
      %2083 = vrot.lane.b32.xlu0 %v2072, 2
      %v2084 = vpop.permute.xlu0 %2083
      %v2091 = vmul.f32 %v1840, %v2074
      %v2092 = vmul.f32 %v1841, %v2074
      %v2093 = vmul.f32 %v1840, %v2076
      %v2094 = vmul.f32 %v1841, %v2076
      %v2095 = vmul.f32 %v1840, %v2078
      %v2096 = vmul.f32 %v1841, %v2078
      %v2097 = vmul.f32 %v1840, %v2080
      %v2098 = vmul.f32 %v1841, %v2080
      %v2099 = vmul.f32 %v1840, %v2082
      %v2100 = vmul.f32 %v1841, %v2082
      %v2101 = vmul.f32 %v1840, %v2084
      %v2102 = vmul.f32 %v1841, %v2084
      %2115 = vrot.lane.b32.xlu0 %v2091, 126
      %v2116 = vpop.permute.xlu0 %2115
      %2117 = vrot.lane.b32.xlu0 %v2092, 126
      %v2118 = vpop.permute.xlu0 %2117
      %2119 = vrot.lane.b32.xlu0 %v2093, 126
      %v2120 = vpop.permute.xlu0 %2119
      %2121 = vrot.lane.b32.xlu0 %v2094, 126
      %v2122 = vpop.permute.xlu0 %2121
      %2123 = vrot.lane.b32.xlu0 %v2095, 126
      %v2124 = vpop.permute.xlu0 %2123
      %2125 = vrot.lane.b32.xlu0 %v2096, 126
      %v2126 = vpop.permute.xlu0 %2125
      %2127 = vrot.lane.b32.xlu0 %v2097, 126
      %v2128 = vpop.permute.xlu0 %2127
      %2129 = vrot.lane.b32.xlu0 %v2098, 126
      %v2130 = vpop.permute.xlu0 %2129
      %2131 = vrot.lane.b32.xlu0 %v2099, 126
      %v2132 = vpop.permute.xlu0 %2131
      %2133 = vrot.lane.b32.xlu0 %v2100, 126
      %v2134 = vpop.permute.xlu0 %2133
      %2135 = vrot.lane.b32.xlu0 %v2101, 126
      %v2136 = vpop.permute.xlu0 %2135
      %2137 = vrot.lane.b32.xlu0 %v2102, 126
      %v2138 = vpop.permute.xlu0 %2137
      %v2151 = vadd.f32 %v2024, %v2116
      %v2152 = vadd.f32 %v2025, %v2118
      %v2153 = vadd.f32 %v2026, %v2120
      %v2154 = vadd.f32 %v2027, %v2122
      %v2155 = vadd.f32 %v2028, %v2124
      %v2156 = vadd.f32 %v2029, %v2126
      %v2157 = vadd.f32 %v2030, %v2128
      %v2158 = vadd.f32 %v2031, %v2130
      %v2159 = vadd.f32 %v2032, %v2132
      %v2160 = vadd.f32 %v2033, %v2134
      %v2161 = vadd.f32 %v2034, %v2136
      %v2162 = vadd.f32 %v2035, %v2138
      %s2163 = scalar_lea.vmem %s219, 32
      %v2164 = vld [vmem:[%s2163] sm:$0xff]
      %v2165 = vld [vmem:[%s2163 + $0x8] sm:$0x3f]
      %s2166 = scalar_lea.vmem %s1, 108
      %v2167 = vld [vmem:[%s2166] sm:$0x1]
      %v2168 = vld [vmem:[%s2166 + $0x1] sm:$0x1]
      %v2169 = vld [vmem:[%s2166 + $0x2] sm:$0x1]
      %v2170 = vld [vmem:[%s2166 + $0x3] sm:$0x1]
      %v2171 = vld [vmem:[%s2166 + $0x4] sm:$0x1]
      %v2172 = vld [vmem:[%s2166 + $0x5] sm:$0x1]
      %v2179 = vlaneseq
      %v2180 = vshrl.u32 %v2179, 7
      %v2181 = vsub.s32 0, %v2180
      %v2182 = vrot.slane %v2167, %v2181
      %v2183 = vlaneseq
      %v2184 = vshrl.u32 %v2183, 7
      %v2185 = vsub.s32 0, %v2184
      %v2186 = vrot.slane %v2168, %v2185
      %v2187 = vlaneseq
      %v2188 = vshrl.u32 %v2187, 7
      %v2189 = vsub.s32 0, %v2188
      %v2190 = vrot.slane %v2169, %v2189
      %v2191 = vlaneseq
      %v2192 = vshrl.u32 %v2191, 7
      %v2193 = vsub.s32 0, %v2192
      %v2194 = vrot.slane %v2170, %v2193
      %v2195 = vlaneseq
      %v2196 = vshrl.u32 %v2195, 7
      %v2197 = vsub.s32 0, %v2196
      %v2198 = vrot.slane %v2171, %v2197
      %v2199 = vlaneseq
      %v2200 = vshrl.u32 %v2199, 7
      %v2201 = vsub.s32 0, %v2200
      %v2202 = vrot.slane %v2172, %v2201
      %v2209 = vmul.f32 %v2164, %v2182
      %v2210 = vmul.f32 %v2165, %v2182
      %v2211 = vmul.f32 %v2164, %v2186
      %v2212 = vmul.f32 %v2165, %v2186
      %v2213 = vmul.f32 %v2164, %v2190
      %v2214 = vmul.f32 %v2165, %v2190
      %v2215 = vmul.f32 %v2164, %v2194
      %v2216 = vmul.f32 %v2165, %v2194
      %v2217 = vmul.f32 %v2164, %v2198
      %v2218 = vmul.f32 %v2165, %v2198
      %v2219 = vmul.f32 %v2164, %v2202
      %v2220 = vmul.f32 %v2165, %v2202
      %v2221 = vadd.f32 %v2151, %v2209
      %v2222 = vadd.f32 %v2152, %v2210
      %v2223 = vadd.f32 %v2153, %v2211
      %v2224 = vadd.f32 %v2154, %v2212
      %v2225 = vadd.f32 %v2155, %v2213
      %v2226 = vadd.f32 %v2156, %v2214
      %v2227 = vadd.f32 %v2157, %v2215
      %v2228 = vadd.f32 %v2158, %v2216
      %v2229 = vadd.f32 %v2159, %v2217
      %v2230 = vadd.f32 %v2160, %v2218
      %v2231 = vadd.f32 %v2161, %v2219
      %v2232 = vadd.f32 %v2162, %v2220
      %s2233 = scalar_lea.vmem %s1, 114
      %v2234 = vld [vmem:[%s2233] sm:$0x1]
      %v2235 = vld [vmem:[%s2233 + $0x1] sm:$0x1]
      %v2236 = vld [vmem:[%s2233 + $0x2] sm:$0x1]
      %v2237 = vld [vmem:[%s2233 + $0x3] sm:$0x1]
      %v2238 = vld [vmem:[%s2233 + $0x4] sm:$0x1]
      %v2239 = vld [vmem:[%s2233 + $0x5] sm:$0x1]
      %v2246 = vlaneseq
      %v2247 = vshrl.u32 %v2246, 7
      %v2248 = vsub.s32 0, %v2247
      %v2249 = vrot.slane %v2234, %v2248
      %v2250 = vlaneseq
      %v2251 = vshrl.u32 %v2250, 7
      %v2252 = vsub.s32 0, %v2251
      %v2253 = vrot.slane %v2235, %v2252
      %v2254 = vlaneseq
      %v2255 = vshrl.u32 %v2254, 7
      %v2256 = vsub.s32 0, %v2255
      %v2257 = vrot.slane %v2236, %v2256
      %v2258 = vlaneseq
      %v2259 = vshrl.u32 %v2258, 7
      %v2260 = vsub.s32 0, %v2259
      %v2261 = vrot.slane %v2237, %v2260
      %v2262 = vlaneseq
      %v2263 = vshrl.u32 %v2262, 7
      %v2264 = vsub.s32 0, %v2263
      %v2265 = vrot.slane %v2238, %v2264
      %v2266 = vlaneseq
      %v2267 = vshrl.u32 %v2266, 7
      %v2268 = vsub.s32 0, %v2267
      %v2269 = vrot.slane %v2239, %v2268
      %2270 = vrot.lane.b32.xlu0 %v2249, 1
      %v2271 = vpop.permute.xlu0 %2270
      %2272 = vrot.lane.b32.xlu0 %v2253, 1
      %v2273 = vpop.permute.xlu0 %2272
      %2274 = vrot.lane.b32.xlu0 %v2257, 1
      %v2275 = vpop.permute.xlu0 %2274
      %2276 = vrot.lane.b32.xlu0 %v2261, 1
      %v2277 = vpop.permute.xlu0 %2276
      %2278 = vrot.lane.b32.xlu0 %v2265, 1
      %v2279 = vpop.permute.xlu0 %2278
      %2280 = vrot.lane.b32.xlu0 %v2269, 1
      %v2281 = vpop.permute.xlu0 %2280
      %v2288 = vmul.f32 %v2164, %v2271
      %v2289 = vmul.f32 %v2165, %v2271
      %v2290 = vmul.f32 %v2164, %v2273
      %v2291 = vmul.f32 %v2165, %v2273
      %v2292 = vmul.f32 %v2164, %v2275
      %v2293 = vmul.f32 %v2165, %v2275
      %v2294 = vmul.f32 %v2164, %v2277
      %v2295 = vmul.f32 %v2165, %v2277
      %v2296 = vmul.f32 %v2164, %v2279
      %v2297 = vmul.f32 %v2165, %v2279
      %v2298 = vmul.f32 %v2164, %v2281
      %v2299 = vmul.f32 %v2165, %v2281
      %2312 = vrot.lane.b32.xlu0 %v2288, 127
      %v2313 = vpop.permute.xlu0 %2312
      %2314 = vrot.lane.b32.xlu0 %v2289, 127
      %v2315 = vpop.permute.xlu0 %2314
      %2316 = vrot.lane.b32.xlu0 %v2290, 127
      %v2317 = vpop.permute.xlu0 %2316
      %2318 = vrot.lane.b32.xlu0 %v2291, 127
      %v2319 = vpop.permute.xlu0 %2318
      %2320 = vrot.lane.b32.xlu0 %v2292, 127
      %v2321 = vpop.permute.xlu0 %2320
      %2322 = vrot.lane.b32.xlu0 %v2293, 127
      %v2323 = vpop.permute.xlu0 %2322
      %2324 = vrot.lane.b32.xlu0 %v2294, 127
      %v2325 = vpop.permute.xlu0 %2324
      %2326 = vrot.lane.b32.xlu0 %v2295, 127
      %v2327 = vpop.permute.xlu0 %2326
      %2328 = vrot.lane.b32.xlu0 %v2296, 127
      %v2329 = vpop.permute.xlu0 %2328
      %2330 = vrot.lane.b32.xlu0 %v2297, 127
      %v2331 = vpop.permute.xlu0 %2330
      %2332 = vrot.lane.b32.xlu0 %v2298, 127
      %v2333 = vpop.permute.xlu0 %2332
      %2334 = vrot.lane.b32.xlu0 %v2299, 127
      %v2335 = vpop.permute.xlu0 %2334
      %v2348 = vadd.f32 %v2221, %v2313
      %v2349 = vadd.f32 %v2222, %v2315
      %v2350 = vadd.f32 %v2223, %v2317
      %v2351 = vadd.f32 %v2224, %v2319
      %v2352 = vadd.f32 %v2225, %v2321
      %v2353 = vadd.f32 %v2226, %v2323
      %v2354 = vadd.f32 %v2227, %v2325
      %v2355 = vadd.f32 %v2228, %v2327
      %v2356 = vadd.f32 %v2229, %v2329
      %v2357 = vadd.f32 %v2230, %v2331
      %v2358 = vadd.f32 %v2231, %v2333
      %v2359 = vadd.f32 %v2232, %v2335
      %s2360 = scalar_lea.vmem %s1, 120
      %v2361 = vld [vmem:[%s2360] sm:$0x1]
      %v2362 = vld [vmem:[%s2360 + $0x1] sm:$0x1]
      %v2363 = vld [vmem:[%s2360 + $0x2] sm:$0x1]
      %v2364 = vld [vmem:[%s2360 + $0x3] sm:$0x1]
      %v2365 = vld [vmem:[%s2360 + $0x4] sm:$0x1]
      %v2366 = vld [vmem:[%s2360 + $0x5] sm:$0x1]
      %v2373 = vlaneseq
      %v2374 = vshrl.u32 %v2373, 7
      %v2375 = vsub.s32 0, %v2374
      %v2376 = vrot.slane %v2361, %v2375
      %v2377 = vlaneseq
      %v2378 = vshrl.u32 %v2377, 7
      %v2379 = vsub.s32 0, %v2378
      %v2380 = vrot.slane %v2362, %v2379
      %v2381 = vlaneseq
      %v2382 = vshrl.u32 %v2381, 7
      %v2383 = vsub.s32 0, %v2382
      %v2384 = vrot.slane %v2363, %v2383
      %v2385 = vlaneseq
      %v2386 = vshrl.u32 %v2385, 7
      %v2387 = vsub.s32 0, %v2386
      %v2388 = vrot.slane %v2364, %v2387
      %v2389 = vlaneseq
      %v2390 = vshrl.u32 %v2389, 7
      %v2391 = vsub.s32 0, %v2390
      %v2392 = vrot.slane %v2365, %v2391
      %v2393 = vlaneseq
      %v2394 = vshrl.u32 %v2393, 7
      %v2395 = vsub.s32 0, %v2394
      %v2396 = vrot.slane %v2366, %v2395
      %2397 = vrot.lane.b32.xlu0 %v2376, 2
      %v2398 = vpop.permute.xlu0 %2397
      %2399 = vrot.lane.b32.xlu0 %v2380, 2
      %v2400 = vpop.permute.xlu0 %2399
      %2401 = vrot.lane.b32.xlu0 %v2384, 2
      %v2402 = vpop.permute.xlu0 %2401
      %2403 = vrot.lane.b32.xlu0 %v2388, 2
      %v2404 = vpop.permute.xlu0 %2403
      %2405 = vrot.lane.b32.xlu0 %v2392, 2
      %v2406 = vpop.permute.xlu0 %2405
      %2407 = vrot.lane.b32.xlu0 %v2396, 2
      %v2408 = vpop.permute.xlu0 %2407
      %v2415 = vmul.f32 %v2164, %v2398
      %v2416 = vmul.f32 %v2165, %v2398
      %v2417 = vmul.f32 %v2164, %v2400
      %v2418 = vmul.f32 %v2165, %v2400
      %v2419 = vmul.f32 %v2164, %v2402
      %v2420 = vmul.f32 %v2165, %v2402
      %v2421 = vmul.f32 %v2164, %v2404
      %v2422 = vmul.f32 %v2165, %v2404
      %v2423 = vmul.f32 %v2164, %v2406
      %v2424 = vmul.f32 %v2165, %v2406
      %v2425 = vmul.f32 %v2164, %v2408
      %v2426 = vmul.f32 %v2165, %v2408
      %2439 = vrot.lane.b32.xlu0 %v2415, 126
      %v2440 = vpop.permute.xlu0 %2439
      %2441 = vrot.lane.b32.xlu0 %v2416, 126
      %v2442 = vpop.permute.xlu0 %2441
      %2443 = vrot.lane.b32.xlu0 %v2417, 126
      %v2444 = vpop.permute.xlu0 %2443
      %2445 = vrot.lane.b32.xlu0 %v2418, 126
      %v2446 = vpop.permute.xlu0 %2445
      %2447 = vrot.lane.b32.xlu0 %v2419, 126
      %v2448 = vpop.permute.xlu0 %2447
      %2449 = vrot.lane.b32.xlu0 %v2420, 126
      %v2450 = vpop.permute.xlu0 %2449
      %2451 = vrot.lane.b32.xlu0 %v2421, 126
      %v2452 = vpop.permute.xlu0 %2451
      %2453 = vrot.lane.b32.xlu0 %v2422, 126
      %v2454 = vpop.permute.xlu0 %2453
      %2455 = vrot.lane.b32.xlu0 %v2423, 126
      %v2456 = vpop.permute.xlu0 %2455
      %2457 = vrot.lane.b32.xlu0 %v2424, 126
      %v2458 = vpop.permute.xlu0 %2457
      %2459 = vrot.lane.b32.xlu0 %v2425, 126
      %v2460 = vpop.permute.xlu0 %2459
      %2461 = vrot.lane.b32.xlu0 %v2426, 126
      %v2462 = vpop.permute.xlu0 %2461
      %v2475 = vadd.f32 %v2348, %v2440
      %v2476 = vadd.f32 %v2349, %v2442
      %v2477 = vadd.f32 %v2350, %v2444
      %v2478 = vadd.f32 %v2351, %v2446
      %v2479 = vadd.f32 %v2352, %v2448
      %v2480 = vadd.f32 %v2353, %v2450
      %v2481 = vadd.f32 %v2354, %v2452
      %v2482 = vadd.f32 %v2355, %v2454
      %v2483 = vadd.f32 %v2356, %v2456
      %v2484 = vadd.f32 %v2357, %v2458
      %v2485 = vadd.f32 %v2358, %v2460
      %v2486 = vadd.f32 %v2359, %v2462
      %v2487 = vld [vmem:[%s2163 + $0x1] sm:$0xff]
      %v2488 = vld [vmem:[%s2163 + $0x9] sm:$0x3f]
      %s2489 = scalar_lea.vmem %s1, 126
      %v2490 = vld [vmem:[%s2489] sm:$0x1]
      %v2491 = vld [vmem:[%s2489 + $0x1] sm:$0x1]
      %v2492 = vld [vmem:[%s2489 + $0x2] sm:$0x1]
      %v2493 = vld [vmem:[%s2489 + $0x3] sm:$0x1]
      %v2494 = vld [vmem:[%s2489 + $0x4] sm:$0x1]
      %v2495 = vld [vmem:[%s2489 + $0x5] sm:$0x1]
      %v2502 = vlaneseq
      %v2503 = vshrl.u32 %v2502, 7
      %v2504 = vsub.s32 0, %v2503
      %v2505 = vrot.slane %v2490, %v2504
      %v2506 = vlaneseq
      %v2507 = vshrl.u32 %v2506, 7
      %v2508 = vsub.s32 0, %v2507
      %v2509 = vrot.slane %v2491, %v2508
      %v2510 = vlaneseq
      %v2511 = vshrl.u32 %v2510, 7
      %v2512 = vsub.s32 0, %v2511
      %v2513 = vrot.slane %v2492, %v2512
      %v2514 = vlaneseq
      %v2515 = vshrl.u32 %v2514, 7
      %v2516 = vsub.s32 0, %v2515
      %v2517 = vrot.slane %v2493, %v2516
      %v2518 = vlaneseq
      %v2519 = vshrl.u32 %v2518, 7
      %v2520 = vsub.s32 0, %v2519
      %v2521 = vrot.slane %v2494, %v2520
      %v2522 = vlaneseq
      %v2523 = vshrl.u32 %v2522, 7
      %v2524 = vsub.s32 0, %v2523
      %v2525 = vrot.slane %v2495, %v2524
      %v2532 = vmul.f32 %v2487, %v2505
      %v2533 = vmul.f32 %v2488, %v2505
      %v2534 = vmul.f32 %v2487, %v2509
      %v2535 = vmul.f32 %v2488, %v2509
      %v2536 = vmul.f32 %v2487, %v2513
      %v2537 = vmul.f32 %v2488, %v2513
      %v2538 = vmul.f32 %v2487, %v2517
      %v2539 = vmul.f32 %v2488, %v2517
      %v2540 = vmul.f32 %v2487, %v2521
      %v2541 = vmul.f32 %v2488, %v2521
      %v2542 = vmul.f32 %v2487, %v2525
      %v2543 = vmul.f32 %v2488, %v2525
      %v2544 = vadd.f32 %v2475, %v2532
      %v2545 = vadd.f32 %v2476, %v2533
      %v2546 = vadd.f32 %v2477, %v2534
      %v2547 = vadd.f32 %v2478, %v2535
      %v2548 = vadd.f32 %v2479, %v2536
      %v2549 = vadd.f32 %v2480, %v2537
      %v2550 = vadd.f32 %v2481, %v2538
      %v2551 = vadd.f32 %v2482, %v2539
      %v2552 = vadd.f32 %v2483, %v2540
      %v2553 = vadd.f32 %v2484, %v2541
      %v2554 = vadd.f32 %v2485, %v2542
      %v2555 = vadd.f32 %v2486, %v2543
      %s2556 = scalar_lea.vmem %s1, 132
      %v2557 = vld [vmem:[%s2556] sm:$0x1]
      %v2558 = vld [vmem:[%s2556 + $0x1] sm:$0x1]
      %v2559 = vld [vmem:[%s2556 + $0x2] sm:$0x1]
      %v2560 = vld [vmem:[%s2556 + $0x3] sm:$0x1]
      %v2561 = vld [vmem:[%s2556 + $0x4] sm:$0x1]
      %v2562 = vld [vmem:[%s2556 + $0x5] sm:$0x1]
      %v2569 = vlaneseq
      %v2570 = vshrl.u32 %v2569, 7
      %v2571 = vsub.s32 0, %v2570
      %v2572 = vrot.slane %v2557, %v2571
      %v2573 = vlaneseq
      %v2574 = vshrl.u32 %v2573, 7
      %v2575 = vsub.s32 0, %v2574
      %v2576 = vrot.slane %v2558, %v2575
      %v2577 = vlaneseq
      %v2578 = vshrl.u32 %v2577, 7
      %v2579 = vsub.s32 0, %v2578
      %v2580 = vrot.slane %v2559, %v2579
      %v2581 = vlaneseq
      %v2582 = vshrl.u32 %v2581, 7
      %v2583 = vsub.s32 0, %v2582
      %v2584 = vrot.slane %v2560, %v2583
      %v2585 = vlaneseq
      %v2586 = vshrl.u32 %v2585, 7
      %v2587 = vsub.s32 0, %v2586
      %v2588 = vrot.slane %v2561, %v2587
      %v2589 = vlaneseq
      %v2590 = vshrl.u32 %v2589, 7
      %v2591 = vsub.s32 0, %v2590
      %v2592 = vrot.slane %v2562, %v2591
      %2593 = vrot.lane.b32.xlu0 %v2572, 1
      %v2594 = vpop.permute.xlu0 %2593
      %2595 = vrot.lane.b32.xlu0 %v2576, 1
      %v2596 = vpop.permute.xlu0 %2595
      %2597 = vrot.lane.b32.xlu0 %v2580, 1
      %v2598 = vpop.permute.xlu0 %2597
      %2599 = vrot.lane.b32.xlu0 %v2584, 1
      %v2600 = vpop.permute.xlu0 %2599
      %2601 = vrot.lane.b32.xlu0 %v2588, 1
      %v2602 = vpop.permute.xlu0 %2601
      %2603 = vrot.lane.b32.xlu0 %v2592, 1
      %v2604 = vpop.permute.xlu0 %2603
      %v2611 = vmul.f32 %v2487, %v2594
      %v2612 = vmul.f32 %v2488, %v2594
      %v2613 = vmul.f32 %v2487, %v2596
      %v2614 = vmul.f32 %v2488, %v2596
      %v2615 = vmul.f32 %v2487, %v2598
      %v2616 = vmul.f32 %v2488, %v2598
      %v2617 = vmul.f32 %v2487, %v2600
      %v2618 = vmul.f32 %v2488, %v2600
      %v2619 = vmul.f32 %v2487, %v2602
      %v2620 = vmul.f32 %v2488, %v2602
      %v2621 = vmul.f32 %v2487, %v2604
      %v2622 = vmul.f32 %v2488, %v2604
      %2635 = vrot.lane.b32.xlu0 %v2611, 127
      %v2636 = vpop.permute.xlu0 %2635
      %2637 = vrot.lane.b32.xlu0 %v2612, 127
      %v2638 = vpop.permute.xlu0 %2637
      %2639 = vrot.lane.b32.xlu0 %v2613, 127
      %v2640 = vpop.permute.xlu0 %2639
      %2641 = vrot.lane.b32.xlu0 %v2614, 127
      %v2642 = vpop.permute.xlu0 %2641
      %2643 = vrot.lane.b32.xlu0 %v2615, 127
      %v2644 = vpop.permute.xlu0 %2643
      %2645 = vrot.lane.b32.xlu0 %v2616, 127
      %v2646 = vpop.permute.xlu0 %2645
      %2647 = vrot.lane.b32.xlu0 %v2617, 127
      %v2648 = vpop.permute.xlu0 %2647
      %2649 = vrot.lane.b32.xlu0 %v2618, 127
      %v2650 = vpop.permute.xlu0 %2649
      %2651 = vrot.lane.b32.xlu0 %v2619, 127
      %v2652 = vpop.permute.xlu0 %2651
      %2653 = vrot.lane.b32.xlu0 %v2620, 127
      %v2654 = vpop.permute.xlu0 %2653
      %2655 = vrot.lane.b32.xlu0 %v2621, 127
      %v2656 = vpop.permute.xlu0 %2655
      %2657 = vrot.lane.b32.xlu0 %v2622, 127
      %v2658 = vpop.permute.xlu0 %2657
      %v2671 = vadd.f32 %v2544, %v2636
      %v2672 = vadd.f32 %v2545, %v2638
      %v2673 = vadd.f32 %v2546, %v2640
      %v2674 = vadd.f32 %v2547, %v2642
      %v2675 = vadd.f32 %v2548, %v2644
      %v2676 = vadd.f32 %v2549, %v2646
      %v2677 = vadd.f32 %v2550, %v2648
      %v2678 = vadd.f32 %v2551, %v2650
      %v2679 = vadd.f32 %v2552, %v2652
      %v2680 = vadd.f32 %v2553, %v2654
      %v2681 = vadd.f32 %v2554, %v2656
      %v2682 = vadd.f32 %v2555, %v2658
      %s2683 = scalar_lea.vmem %s1, 138
      %v2684 = vld [vmem:[%s2683] sm:$0x1]
      %v2685 = vld [vmem:[%s2683 + $0x1] sm:$0x1]
      %v2686 = vld [vmem:[%s2683 + $0x2] sm:$0x1]
      %v2687 = vld [vmem:[%s2683 + $0x3] sm:$0x1]
      %v2688 = vld [vmem:[%s2683 + $0x4] sm:$0x1]
      %v2689 = vld [vmem:[%s2683 + $0x5] sm:$0x1]
      %v2696 = vlaneseq
      %v2697 = vshrl.u32 %v2696, 7
      %v2698 = vsub.s32 0, %v2697
      %v2699 = vrot.slane %v2684, %v2698
      %v2700 = vlaneseq
      %v2701 = vshrl.u32 %v2700, 7
      %v2702 = vsub.s32 0, %v2701
      %v2703 = vrot.slane %v2685, %v2702
      %v2704 = vlaneseq
      %v2705 = vshrl.u32 %v2704, 7
      %v2706 = vsub.s32 0, %v2705
      %v2707 = vrot.slane %v2686, %v2706
      %v2708 = vlaneseq
      %v2709 = vshrl.u32 %v2708, 7
      %v2710 = vsub.s32 0, %v2709
      %v2711 = vrot.slane %v2687, %v2710
      %v2712 = vlaneseq
      %v2713 = vshrl.u32 %v2712, 7
      %v2714 = vsub.s32 0, %v2713
      %v2715 = vrot.slane %v2688, %v2714
      %v2716 = vlaneseq
      %v2717 = vshrl.u32 %v2716, 7
      %v2718 = vsub.s32 0, %v2717
      %v2719 = vrot.slane %v2689, %v2718
      %2720 = vrot.lane.b32.xlu0 %v2699, 2
      %v2721 = vpop.permute.xlu0 %2720
      %2722 = vrot.lane.b32.xlu0 %v2703, 2
      %v2723 = vpop.permute.xlu0 %2722
      %2724 = vrot.lane.b32.xlu0 %v2707, 2
      %v2725 = vpop.permute.xlu0 %2724
      %2726 = vrot.lane.b32.xlu0 %v2711, 2
      %v2727 = vpop.permute.xlu0 %2726
      %2728 = vrot.lane.b32.xlu0 %v2715, 2
      %v2729 = vpop.permute.xlu0 %2728
      %2730 = vrot.lane.b32.xlu0 %v2719, 2
      %v2731 = vpop.permute.xlu0 %2730
      %v2738 = vmul.f32 %v2487, %v2721
      %v2739 = vmul.f32 %v2488, %v2721
      %v2740 = vmul.f32 %v2487, %v2723
      %v2741 = vmul.f32 %v2488, %v2723
      %v2742 = vmul.f32 %v2487, %v2725
      %v2743 = vmul.f32 %v2488, %v2725
      %v2744 = vmul.f32 %v2487, %v2727
      %v2745 = vmul.f32 %v2488, %v2727
      %v2746 = vmul.f32 %v2487, %v2729
      %v2747 = vmul.f32 %v2488, %v2729
      %v2748 = vmul.f32 %v2487, %v2731
      %v2749 = vmul.f32 %v2488, %v2731
      %2762 = vrot.lane.b32.xlu0 %v2738, 126
      %v2763 = vpop.permute.xlu0 %2762
      %2764 = vrot.lane.b32.xlu0 %v2739, 126
      %v2765 = vpop.permute.xlu0 %2764
      %2766 = vrot.lane.b32.xlu0 %v2740, 126
      %v2767 = vpop.permute.xlu0 %2766
      %2768 = vrot.lane.b32.xlu0 %v2741, 126
      %v2769 = vpop.permute.xlu0 %2768
      %2770 = vrot.lane.b32.xlu0 %v2742, 126
      %v2771 = vpop.permute.xlu0 %2770
      %2772 = vrot.lane.b32.xlu0 %v2743, 126
      %v2773 = vpop.permute.xlu0 %2772
      %2774 = vrot.lane.b32.xlu0 %v2744, 126
      %v2775 = vpop.permute.xlu0 %2774
      %2776 = vrot.lane.b32.xlu0 %v2745, 126
      %v2777 = vpop.permute.xlu0 %2776
      %2778 = vrot.lane.b32.xlu0 %v2746, 126
      %v2779 = vpop.permute.xlu0 %2778
      %2780 = vrot.lane.b32.xlu0 %v2747, 126
      %v2781 = vpop.permute.xlu0 %2780
      %2782 = vrot.lane.b32.xlu0 %v2748, 126
      %v2783 = vpop.permute.xlu0 %2782
      %2784 = vrot.lane.b32.xlu0 %v2749, 126
      %v2785 = vpop.permute.xlu0 %2784
      %v2798 = vadd.f32 %v2671, %v2763
      %v2799 = vadd.f32 %v2672, %v2765
      %v2800 = vadd.f32 %v2673, %v2767
      %v2801 = vadd.f32 %v2674, %v2769
      %v2802 = vadd.f32 %v2675, %v2771
      %v2803 = vadd.f32 %v2676, %v2773
      %v2804 = vadd.f32 %v2677, %v2775
      %v2805 = vadd.f32 %v2678, %v2777
      %v2806 = vadd.f32 %v2679, %v2779
      %v2807 = vadd.f32 %v2680, %v2781
      %v2808 = vadd.f32 %v2681, %v2783
      %v2809 = vadd.f32 %v2682, %v2785
      %v2810 = vld [vmem:[%s2163 + $0x2] sm:$0xff]
      %v2811 = vld [vmem:[%s2163 + $0xa] sm:$0x3f]
      %s2812 = scalar_lea.vmem %s1, 144
      %v2813 = vld [vmem:[%s2812] sm:$0x1]
      %v2814 = vld [vmem:[%s2812 + $0x1] sm:$0x1]
      %v2815 = vld [vmem:[%s2812 + $0x2] sm:$0x1]
      %v2816 = vld [vmem:[%s2812 + $0x3] sm:$0x1]
      %v2817 = vld [vmem:[%s2812 + $0x4] sm:$0x1]
      %v2818 = vld [vmem:[%s2812 + $0x5] sm:$0x1]
      %v2825 = vlaneseq
      %v2826 = vshrl.u32 %v2825, 7
      %v2827 = vsub.s32 0, %v2826
      %v2828 = vrot.slane %v2813, %v2827
      %v2829 = vlaneseq
      %v2830 = vshrl.u32 %v2829, 7
      %v2831 = vsub.s32 0, %v2830
      %v2832 = vrot.slane %v2814, %v2831
      %v2833 = vlaneseq
      %v2834 = vshrl.u32 %v2833, 7
      %v2835 = vsub.s32 0, %v2834
      %v2836 = vrot.slane %v2815, %v2835
      %v2837 = vlaneseq
      %v2838 = vshrl.u32 %v2837, 7
      %v2839 = vsub.s32 0, %v2838
      %v2840 = vrot.slane %v2816, %v2839
      %v2841 = vlaneseq
      %v2842 = vshrl.u32 %v2841, 7
      %v2843 = vsub.s32 0, %v2842
      %v2844 = vrot.slane %v2817, %v2843
      %v2845 = vlaneseq
      %v2846 = vshrl.u32 %v2845, 7
      %v2847 = vsub.s32 0, %v2846
      %v2848 = vrot.slane %v2818, %v2847
      %v2855 = vmul.f32 %v2810, %v2828
      %v2856 = vmul.f32 %v2811, %v2828
      %v2857 = vmul.f32 %v2810, %v2832
      %v2858 = vmul.f32 %v2811, %v2832
      %v2859 = vmul.f32 %v2810, %v2836
      %v2860 = vmul.f32 %v2811, %v2836
      %v2861 = vmul.f32 %v2810, %v2840
      %v2862 = vmul.f32 %v2811, %v2840
      %v2863 = vmul.f32 %v2810, %v2844
      %v2864 = vmul.f32 %v2811, %v2844
      %v2865 = vmul.f32 %v2810, %v2848
      %v2866 = vmul.f32 %v2811, %v2848
      %v2867 = vadd.f32 %v2798, %v2855
      %v2868 = vadd.f32 %v2799, %v2856
      %v2869 = vadd.f32 %v2800, %v2857
      %v2870 = vadd.f32 %v2801, %v2858
      %v2871 = vadd.f32 %v2802, %v2859
      %v2872 = vadd.f32 %v2803, %v2860
      %v2873 = vadd.f32 %v2804, %v2861
      %v2874 = vadd.f32 %v2805, %v2862
      %v2875 = vadd.f32 %v2806, %v2863
      %v2876 = vadd.f32 %v2807, %v2864
      %v2877 = vadd.f32 %v2808, %v2865
      %v2878 = vadd.f32 %v2809, %v2866
      %s2879 = scalar_lea.vmem %s1, 150
      %v2880 = vld [vmem:[%s2879] sm:$0x1]
      %v2881 = vld [vmem:[%s2879 + $0x1] sm:$0x1]
      %v2882 = vld [vmem:[%s2879 + $0x2] sm:$0x1]
      %v2883 = vld [vmem:[%s2879 + $0x3] sm:$0x1]
      %v2884 = vld [vmem:[%s2879 + $0x4] sm:$0x1]
      %v2885 = vld [vmem:[%s2879 + $0x5] sm:$0x1]
      %v2892 = vlaneseq
      %v2893 = vshrl.u32 %v2892, 7
      %v2894 = vsub.s32 0, %v2893
      %v2895 = vrot.slane %v2880, %v2894
      %v2896 = vlaneseq
      %v2897 = vshrl.u32 %v2896, 7
      %v2898 = vsub.s32 0, %v2897
      %v2899 = vrot.slane %v2881, %v2898
      %v2900 = vlaneseq
      %v2901 = vshrl.u32 %v2900, 7
      %v2902 = vsub.s32 0, %v2901
      %v2903 = vrot.slane %v2882, %v2902
      %v2904 = vlaneseq
      %v2905 = vshrl.u32 %v2904, 7
      %v2906 = vsub.s32 0, %v2905
      %v2907 = vrot.slane %v2883, %v2906
      %v2908 = vlaneseq
      %v2909 = vshrl.u32 %v2908, 7
      %v2910 = vsub.s32 0, %v2909
      %v2911 = vrot.slane %v2884, %v2910
      %v2912 = vlaneseq
      %v2913 = vshrl.u32 %v2912, 7
      %v2914 = vsub.s32 0, %v2913
      %v2915 = vrot.slane %v2885, %v2914
      %2916 = vrot.lane.b32.xlu0 %v2895, 1
      %v2917 = vpop.permute.xlu0 %2916
      %2918 = vrot.lane.b32.xlu0 %v2899, 1
      %v2919 = vpop.permute.xlu0 %2918
      %2920 = vrot.lane.b32.xlu0 %v2903, 1
      %v2921 = vpop.permute.xlu0 %2920
      %2922 = vrot.lane.b32.xlu0 %v2907, 1
      %v2923 = vpop.permute.xlu0 %2922
      %2924 = vrot.lane.b32.xlu0 %v2911, 1
      %v2925 = vpop.permute.xlu0 %2924
      %2926 = vrot.lane.b32.xlu0 %v2915, 1
      %v2927 = vpop.permute.xlu0 %2926
      %v2934 = vmul.f32 %v2810, %v2917
      %v2935 = vmul.f32 %v2811, %v2917
      %v2936 = vmul.f32 %v2810, %v2919
      %v2937 = vmul.f32 %v2811, %v2919
      %v2938 = vmul.f32 %v2810, %v2921
      %v2939 = vmul.f32 %v2811, %v2921
      %v2940 = vmul.f32 %v2810, %v2923
      %v2941 = vmul.f32 %v2811, %v2923
      %v2942 = vmul.f32 %v2810, %v2925
      %v2943 = vmul.f32 %v2811, %v2925
      %v2944 = vmul.f32 %v2810, %v2927
      %v2945 = vmul.f32 %v2811, %v2927
      %2958 = vrot.lane.b32.xlu0 %v2934, 127
      %v2959 = vpop.permute.xlu0 %2958
      %2960 = vrot.lane.b32.xlu0 %v2935, 127
      %v2961 = vpop.permute.xlu0 %2960
      %2962 = vrot.lane.b32.xlu0 %v2936, 127
      %v2963 = vpop.permute.xlu0 %2962
      %2964 = vrot.lane.b32.xlu0 %v2937, 127
      %v2965 = vpop.permute.xlu0 %2964
      %2966 = vrot.lane.b32.xlu0 %v2938, 127
      %v2967 = vpop.permute.xlu0 %2966
      %2968 = vrot.lane.b32.xlu0 %v2939, 127
      %v2969 = vpop.permute.xlu0 %2968
      %2970 = vrot.lane.b32.xlu0 %v2940, 127
      %v2971 = vpop.permute.xlu0 %2970
      %2972 = vrot.lane.b32.xlu0 %v2941, 127
      %v2973 = vpop.permute.xlu0 %2972
      %2974 = vrot.lane.b32.xlu0 %v2942, 127
      %v2975 = vpop.permute.xlu0 %2974
      %2976 = vrot.lane.b32.xlu0 %v2943, 127
      %v2977 = vpop.permute.xlu0 %2976
      %2978 = vrot.lane.b32.xlu0 %v2944, 127
      %v2979 = vpop.permute.xlu0 %2978
      %2980 = vrot.lane.b32.xlu0 %v2945, 127
      %v2981 = vpop.permute.xlu0 %2980
      %v2994 = vadd.f32 %v2867, %v2959
      %v2995 = vadd.f32 %v2868, %v2961
      %v2996 = vadd.f32 %v2869, %v2963
      %v2997 = vadd.f32 %v2870, %v2965
      %v2998 = vadd.f32 %v2871, %v2967
      %v2999 = vadd.f32 %v2872, %v2969
      %v3000 = vadd.f32 %v2873, %v2971
      %v3001 = vadd.f32 %v2874, %v2973
      %v3002 = vadd.f32 %v2875, %v2975
      %v3003 = vadd.f32 %v2876, %v2977
      %v3004 = vadd.f32 %v2877, %v2979
      %v3005 = vadd.f32 %v2878, %v2981
      %s3006 = scalar_lea.vmem %s1, 156
      %v3007 = vld [vmem:[%s3006] sm:$0x1]
      %v3008 = vld [vmem:[%s3006 + $0x1] sm:$0x1]
      %v3009 = vld [vmem:[%s3006 + $0x2] sm:$0x1]
      %v3010 = vld [vmem:[%s3006 + $0x3] sm:$0x1]
      %v3011 = vld [vmem:[%s3006 + $0x4] sm:$0x1]
      %v3012 = vld [vmem:[%s3006 + $0x5] sm:$0x1]
      %v3019 = vlaneseq
      %v3020 = vshrl.u32 %v3019, 7
      %v3021 = vsub.s32 0, %v3020
      %v3022 = vrot.slane %v3007, %v3021
      %v3023 = vlaneseq
      %v3024 = vshrl.u32 %v3023, 7
      %v3025 = vsub.s32 0, %v3024
      %v3026 = vrot.slane %v3008, %v3025
      %v3027 = vlaneseq
      %v3028 = vshrl.u32 %v3027, 7
      %v3029 = vsub.s32 0, %v3028
      %v3030 = vrot.slane %v3009, %v3029
      %v3031 = vlaneseq
      %v3032 = vshrl.u32 %v3031, 7
      %v3033 = vsub.s32 0, %v3032
      %v3034 = vrot.slane %v3010, %v3033
      %v3035 = vlaneseq
      %v3036 = vshrl.u32 %v3035, 7
      %v3037 = vsub.s32 0, %v3036
      %v3038 = vrot.slane %v3011, %v3037
      %v3039 = vlaneseq
      %v3040 = vshrl.u32 %v3039, 7
      %v3041 = vsub.s32 0, %v3040
      %v3042 = vrot.slane %v3012, %v3041
      %3043 = vrot.lane.b32.xlu0 %v3022, 2
      %v3044 = vpop.permute.xlu0 %3043
      %3045 = vrot.lane.b32.xlu0 %v3026, 2
      %v3046 = vpop.permute.xlu0 %3045
      %3047 = vrot.lane.b32.xlu0 %v3030, 2
      %v3048 = vpop.permute.xlu0 %3047
      %3049 = vrot.lane.b32.xlu0 %v3034, 2
      %v3050 = vpop.permute.xlu0 %3049
      %3051 = vrot.lane.b32.xlu0 %v3038, 2
      %v3052 = vpop.permute.xlu0 %3051
      %3053 = vrot.lane.b32.xlu0 %v3042, 2
      %v3054 = vpop.permute.xlu0 %3053
      %v3061 = vmul.f32 %v2810, %v3044
      %v3062 = vmul.f32 %v2811, %v3044
      %v3063 = vmul.f32 %v2810, %v3046
      %v3064 = vmul.f32 %v2811, %v3046
      %v3065 = vmul.f32 %v2810, %v3048
      %v3066 = vmul.f32 %v2811, %v3048
      %v3067 = vmul.f32 %v2810, %v3050
      %v3068 = vmul.f32 %v2811, %v3050
      %v3069 = vmul.f32 %v2810, %v3052
      %v3070 = vmul.f32 %v2811, %v3052
      %v3071 = vmul.f32 %v2810, %v3054
      %v3072 = vmul.f32 %v2811, %v3054
      %3085 = vrot.lane.b32.xlu0 %v3061, 126
      %v3086 = vpop.permute.xlu0 %3085
      %3087 = vrot.lane.b32.xlu0 %v3062, 126
      %v3088 = vpop.permute.xlu0 %3087
      %3089 = vrot.lane.b32.xlu0 %v3063, 126
      %v3090 = vpop.permute.xlu0 %3089
      %3091 = vrot.lane.b32.xlu0 %v3064, 126
      %v3092 = vpop.permute.xlu0 %3091
      %3093 = vrot.lane.b32.xlu0 %v3065, 126
      %v3094 = vpop.permute.xlu0 %3093
      %3095 = vrot.lane.b32.xlu0 %v3066, 126
      %v3096 = vpop.permute.xlu0 %3095
      %3097 = vrot.lane.b32.xlu0 %v3067, 126
      %v3098 = vpop.permute.xlu0 %3097
      %3099 = vrot.lane.b32.xlu0 %v3068, 126
      %v3100 = vpop.permute.xlu0 %3099
      %3101 = vrot.lane.b32.xlu0 %v3069, 126
      %v3102 = vpop.permute.xlu0 %3101
      %3103 = vrot.lane.b32.xlu0 %v3070, 126
      %v3104 = vpop.permute.xlu0 %3103
      %3105 = vrot.lane.b32.xlu0 %v3071, 126
      %v3106 = vpop.permute.xlu0 %3105
      %3107 = vrot.lane.b32.xlu0 %v3072, 126
      %v3108 = vpop.permute.xlu0 %3107
      %v3121 = vadd.f32 %v2994, %v3086
      %v3122 = vadd.f32 %v2995, %v3088
      %v3123 = vadd.f32 %v2996, %v3090
      %v3124 = vadd.f32 %v2997, %v3092
      %v3125 = vadd.f32 %v2998, %v3094
      %v3126 = vadd.f32 %v2999, %v3096
      %v3127 = vadd.f32 %v3000, %v3098
      %v3128 = vadd.f32 %v3001, %v3100
      %v3129 = vadd.f32 %v3002, %v3102
      %v3130 = vadd.f32 %v3003, %v3104
      %v3131 = vadd.f32 %v3004, %v3106
      %v3132 = vadd.f32 %v3005, %v3108
      %s3133 = scalar_lea.vmem %s219, 48
      %v3134 = vld [vmem:[%s3133] sm:$0xff]
      %v3135 = vld [vmem:[%s3133 + $0x8] sm:$0x3f]
      %s3136 = scalar_lea.vmem %s1, 162
      %v3137 = vld [vmem:[%s3136] sm:$0x1]
      %v3138 = vld [vmem:[%s3136 + $0x1] sm:$0x1]
      %v3139 = vld [vmem:[%s3136 + $0x2] sm:$0x1]
      %v3140 = vld [vmem:[%s3136 + $0x3] sm:$0x1]
      %v3141 = vld [vmem:[%s3136 + $0x4] sm:$0x1]
      %v3142 = vld [vmem:[%s3136 + $0x5] sm:$0x1]
      %v3149 = vlaneseq
      %v3150 = vshrl.u32 %v3149, 7
      %v3151 = vsub.s32 0, %v3150
      %v3152 = vrot.slane %v3137, %v3151
      %v3153 = vlaneseq
      %v3154 = vshrl.u32 %v3153, 7
      %v3155 = vsub.s32 0, %v3154
      %v3156 = vrot.slane %v3138, %v3155
      %v3157 = vlaneseq
      %v3158 = vshrl.u32 %v3157, 7
      %v3159 = vsub.s32 0, %v3158
      %v3160 = vrot.slane %v3139, %v3159
      %v3161 = vlaneseq
      %v3162 = vshrl.u32 %v3161, 7
      %v3163 = vsub.s32 0, %v3162
      %v3164 = vrot.slane %v3140, %v3163
      %v3165 = vlaneseq
      %v3166 = vshrl.u32 %v3165, 7
      %v3167 = vsub.s32 0, %v3166
      %v3168 = vrot.slane %v3141, %v3167
      %v3169 = vlaneseq
      %v3170 = vshrl.u32 %v3169, 7
      %v3171 = vsub.s32 0, %v3170
      %v3172 = vrot.slane %v3142, %v3171
      %v3179 = vmul.f32 %v3134, %v3152
      %v3180 = vmul.f32 %v3135, %v3152
      %v3181 = vmul.f32 %v3134, %v3156
      %v3182 = vmul.f32 %v3135, %v3156
      %v3183 = vmul.f32 %v3134, %v3160
      %v3184 = vmul.f32 %v3135, %v3160
      %v3185 = vmul.f32 %v3134, %v3164
      %v3186 = vmul.f32 %v3135, %v3164
      %v3187 = vmul.f32 %v3134, %v3168
      %v3188 = vmul.f32 %v3135, %v3168
      %v3189 = vmul.f32 %v3134, %v3172
      %v3190 = vmul.f32 %v3135, %v3172
      %v3191 = vadd.f32 %v3121, %v3179
      %v3192 = vadd.f32 %v3122, %v3180
      %v3193 = vadd.f32 %v3123, %v3181
      %v3194 = vadd.f32 %v3124, %v3182
      %v3195 = vadd.f32 %v3125, %v3183
      %v3196 = vadd.f32 %v3126, %v3184
      %v3197 = vadd.f32 %v3127, %v3185
      %v3198 = vadd.f32 %v3128, %v3186
      %v3199 = vadd.f32 %v3129, %v3187
      %v3200 = vadd.f32 %v3130, %v3188
      %v3201 = vadd.f32 %v3131, %v3189
      %v3202 = vadd.f32 %v3132, %v3190
      %s3203 = scalar_lea.vmem %s1, 168
      %v3204 = vld [vmem:[%s3203] sm:$0x1]
      %v3205 = vld [vmem:[%s3203 + $0x1] sm:$0x1]
      %v3206 = vld [vmem:[%s3203 + $0x2] sm:$0x1]
      %v3207 = vld [vmem:[%s3203 + $0x3] sm:$0x1]
      %v3208 = vld [vmem:[%s3203 + $0x4] sm:$0x1]
      %v3209 = vld [vmem:[%s3203 + $0x5] sm:$0x1]
      %v3216 = vlaneseq
      %v3217 = vshrl.u32 %v3216, 7
      %v3218 = vsub.s32 0, %v3217
      %v3219 = vrot.slane %v3204, %v3218
      %v3220 = vlaneseq
      %v3221 = vshrl.u32 %v3220, 7
      %v3222 = vsub.s32 0, %v3221
      %v3223 = vrot.slane %v3205, %v3222
      %v3224 = vlaneseq
      %v3225 = vshrl.u32 %v3224, 7
      %v3226 = vsub.s32 0, %v3225
      %v3227 = vrot.slane %v3206, %v3226
      %v3228 = vlaneseq
      %v3229 = vshrl.u32 %v3228, 7
      %v3230 = vsub.s32 0, %v3229
      %v3231 = vrot.slane %v3207, %v3230
      %v3232 = vlaneseq
      %v3233 = vshrl.u32 %v3232, 7
      %v3234 = vsub.s32 0, %v3233
      %v3235 = vrot.slane %v3208, %v3234
      %v3236 = vlaneseq
      %v3237 = vshrl.u32 %v3236, 7
      %v3238 = vsub.s32 0, %v3237
      %v3239 = vrot.slane %v3209, %v3238
      %3240 = vrot.lane.b32.xlu0 %v3219, 1
      %v3241 = vpop.permute.xlu0 %3240
      %3242 = vrot.lane.b32.xlu0 %v3223, 1
      %v3243 = vpop.permute.xlu0 %3242
      %3244 = vrot.lane.b32.xlu0 %v3227, 1
      %v3245 = vpop.permute.xlu0 %3244
      %3246 = vrot.lane.b32.xlu0 %v3231, 1
      %v3247 = vpop.permute.xlu0 %3246
      %3248 = vrot.lane.b32.xlu0 %v3235, 1
      %v3249 = vpop.permute.xlu0 %3248
      %3250 = vrot.lane.b32.xlu0 %v3239, 1
      %v3251 = vpop.permute.xlu0 %3250
      %v3258 = vmul.f32 %v3134, %v3241
      %v3259 = vmul.f32 %v3135, %v3241
      %v3260 = vmul.f32 %v3134, %v3243
      %v3261 = vmul.f32 %v3135, %v3243
      %v3262 = vmul.f32 %v3134, %v3245
      %v3263 = vmul.f32 %v3135, %v3245
      %v3264 = vmul.f32 %v3134, %v3247
      %v3265 = vmul.f32 %v3135, %v3247
      %v3266 = vmul.f32 %v3134, %v3249
      %v3267 = vmul.f32 %v3135, %v3249
      %v3268 = vmul.f32 %v3134, %v3251
      %v3269 = vmul.f32 %v3135, %v3251
      %3282 = vrot.lane.b32.xlu0 %v3258, 127
      %v3283 = vpop.permute.xlu0 %3282
      %3284 = vrot.lane.b32.xlu0 %v3259, 127
      %v3285 = vpop.permute.xlu0 %3284
      %3286 = vrot.lane.b32.xlu0 %v3260, 127
      %v3287 = vpop.permute.xlu0 %3286
      %3288 = vrot.lane.b32.xlu0 %v3261, 127
      %v3289 = vpop.permute.xlu0 %3288
      %3290 = vrot.lane.b32.xlu0 %v3262, 127
      %v3291 = vpop.permute.xlu0 %3290
      %3292 = vrot.lane.b32.xlu0 %v3263, 127
      %v3293 = vpop.permute.xlu0 %3292
      %3294 = vrot.lane.b32.xlu0 %v3264, 127
      %v3295 = vpop.permute.xlu0 %3294
      %3296 = vrot.lane.b32.xlu0 %v3265, 127
      %v3297 = vpop.permute.xlu0 %3296
      %3298 = vrot.lane.b32.xlu0 %v3266, 127
      %v3299 = vpop.permute.xlu0 %3298
      %3300 = vrot.lane.b32.xlu0 %v3267, 127
      %v3301 = vpop.permute.xlu0 %3300
      %3302 = vrot.lane.b32.xlu0 %v3268, 127
      %v3303 = vpop.permute.xlu0 %3302
      %3304 = vrot.lane.b32.xlu0 %v3269, 127
      %v3305 = vpop.permute.xlu0 %3304
      %v3318 = vadd.f32 %v3191, %v3283
      %v3319 = vadd.f32 %v3192, %v3285
      %v3320 = vadd.f32 %v3193, %v3287
      %v3321 = vadd.f32 %v3194, %v3289
      %v3322 = vadd.f32 %v3195, %v3291
      %v3323 = vadd.f32 %v3196, %v3293
      %v3324 = vadd.f32 %v3197, %v3295
      %v3325 = vadd.f32 %v3198, %v3297
      %v3326 = vadd.f32 %v3199, %v3299
      %v3327 = vadd.f32 %v3200, %v3301
      %v3328 = vadd.f32 %v3201, %v3303
      %v3329 = vadd.f32 %v3202, %v3305
      %s3330 = scalar_lea.vmem %s1, 174
      %v3331 = vld [vmem:[%s3330] sm:$0x1]
      %v3332 = vld [vmem:[%s3330 + $0x1] sm:$0x1]
      %v3333 = vld [vmem:[%s3330 + $0x2] sm:$0x1]
      %v3334 = vld [vmem:[%s3330 + $0x3] sm:$0x1]
      %v3335 = vld [vmem:[%s3330 + $0x4] sm:$0x1]
      %v3336 = vld [vmem:[%s3330 + $0x5] sm:$0x1]
      %v3343 = vlaneseq
      %v3344 = vshrl.u32 %v3343, 7
      %v3345 = vsub.s32 0, %v3344
      %v3346 = vrot.slane %v3331, %v3345
      %v3347 = vlaneseq
      %v3348 = vshrl.u32 %v3347, 7
      %v3349 = vsub.s32 0, %v3348
      %v3350 = vrot.slane %v3332, %v3349
      %v3351 = vlaneseq
      %v3352 = vshrl.u32 %v3351, 7
      %v3353 = vsub.s32 0, %v3352
      %v3354 = vrot.slane %v3333, %v3353
      %v3355 = vlaneseq
      %v3356 = vshrl.u32 %v3355, 7
      %v3357 = vsub.s32 0, %v3356
      %v3358 = vrot.slane %v3334, %v3357
      %v3359 = vlaneseq
      %v3360 = vshrl.u32 %v3359, 7
      %v3361 = vsub.s32 0, %v3360
      %v3362 = vrot.slane %v3335, %v3361
      %v3363 = vlaneseq
      %v3364 = vshrl.u32 %v3363, 7
      %v3365 = vsub.s32 0, %v3364
      %v3366 = vrot.slane %v3336, %v3365
      %3367 = vrot.lane.b32.xlu0 %v3346, 2
      %v3368 = vpop.permute.xlu0 %3367
      %3369 = vrot.lane.b32.xlu0 %v3350, 2
      %v3370 = vpop.permute.xlu0 %3369
      %3371 = vrot.lane.b32.xlu0 %v3354, 2
      %v3372 = vpop.permute.xlu0 %3371
      %3373 = vrot.lane.b32.xlu0 %v3358, 2
      %v3374 = vpop.permute.xlu0 %3373
      %3375 = vrot.lane.b32.xlu0 %v3362, 2
      %v3376 = vpop.permute.xlu0 %3375
      %3377 = vrot.lane.b32.xlu0 %v3366, 2
      %v3378 = vpop.permute.xlu0 %3377
      %v3385 = vmul.f32 %v3134, %v3368
      %v3386 = vmul.f32 %v3135, %v3368
      %v3387 = vmul.f32 %v3134, %v3370
      %v3388 = vmul.f32 %v3135, %v3370
      %v3389 = vmul.f32 %v3134, %v3372
      %v3390 = vmul.f32 %v3135, %v3372
      %v3391 = vmul.f32 %v3134, %v3374
      %v3392 = vmul.f32 %v3135, %v3374
      %v3393 = vmul.f32 %v3134, %v3376
      %v3394 = vmul.f32 %v3135, %v3376
      %v3395 = vmul.f32 %v3134, %v3378
      %v3396 = vmul.f32 %v3135, %v3378
      %3409 = vrot.lane.b32.xlu0 %v3385, 126
      %v3410 = vpop.permute.xlu0 %3409
      %3411 = vrot.lane.b32.xlu0 %v3386, 126
      %v3412 = vpop.permute.xlu0 %3411
      %3413 = vrot.lane.b32.xlu0 %v3387, 126
      %v3414 = vpop.permute.xlu0 %3413
      %3415 = vrot.lane.b32.xlu0 %v3388, 126
      %v3416 = vpop.permute.xlu0 %3415
      %3417 = vrot.lane.b32.xlu0 %v3389, 126
      %v3418 = vpop.permute.xlu0 %3417
      %3419 = vrot.lane.b32.xlu0 %v3390, 126
      %v3420 = vpop.permute.xlu0 %3419
      %3421 = vrot.lane.b32.xlu0 %v3391, 126
      %v3422 = vpop.permute.xlu0 %3421
      %3423 = vrot.lane.b32.xlu0 %v3392, 126
      %v3424 = vpop.permute.xlu0 %3423
      %3425 = vrot.lane.b32.xlu0 %v3393, 126
      %v3426 = vpop.permute.xlu0 %3425
      %3427 = vrot.lane.b32.xlu0 %v3394, 126
      %v3428 = vpop.permute.xlu0 %3427
      %3429 = vrot.lane.b32.xlu0 %v3395, 126
      %v3430 = vpop.permute.xlu0 %3429
      %3431 = vrot.lane.b32.xlu0 %v3396, 126
      %v3432 = vpop.permute.xlu0 %3431
      %v3445 = vadd.f32 %v3318, %v3410
      %v3446 = vadd.f32 %v3319, %v3412
      %v3447 = vadd.f32 %v3320, %v3414
      %v3448 = vadd.f32 %v3321, %v3416
      %v3449 = vadd.f32 %v3322, %v3418
      %v3450 = vadd.f32 %v3323, %v3420
      %v3451 = vadd.f32 %v3324, %v3422
      %v3452 = vadd.f32 %v3325, %v3424
      %v3453 = vadd.f32 %v3326, %v3426
      %v3454 = vadd.f32 %v3327, %v3428
      %v3455 = vadd.f32 %v3328, %v3430
      %v3456 = vadd.f32 %v3329, %v3432
      %v3457 = vld [vmem:[%s3133 + $0x1] sm:$0xff]
      %v3458 = vld [vmem:[%s3133 + $0x9] sm:$0x3f]
      %s3459 = scalar_lea.vmem %s1, 180
      %v3460 = vld [vmem:[%s3459] sm:$0x1]
      %v3461 = vld [vmem:[%s3459 + $0x1] sm:$0x1]
      %v3462 = vld [vmem:[%s3459 + $0x2] sm:$0x1]
      %v3463 = vld [vmem:[%s3459 + $0x3] sm:$0x1]
      %v3464 = vld [vmem:[%s3459 + $0x4] sm:$0x1]
      %v3465 = vld [vmem:[%s3459 + $0x5] sm:$0x1]
      %v3472 = vlaneseq
      %v3473 = vshrl.u32 %v3472, 7
      %v3474 = vsub.s32 0, %v3473
      %v3475 = vrot.slane %v3460, %v3474
      %v3476 = vlaneseq
      %v3477 = vshrl.u32 %v3476, 7
      %v3478 = vsub.s32 0, %v3477
      %v3479 = vrot.slane %v3461, %v3478
      %v3480 = vlaneseq
      %v3481 = vshrl.u32 %v3480, 7
      %v3482 = vsub.s32 0, %v3481
      %v3483 = vrot.slane %v3462, %v3482
      %v3484 = vlaneseq
      %v3485 = vshrl.u32 %v3484, 7
      %v3486 = vsub.s32 0, %v3485
      %v3487 = vrot.slane %v3463, %v3486
      %v3488 = vlaneseq
      %v3489 = vshrl.u32 %v3488, 7
      %v3490 = vsub.s32 0, %v3489
      %v3491 = vrot.slane %v3464, %v3490
      %v3492 = vlaneseq
      %v3493 = vshrl.u32 %v3492, 7
      %v3494 = vsub.s32 0, %v3493
      %v3495 = vrot.slane %v3465, %v3494
      %v3502 = vmul.f32 %v3457, %v3475
      %v3503 = vmul.f32 %v3458, %v3475
      %v3504 = vmul.f32 %v3457, %v3479
      %v3505 = vmul.f32 %v3458, %v3479
      %v3506 = vmul.f32 %v3457, %v3483
      %v3507 = vmul.f32 %v3458, %v3483
      %v3508 = vmul.f32 %v3457, %v3487
      %v3509 = vmul.f32 %v3458, %v3487
      %v3510 = vmul.f32 %v3457, %v3491
      %v3511 = vmul.f32 %v3458, %v3491
      %v3512 = vmul.f32 %v3457, %v3495
      %v3513 = vmul.f32 %v3458, %v3495
      %v3514 = vadd.f32 %v3445, %v3502
      %v3515 = vadd.f32 %v3446, %v3503
      %v3516 = vadd.f32 %v3447, %v3504
      %v3517 = vadd.f32 %v3448, %v3505
      %v3518 = vadd.f32 %v3449, %v3506
      %v3519 = vadd.f32 %v3450, %v3507
      %v3520 = vadd.f32 %v3451, %v3508
      %v3521 = vadd.f32 %v3452, %v3509
      %v3522 = vadd.f32 %v3453, %v3510
      %v3523 = vadd.f32 %v3454, %v3511
      %v3524 = vadd.f32 %v3455, %v3512
      %v3525 = vadd.f32 %v3456, %v3513
      %s3526 = scalar_lea.vmem %s1, 186
      %v3527 = vld [vmem:[%s3526] sm:$0x1]
      %v3528 = vld [vmem:[%s3526 + $0x1] sm:$0x1]
      %v3529 = vld [vmem:[%s3526 + $0x2] sm:$0x1]
      %v3530 = vld [vmem:[%s3526 + $0x3] sm:$0x1]
      %v3531 = vld [vmem:[%s3526 + $0x4] sm:$0x1]
      %v3532 = vld [vmem:[%s3526 + $0x5] sm:$0x1]
      %v3539 = vlaneseq
      %v3540 = vshrl.u32 %v3539, 7
      %v3541 = vsub.s32 0, %v3540
      %v3542 = vrot.slane %v3527, %v3541
      %v3543 = vlaneseq
      %v3544 = vshrl.u32 %v3543, 7
      %v3545 = vsub.s32 0, %v3544
      %v3546 = vrot.slane %v3528, %v3545
      %v3547 = vlaneseq
      %v3548 = vshrl.u32 %v3547, 7
      %v3549 = vsub.s32 0, %v3548
      %v3550 = vrot.slane %v3529, %v3549
      %v3551 = vlaneseq
      %v3552 = vshrl.u32 %v3551, 7
      %v3553 = vsub.s32 0, %v3552
      %v3554 = vrot.slane %v3530, %v3553
      %v3555 = vlaneseq
      %v3556 = vshrl.u32 %v3555, 7
      %v3557 = vsub.s32 0, %v3556
      %v3558 = vrot.slane %v3531, %v3557
      %v3559 = vlaneseq
      %v3560 = vshrl.u32 %v3559, 7
      %v3561 = vsub.s32 0, %v3560
      %v3562 = vrot.slane %v3532, %v3561
      %3563 = vrot.lane.b32.xlu0 %v3542, 1
      %v3564 = vpop.permute.xlu0 %3563
      %3565 = vrot.lane.b32.xlu0 %v3546, 1
      %v3566 = vpop.permute.xlu0 %3565
      %3567 = vrot.lane.b32.xlu0 %v3550, 1
      %v3568 = vpop.permute.xlu0 %3567
      %3569 = vrot.lane.b32.xlu0 %v3554, 1
      %v3570 = vpop.permute.xlu0 %3569
      %3571 = vrot.lane.b32.xlu0 %v3558, 1
      %v3572 = vpop.permute.xlu0 %3571
      %3573 = vrot.lane.b32.xlu0 %v3562, 1
      %v3574 = vpop.permute.xlu0 %3573
      %v3581 = vmul.f32 %v3457, %v3564
      %v3582 = vmul.f32 %v3458, %v3564
      %v3583 = vmul.f32 %v3457, %v3566
      %v3584 = vmul.f32 %v3458, %v3566
      %v3585 = vmul.f32 %v3457, %v3568
      %v3586 = vmul.f32 %v3458, %v3568
      %v3587 = vmul.f32 %v3457, %v3570
      %v3588 = vmul.f32 %v3458, %v3570
      %v3589 = vmul.f32 %v3457, %v3572
      %v3590 = vmul.f32 %v3458, %v3572
      %v3591 = vmul.f32 %v3457, %v3574
      %v3592 = vmul.f32 %v3458, %v3574
      %3605 = vrot.lane.b32.xlu0 %v3581, 127
      %v3606 = vpop.permute.xlu0 %3605
      %3607 = vrot.lane.b32.xlu0 %v3582, 127
      %v3608 = vpop.permute.xlu0 %3607
      %3609 = vrot.lane.b32.xlu0 %v3583, 127
      %v3610 = vpop.permute.xlu0 %3609
      %3611 = vrot.lane.b32.xlu0 %v3584, 127
      %v3612 = vpop.permute.xlu0 %3611
      %3613 = vrot.lane.b32.xlu0 %v3585, 127
      %v3614 = vpop.permute.xlu0 %3613
      %3615 = vrot.lane.b32.xlu0 %v3586, 127
      %v3616 = vpop.permute.xlu0 %3615
      %3617 = vrot.lane.b32.xlu0 %v3587, 127
      %v3618 = vpop.permute.xlu0 %3617
      %3619 = vrot.lane.b32.xlu0 %v3588, 127
      %v3620 = vpop.permute.xlu0 %3619
      %3621 = vrot.lane.b32.xlu0 %v3589, 127
      %v3622 = vpop.permute.xlu0 %3621
      %3623 = vrot.lane.b32.xlu0 %v3590, 127
      %v3624 = vpop.permute.xlu0 %3623
      %3625 = vrot.lane.b32.xlu0 %v3591, 127
      %v3626 = vpop.permute.xlu0 %3625
      %3627 = vrot.lane.b32.xlu0 %v3592, 127
      %v3628 = vpop.permute.xlu0 %3627
      %v3641 = vadd.f32 %v3514, %v3606
      %v3642 = vadd.f32 %v3515, %v3608
      %v3643 = vadd.f32 %v3516, %v3610
      %v3644 = vadd.f32 %v3517, %v3612
      %v3645 = vadd.f32 %v3518, %v3614
      %v3646 = vadd.f32 %v3519, %v3616
      %v3647 = vadd.f32 %v3520, %v3618
      %v3648 = vadd.f32 %v3521, %v3620
      %v3649 = vadd.f32 %v3522, %v3622
      %v3650 = vadd.f32 %v3523, %v3624
      %v3651 = vadd.f32 %v3524, %v3626
      %v3652 = vadd.f32 %v3525, %v3628
      %s3653 = scalar_lea.vmem %s1, 192
      %v3654 = vld [vmem:[%s3653] sm:$0x1]
      %v3655 = vld [vmem:[%s3653 + $0x1] sm:$0x1]
      %v3656 = vld [vmem:[%s3653 + $0x2] sm:$0x1]
      %v3657 = vld [vmem:[%s3653 + $0x3] sm:$0x1]
      %v3658 = vld [vmem:[%s3653 + $0x4] sm:$0x1]
      %v3659 = vld [vmem:[%s3653 + $0x5] sm:$0x1]
      %v3666 = vlaneseq
      %v3667 = vshrl.u32 %v3666, 7
      %v3668 = vsub.s32 0, %v3667
      %v3669 = vrot.slane %v3654, %v3668
      %v3670 = vlaneseq
      %v3671 = vshrl.u32 %v3670, 7
      %v3672 = vsub.s32 0, %v3671
      %v3673 = vrot.slane %v3655, %v3672
      %v3674 = vlaneseq
      %v3675 = vshrl.u32 %v3674, 7
      %v3676 = vsub.s32 0, %v3675
      %v3677 = vrot.slane %v3656, %v3676
      %v3678 = vlaneseq
      %v3679 = vshrl.u32 %v3678, 7
      %v3680 = vsub.s32 0, %v3679
      %v3681 = vrot.slane %v3657, %v3680
      %v3682 = vlaneseq
      %v3683 = vshrl.u32 %v3682, 7
      %v3684 = vsub.s32 0, %v3683
      %v3685 = vrot.slane %v3658, %v3684
      %v3686 = vlaneseq
      %v3687 = vshrl.u32 %v3686, 7
      %v3688 = vsub.s32 0, %v3687
      %v3689 = vrot.slane %v3659, %v3688
      %3690 = vrot.lane.b32.xlu0 %v3669, 2
      %v3691 = vpop.permute.xlu0 %3690
      %3692 = vrot.lane.b32.xlu0 %v3673, 2
      %v3693 = vpop.permute.xlu0 %3692
      %3694 = vrot.lane.b32.xlu0 %v3677, 2
      %v3695 = vpop.permute.xlu0 %3694
      %3696 = vrot.lane.b32.xlu0 %v3681, 2
      %v3697 = vpop.permute.xlu0 %3696
      %3698 = vrot.lane.b32.xlu0 %v3685, 2
      %v3699 = vpop.permute.xlu0 %3698
      %3700 = vrot.lane.b32.xlu0 %v3689, 2
      %v3701 = vpop.permute.xlu0 %3700
      %v3708 = vmul.f32 %v3457, %v3691
      %v3709 = vmul.f32 %v3458, %v3691
      %v3710 = vmul.f32 %v3457, %v3693
      %v3711 = vmul.f32 %v3458, %v3693
      %v3712 = vmul.f32 %v3457, %v3695
      %v3713 = vmul.f32 %v3458, %v3695
      %v3714 = vmul.f32 %v3457, %v3697
      %v3715 = vmul.f32 %v3458, %v3697
      %v3716 = vmul.f32 %v3457, %v3699
      %v3717 = vmul.f32 %v3458, %v3699
      %v3718 = vmul.f32 %v3457, %v3701
      %v3719 = vmul.f32 %v3458, %v3701
      %3732 = vrot.lane.b32.xlu0 %v3708, 126
      %v3733 = vpop.permute.xlu0 %3732
      %3734 = vrot.lane.b32.xlu0 %v3709, 126
      %v3735 = vpop.permute.xlu0 %3734
      %3736 = vrot.lane.b32.xlu0 %v3710, 126
      %v3737 = vpop.permute.xlu0 %3736
      %3738 = vrot.lane.b32.xlu0 %v3711, 126
      %v3739 = vpop.permute.xlu0 %3738
      %3740 = vrot.lane.b32.xlu0 %v3712, 126
      %v3741 = vpop.permute.xlu0 %3740
      %3742 = vrot.lane.b32.xlu0 %v3713, 126
      %v3743 = vpop.permute.xlu0 %3742
      %3744 = vrot.lane.b32.xlu0 %v3714, 126
      %v3745 = vpop.permute.xlu0 %3744
      %3746 = vrot.lane.b32.xlu0 %v3715, 126
      %v3747 = vpop.permute.xlu0 %3746
      %3748 = vrot.lane.b32.xlu0 %v3716, 126
      %v3749 = vpop.permute.xlu0 %3748
      %3750 = vrot.lane.b32.xlu0 %v3717, 126
      %v3751 = vpop.permute.xlu0 %3750
      %3752 = vrot.lane.b32.xlu0 %v3718, 126
      %v3753 = vpop.permute.xlu0 %3752
      %3754 = vrot.lane.b32.xlu0 %v3719, 126
      %v3755 = vpop.permute.xlu0 %3754
      %v3768 = vadd.f32 %v3641, %v3733
      %v3769 = vadd.f32 %v3642, %v3735
      %v3770 = vadd.f32 %v3643, %v3737
      %v3771 = vadd.f32 %v3644, %v3739
      %v3772 = vadd.f32 %v3645, %v3741
      %v3773 = vadd.f32 %v3646, %v3743
      %v3774 = vadd.f32 %v3647, %v3745
      %v3775 = vadd.f32 %v3648, %v3747
      %v3776 = vadd.f32 %v3649, %v3749
      %v3777 = vadd.f32 %v3650, %v3751
      %v3778 = vadd.f32 %v3651, %v3753
      %v3779 = vadd.f32 %v3652, %v3755
      %v3780 = vld [vmem:[%s3133 + $0x2] sm:$0xff]
      %v3781 = vld [vmem:[%s3133 + $0xa] sm:$0x3f]
      %s3782 = scalar_lea.vmem %s1, 198
      %v3783 = vld [vmem:[%s3782] sm:$0x1]
      %v3784 = vld [vmem:[%s3782 + $0x1] sm:$0x1]
      %v3785 = vld [vmem:[%s3782 + $0x2] sm:$0x1]
      %v3786 = vld [vmem:[%s3782 + $0x3] sm:$0x1]
      %v3787 = vld [vmem:[%s3782 + $0x4] sm:$0x1]
      %v3788 = vld [vmem:[%s3782 + $0x5] sm:$0x1]
      %v3795 = vlaneseq
      %v3796 = vshrl.u32 %v3795, 7
      %v3797 = vsub.s32 0, %v3796
      %v3798 = vrot.slane %v3783, %v3797
      %v3799 = vlaneseq
      %v3800 = vshrl.u32 %v3799, 7
      %v3801 = vsub.s32 0, %v3800
      %v3802 = vrot.slane %v3784, %v3801
      %v3803 = vlaneseq
      %v3804 = vshrl.u32 %v3803, 7
      %v3805 = vsub.s32 0, %v3804
      %v3806 = vrot.slane %v3785, %v3805
      %v3807 = vlaneseq
      %v3808 = vshrl.u32 %v3807, 7
      %v3809 = vsub.s32 0, %v3808
      %v3810 = vrot.slane %v3786, %v3809
      %v3811 = vlaneseq
      %v3812 = vshrl.u32 %v3811, 7
      %v3813 = vsub.s32 0, %v3812
      %v3814 = vrot.slane %v3787, %v3813
      %v3815 = vlaneseq
      %v3816 = vshrl.u32 %v3815, 7
      %v3817 = vsub.s32 0, %v3816
      %v3818 = vrot.slane %v3788, %v3817
      %v3825 = vmul.f32 %v3780, %v3798
      %v3826 = vmul.f32 %v3781, %v3798
      %v3827 = vmul.f32 %v3780, %v3802
      %v3828 = vmul.f32 %v3781, %v3802
      %v3829 = vmul.f32 %v3780, %v3806
      %v3830 = vmul.f32 %v3781, %v3806
      %v3831 = vmul.f32 %v3780, %v3810
      %v3832 = vmul.f32 %v3781, %v3810
      %v3833 = vmul.f32 %v3780, %v3814
      %v3834 = vmul.f32 %v3781, %v3814
      %v3835 = vmul.f32 %v3780, %v3818
      %v3836 = vmul.f32 %v3781, %v3818
      %v3837 = vadd.f32 %v3768, %v3825
      %v3838 = vadd.f32 %v3769, %v3826
      %v3839 = vadd.f32 %v3770, %v3827
      %v3840 = vadd.f32 %v3771, %v3828
      %v3841 = vadd.f32 %v3772, %v3829
      %v3842 = vadd.f32 %v3773, %v3830
      %v3843 = vadd.f32 %v3774, %v3831
      %v3844 = vadd.f32 %v3775, %v3832
      %v3845 = vadd.f32 %v3776, %v3833
      %v3846 = vadd.f32 %v3777, %v3834
      %v3847 = vadd.f32 %v3778, %v3835
      %v3848 = vadd.f32 %v3779, %v3836
      %s3849 = scalar_lea.vmem %s1, 204
      %v3850 = vld [vmem:[%s3849] sm:$0x1]
      %v3851 = vld [vmem:[%s3849 + $0x1] sm:$0x1]
      %v3852 = vld [vmem:[%s3849 + $0x2] sm:$0x1]
      %v3853 = vld [vmem:[%s3849 + $0x3] sm:$0x1]
      %v3854 = vld [vmem:[%s3849 + $0x4] sm:$0x1]
      %v3855 = vld [vmem:[%s3849 + $0x5] sm:$0x1]
      %v3862 = vlaneseq
      %v3863 = vshrl.u32 %v3862, 7
      %v3864 = vsub.s32 0, %v3863
      %v3865 = vrot.slane %v3850, %v3864
      %v3866 = vlaneseq
      %v3867 = vshrl.u32 %v3866, 7
      %v3868 = vsub.s32 0, %v3867
      %v3869 = vrot.slane %v3851, %v3868
      %v3870 = vlaneseq
      %v3871 = vshrl.u32 %v3870, 7
      %v3872 = vsub.s32 0, %v3871
      %v3873 = vrot.slane %v3852, %v3872
      %v3874 = vlaneseq
      %v3875 = vshrl.u32 %v3874, 7
      %v3876 = vsub.s32 0, %v3875
      %v3877 = vrot.slane %v3853, %v3876
      %v3878 = vlaneseq
      %v3879 = vshrl.u32 %v3878, 7
      %v3880 = vsub.s32 0, %v3879
      %v3881 = vrot.slane %v3854, %v3880
      %v3882 = vlaneseq
      %v3883 = vshrl.u32 %v3882, 7
      %v3884 = vsub.s32 0, %v3883
      %v3885 = vrot.slane %v3855, %v3884
      %3886 = vrot.lane.b32.xlu0 %v3865, 1
      %v3887 = vpop.permute.xlu0 %3886
      %3888 = vrot.lane.b32.xlu0 %v3869, 1
      %v3889 = vpop.permute.xlu0 %3888
      %3890 = vrot.lane.b32.xlu0 %v3873, 1
      %v3891 = vpop.permute.xlu0 %3890
      %3892 = vrot.lane.b32.xlu0 %v3877, 1
      %v3893 = vpop.permute.xlu0 %3892
      %3894 = vrot.lane.b32.xlu0 %v3881, 1
      %v3895 = vpop.permute.xlu0 %3894
      %3896 = vrot.lane.b32.xlu0 %v3885, 1
      %v3897 = vpop.permute.xlu0 %3896
      %v3904 = vmul.f32 %v3780, %v3887
      %v3905 = vmul.f32 %v3781, %v3887
      %v3906 = vmul.f32 %v3780, %v3889
      %v3907 = vmul.f32 %v3781, %v3889
      %v3908 = vmul.f32 %v3780, %v3891
      %v3909 = vmul.f32 %v3781, %v3891
      %v3910 = vmul.f32 %v3780, %v3893
      %v3911 = vmul.f32 %v3781, %v3893
      %v3912 = vmul.f32 %v3780, %v3895
      %v3913 = vmul.f32 %v3781, %v3895
      %v3914 = vmul.f32 %v3780, %v3897
      %v3915 = vmul.f32 %v3781, %v3897
      %3928 = vrot.lane.b32.xlu0 %v3904, 127
      %v3929 = vpop.permute.xlu0 %3928
      %3930 = vrot.lane.b32.xlu0 %v3905, 127
      %v3931 = vpop.permute.xlu0 %3930
      %3932 = vrot.lane.b32.xlu0 %v3906, 127
      %v3933 = vpop.permute.xlu0 %3932
      %3934 = vrot.lane.b32.xlu0 %v3907, 127
      %v3935 = vpop.permute.xlu0 %3934
      %3936 = vrot.lane.b32.xlu0 %v3908, 127
      %v3937 = vpop.permute.xlu0 %3936
      %3938 = vrot.lane.b32.xlu0 %v3909, 127
      %v3939 = vpop.permute.xlu0 %3938
      %3940 = vrot.lane.b32.xlu0 %v3910, 127
      %v3941 = vpop.permute.xlu0 %3940
      %3942 = vrot.lane.b32.xlu0 %v3911, 127
      %v3943 = vpop.permute.xlu0 %3942
      %3944 = vrot.lane.b32.xlu0 %v3912, 127
      %v3945 = vpop.permute.xlu0 %3944
      %3946 = vrot.lane.b32.xlu0 %v3913, 127
      %v3947 = vpop.permute.xlu0 %3946
      %3948 = vrot.lane.b32.xlu0 %v3914, 127
      %v3949 = vpop.permute.xlu0 %3948
      %3950 = vrot.lane.b32.xlu0 %v3915, 127
      %v3951 = vpop.permute.xlu0 %3950
      %v3964 = vadd.f32 %v3837, %v3929
      %v3965 = vadd.f32 %v3838, %v3931
      %v3966 = vadd.f32 %v3839, %v3933
      %v3967 = vadd.f32 %v3840, %v3935
      %v3968 = vadd.f32 %v3841, %v3937
      %v3969 = vadd.f32 %v3842, %v3939
      %v3970 = vadd.f32 %v3843, %v3941
      %v3971 = vadd.f32 %v3844, %v3943
      %v3972 = vadd.f32 %v3845, %v3945
      %v3973 = vadd.f32 %v3846, %v3947
      %v3974 = vadd.f32 %v3847, %v3949
      %v3975 = vadd.f32 %v3848, %v3951
      %s3976 = scalar_lea.vmem %s1, 210
      %v3977 = vld [vmem:[%s3976] sm:$0x1]
      %v3978 = vld [vmem:[%s3976 + $0x1] sm:$0x1]
      %v3979 = vld [vmem:[%s3976 + $0x2] sm:$0x1]
      %v3980 = vld [vmem:[%s3976 + $0x3] sm:$0x1]
      %v3981 = vld [vmem:[%s3976 + $0x4] sm:$0x1]
      %v3982 = vld [vmem:[%s3976 + $0x5] sm:$0x1]
      %v3989 = vlaneseq
      %v3990 = vshrl.u32 %v3989, 7
      %v3991 = vsub.s32 0, %v3990
      %v3992 = vrot.slane %v3977, %v3991
      %v3993 = vlaneseq
      %v3994 = vshrl.u32 %v3993, 7
      %v3995 = vsub.s32 0, %v3994
      %v3996 = vrot.slane %v3978, %v3995
      %v3997 = vlaneseq
      %v3998 = vshrl.u32 %v3997, 7
      %v3999 = vsub.s32 0, %v3998
      %v4000 = vrot.slane %v3979, %v3999
      %v4001 = vlaneseq
      %v4002 = vshrl.u32 %v4001, 7
      %v4003 = vsub.s32 0, %v4002
      %v4004 = vrot.slane %v3980, %v4003
      %v4005 = vlaneseq
      %v4006 = vshrl.u32 %v4005, 7
      %v4007 = vsub.s32 0, %v4006
      %v4008 = vrot.slane %v3981, %v4007
      %v4009 = vlaneseq
      %v4010 = vshrl.u32 %v4009, 7
      %v4011 = vsub.s32 0, %v4010
      %v4012 = vrot.slane %v3982, %v4011
      %4013 = vrot.lane.b32.xlu0 %v3992, 2
      %v4014 = vpop.permute.xlu0 %4013
      %4015 = vrot.lane.b32.xlu0 %v3996, 2
      %v4016 = vpop.permute.xlu0 %4015
      %4017 = vrot.lane.b32.xlu0 %v4000, 2
      %v4018 = vpop.permute.xlu0 %4017
      %4019 = vrot.lane.b32.xlu0 %v4004, 2
      %v4020 = vpop.permute.xlu0 %4019
      %4021 = vrot.lane.b32.xlu0 %v4008, 2
      %v4022 = vpop.permute.xlu0 %4021
      %4023 = vrot.lane.b32.xlu0 %v4012, 2
      %v4024 = vpop.permute.xlu0 %4023
      %v4031 = vmul.f32 %v3780, %v4014
      %v4032 = vmul.f32 %v3781, %v4014
      %v4033 = vmul.f32 %v3780, %v4016
      %v4034 = vmul.f32 %v3781, %v4016
      %v4035 = vmul.f32 %v3780, %v4018
      %v4036 = vmul.f32 %v3781, %v4018
      %v4037 = vmul.f32 %v3780, %v4020
      %v4038 = vmul.f32 %v3781, %v4020
      %v4039 = vmul.f32 %v3780, %v4022
      %v4040 = vmul.f32 %v3781, %v4022
      %v4041 = vmul.f32 %v3780, %v4024
      %v4042 = vmul.f32 %v3781, %v4024
      %4055 = vrot.lane.b32.xlu0 %v4031, 126
      %v4056 = vpop.permute.xlu0 %4055
      %4057 = vrot.lane.b32.xlu0 %v4032, 126
      %v4058 = vpop.permute.xlu0 %4057
      %4059 = vrot.lane.b32.xlu0 %v4033, 126
      %v4060 = vpop.permute.xlu0 %4059
      %4061 = vrot.lane.b32.xlu0 %v4034, 126
      %v4062 = vpop.permute.xlu0 %4061
      %4063 = vrot.lane.b32.xlu0 %v4035, 126
      %v4064 = vpop.permute.xlu0 %4063
      %4065 = vrot.lane.b32.xlu0 %v4036, 126
      %v4066 = vpop.permute.xlu0 %4065
      %4067 = vrot.lane.b32.xlu0 %v4037, 126
      %v4068 = vpop.permute.xlu0 %4067
      %4069 = vrot.lane.b32.xlu0 %v4038, 126
      %v4070 = vpop.permute.xlu0 %4069
      %4071 = vrot.lane.b32.xlu0 %v4039, 126
      %v4072 = vpop.permute.xlu0 %4071
      %4073 = vrot.lane.b32.xlu0 %v4040, 126
      %v4074 = vpop.permute.xlu0 %4073
      %4075 = vrot.lane.b32.xlu0 %v4041, 126
      %v4076 = vpop.permute.xlu0 %4075
      %4077 = vrot.lane.b32.xlu0 %v4042, 126
      %v4078 = vpop.permute.xlu0 %4077
      %v4091 = vadd.f32 %v3964, %v4056
      %v4092 = vadd.f32 %v3965, %v4058
      %v4093 = vadd.f32 %v3966, %v4060
      %v4094 = vadd.f32 %v3967, %v4062
      %v4095 = vadd.f32 %v3968, %v4064
      %v4096 = vadd.f32 %v3969, %v4066
      %v4097 = vadd.f32 %v3970, %v4068
      %v4098 = vadd.f32 %v3971, %v4070
      %v4099 = vadd.f32 %v3972, %v4072
      %v4100 = vadd.f32 %v3973, %v4074
      %v4101 = vadd.f32 %v3974, %v4076
      %v4102 = vadd.f32 %v3975, %v4078
      %v4103 = vld [vmem:[%s2] sm:$0x1]
      %v4104 = vld [vmem:[%s2 + $0x1] sm:$0x1]
      %v4105 = vld [vmem:[%s2 + $0x2] sm:$0x1]
      %v4106 = vld [vmem:[%s2 + $0x3] sm:$0x1]
      %v4107 = vld [vmem:[%s2 + $0x4] sm:$0x1]
      %v4108 = vld [vmem:[%s2 + $0x5] sm:$0x1]
      %v4115 = vlaneseq
      %v4116 = vshrl.u32 %v4115, 7
      %v4117 = vsub.s32 0, %v4116
      %v4118 = vrot.slane %v4103, %v4117
      %v4119 = vlaneseq
      %v4120 = vshrl.u32 %v4119, 7
      %v4121 = vsub.s32 0, %v4120
      %v4122 = vrot.slane %v4104, %v4121
      %v4123 = vlaneseq
      %v4124 = vshrl.u32 %v4123, 7
      %v4125 = vsub.s32 0, %v4124
      %v4126 = vrot.slane %v4105, %v4125
      %v4127 = vlaneseq
      %v4128 = vshrl.u32 %v4127, 7
      %v4129 = vsub.s32 0, %v4128
      %v4130 = vrot.slane %v4106, %v4129
      %v4131 = vlaneseq
      %v4132 = vshrl.u32 %v4131, 7
      %v4133 = vsub.s32 0, %v4132
      %v4134 = vrot.slane %v4107, %v4133
      %v4135 = vlaneseq
      %v4136 = vshrl.u32 %v4135, 7
      %v4137 = vsub.s32 0, %v4136
      %v4138 = vrot.slane %v4108, %v4137
      %v4145 = vadd.f32 %v4091, %v4118
      %v4146 = vadd.f32 %v4092, %v4118
      %v4147 = vadd.f32 %v4093, %v4122
      %v4148 = vadd.f32 %v4094, %v4122
      %v4149 = vadd.f32 %v4095, %v4126
      %v4150 = vadd.f32 %v4096, %v4126
      %v4151 = vadd.f32 %v4097, %v4130
      %v4152 = vadd.f32 %v4098, %v4130
      %v4153 = vadd.f32 %v4099, %v4134
      %v4154 = vadd.f32 %v4100, %v4134
      %v4155 = vadd.f32 %v4101, %v4138
      %v4156 = vadd.f32 %v4102, %v4138
      %v4157 = vmax.f32 %v4145, 0.0
      %v4158 = vmax.f32 %v4146, 0.0
      %v4159 = vmax.f32 %v4147, 0.0
      %v4160 = vmax.f32 %v4148, 0.0
      %v4161 = vmax.f32 %v4149, 0.0
      %v4162 = vmax.f32 %v4150, 0.0
      %v4163 = vmax.f32 %v4151, 0.0
      %v4164 = vmax.f32 %v4152, 0.0
      %v4165 = vmax.f32 %v4153, 0.0
      %v4166 = vmax.f32 %v4154, 0.0
      %v4167 = vmax.f32 %v4155, 0.0
      %v4168 = vmax.f32 %v4156, 0.0
      %4181 = vrot.lane.b32.xlu0 %v4157, 127
      %v4182 = vpop.permute.xlu0 %4181
      %4183 = vrot.lane.b32.xlu0 %v4158, 127
      %v4184 = vpop.permute.xlu0 %4183
      %4185 = vrot.lane.b32.xlu0 %v4159, 127
      %v4186 = vpop.permute.xlu0 %4185
      %4187 = vrot.lane.b32.xlu0 %v4160, 127
      %v4188 = vpop.permute.xlu0 %4187
      %4189 = vrot.lane.b32.xlu0 %v4161, 127
      %v4190 = vpop.permute.xlu0 %4189
      %4191 = vrot.lane.b32.xlu0 %v4162, 127
      %v4192 = vpop.permute.xlu0 %4191
      %4193 = vrot.lane.b32.xlu0 %v4163, 127
      %v4194 = vpop.permute.xlu0 %4193
      %4195 = vrot.lane.b32.xlu0 %v4164, 127
      %v4196 = vpop.permute.xlu0 %4195
      %4197 = vrot.lane.b32.xlu0 %v4165, 127
      %v4198 = vpop.permute.xlu0 %4197
      %4199 = vrot.lane.b32.xlu0 %v4166, 127
      %v4200 = vpop.permute.xlu0 %4199
      %4201 = vrot.lane.b32.xlu0 %v4167, 127
      %v4202 = vpop.permute.xlu0 %4201
      %4203 = vrot.lane.b32.xlu0 %v4168, 127
      %v4204 = vpop.permute.xlu0 %4203
      %v4217 = vmax.f32 %v4157, %v4182
      %v4218 = vmax.f32 %v4158, %v4184
      %v4219 = vmax.f32 %v4159, %v4186
      %v4220 = vmax.f32 %v4160, %v4188
      %v4221 = vmax.f32 %v4161, %v4190
      %v4222 = vmax.f32 %v4162, %v4192
      %v4223 = vmax.f32 %v4163, %v4194
      %v4224 = vmax.f32 %v4164, %v4196
      %v4225 = vmax.f32 %v4165, %v4198
      %v4226 = vmax.f32 %v4166, %v4200
      %v4227 = vmax.f32 %v4167, %v4202
      %v4228 = vmax.f32 %v4168, %v4204
      %vm4229 = vcmask 1046528
      %v4230 = vrot.slane %v4157, 1
      %v4231 = vrot.slane %v4158, 1
      %v4232 = vsel %vm4229, %v4230, %v4231
      %v4233 = vrot.slane %v4159, 1
      %v4234 = vrot.slane %v4160, 1
      %v4235 = vsel %vm4229, %v4233, %v4234
      %v4236 = vrot.slane %v4161, 1
      %v4237 = vrot.slane %v4162, 1
      %v4238 = vsel %vm4229, %v4236, %v4237
      %v4239 = vrot.slane %v4163, 1
      %v4240 = vrot.slane %v4164, 1
      %v4241 = vsel %vm4229, %v4239, %v4240
      %v4242 = vrot.slane %v4165, 1
      %v4243 = vrot.slane %v4166, 1
      %v4244 = vsel %vm4229, %v4242, %v4243
      %v4245 = vrot.slane %v4167, 1
      %v4246 = vrot.slane %v4168, 1
      %v4247 = vsel %vm4229, %v4245, %v4246
      %v4260 = vmax.f32 %v4217, %v4232
      %v4261 = vmax.f32 %v4218, %v4231
      %v4262 = vmax.f32 %v4219, %v4235
      %v4263 = vmax.f32 %v4220, %v4234
      %v4264 = vmax.f32 %v4221, %v4238
      %v4265 = vmax.f32 %v4222, %v4237
      %v4266 = vmax.f32 %v4223, %v4241
      %v4267 = vmax.f32 %v4224, %v4240
      %v4268 = vmax.f32 %v4225, %v4244
      %v4269 = vmax.f32 %v4226, %v4243
      %v4270 = vmax.f32 %v4227, %v4247
      %v4271 = vmax.f32 %v4228, %v4246
      %4272 = vrot.lane.b32.xlu0 %v4232, 127
      %v4273 = vpop.permute.xlu0 %4272
      %4274 = vrot.lane.b32.xlu0 %v4231, 127
      %v4275 = vpop.permute.xlu0 %4274
      %4276 = vrot.lane.b32.xlu0 %v4235, 127
      %v4277 = vpop.permute.xlu0 %4276
      %4278 = vrot.lane.b32.xlu0 %v4234, 127
      %v4279 = vpop.permute.xlu0 %4278
      %4280 = vrot.lane.b32.xlu0 %v4238, 127
      %v4281 = vpop.permute.xlu0 %4280
      %4282 = vrot.lane.b32.xlu0 %v4237, 127
      %v4283 = vpop.permute.xlu0 %4282
      %4284 = vrot.lane.b32.xlu0 %v4241, 127
      %v4285 = vpop.permute.xlu0 %4284
      %4286 = vrot.lane.b32.xlu0 %v4240, 127
      %v4287 = vpop.permute.xlu0 %4286
      %4288 = vrot.lane.b32.xlu0 %v4244, 127
      %v4289 = vpop.permute.xlu0 %4288
      %4290 = vrot.lane.b32.xlu0 %v4243, 127
      %v4291 = vpop.permute.xlu0 %4290
      %4292 = vrot.lane.b32.xlu0 %v4247, 127
      %v4293 = vpop.permute.xlu0 %4292
      %4294 = vrot.lane.b32.xlu0 %v4246, 127
      %v4295 = vpop.permute.xlu0 %4294
      %v4308 = vmax.f32 %v4260, %v4273
      %v4309 = vmax.f32 %v4261, %v4275
      %v4310 = vmax.f32 %v4262, %v4277
      %v4311 = vmax.f32 %v4263, %v4279
      %v4312 = vmax.f32 %v4264, %v4281
      %v4313 = vmax.f32 %v4265, %v4283
      %v4314 = vmax.f32 %v4266, %v4285
      %v4315 = vmax.f32 %v4267, %v4287
      %v4316 = vmax.f32 %v4268, %v4289
      %v4317 = vmax.f32 %v4269, %v4291
      %v4318 = vmax.f32 %v4270, %v4293
      %v4319 = vmax.f32 %v4271, %v4295
      %v4320 = vld [vmem:[%s3] sm:$0x7f]
      %v4321 = vld [vmem:[%s3 + $0x8] sm:$0x7f]
      %v4322 = vld [vmem:[%s3 + $0x10] sm:$0x7f]
      %v4323 = vld [vmem:[%s3 + $0x18] sm:$0x7f]
      %v4324 = vld [vmem:[%s3 + $0x20] sm:$0x7f]
      %v4325 = vld [vmem:[%s3 + $0x28] sm:$0x7f]
      %vm4326 = vcmask 105472
      %v4328 = vsel %vm4326, %v4320, 0
      %vm4330 = vcmask 1044480
      %v4332 = vsel %vm4330, %v4309, 0
      %4334 = vmatprep.subr.mxu0 0.0
      %4335 = vmatpush1.msra.mxu0 %v4308
      %4336 = vmatprep.subr.mxu0 0.0
      %4337 = vmatpush1.msra.mxu0 %v4332
      %4338 = vmatprep.subr.mxu0 0.0
      %4339 = vmatpush1.msra.mxu0 0.0
      %4340 = vmatprep.subr.mxu0 0.0
      %4341 = vmatpush1.msra.mxu0 0.0
      %4342 = vmatprep.subr.mxu0 0.0
      %4343 = vmatpush1.msra.mxu0 0.0
      %4344 = vmatprep.subr.mxu0 0.0
      %4345 = vmatpush1.msra.mxu0 0.0
      %4346 = vmatprep.subr.mxu0 0.0
      %4347 = vmatpush1.msra.mxu0 0.0
      %4348 = vmatprep.subr.mxu0 0.0
      %4349 = vmatpush1.msra.mxu0 0.0
      %4350 = vmatprep.subr.mxu0 0.0
      %4351 = vmatpush1.msra.mxu0 0.0
      %4352 = vmatprep.subr.mxu0 0.0
      %4353 = vmatpush1.msra.mxu0 0.0
      %4354 = vmatprep.subr.mxu0 0.0
      %4355 = vmatpush1.msra.mxu0 0.0
      %4356 = vmatprep.subr.mxu0 0.0
      %4357 = vmatpush1.msra.mxu0 0.0
      %4358 = vmatprep.subr.mxu0 0.0
      %4359 = vmatpush1.msra.mxu0 0.0
      %4360 = vmatprep.subr.mxu0 0.0
      %4361 = vmatpush1.msra.mxu0 0.0
      %4362 = vmatprep.subr.mxu0 0.0
      %4363 = vmatpush1.msra.mxu0 0.0
      %4364 = vmatprep.subr.mxu0 0.0
      %4365 = vmatpush1.msra.mxu0 0.0
      %4366 = vmatprep.subr.mxu0 0.0
      %4367 = vmatpush1.msra.mxu0 0.0
      %4368 = vmatprep.subr.mxu0 0.0
      %4369 = vmatpush1.msra.mxu0 0.0
      %4370 = vmatprep.subr.mxu0 0.0
      %4371 = vmatpush1.msra.mxu0 0.0
      %4372 = vmatprep.subr.mxu0 0.0
      %4373 = vmatpush1.msra.mxu0 0.0
      %4374 = vmatprep.subr.mxu0 0.0
      %4375 = vmatpush1.msra.mxu0 0.0
      %4376 = vmatprep.subr.mxu0 0.0
      %4377 = vmatpush1.msra.mxu0 0.0
      %4378 = vmatprep.subr.mxu0 0.0
      %4379 = vmatpush1.msra.mxu0 0.0
      %4380 = vmatprep.subr.mxu0 0.0
      %4381 = vmatpush1.msra.mxu0 0.0
      %4382 = vmatprep.subr.mxu0 0.0
      %4383 = vmatpush1.msra.mxu0 0.0
      %4384 = vmatprep.subr.mxu0 0.0
      %4385 = vmatpush1.msra.mxu0 0.0
      %4386 = vmatprep.subr.mxu0 0.0
      %4387 = vmatpush1.msra.mxu0 0.0
      %4388 = vmatprep.subr.mxu0 0.0
      %4389 = vmatpush1.msra.mxu0 0.0
      %4390 = vmatprep.subr.mxu0 0.0
      %4391 = vmatpush1.msra.mxu0 0.0
      %4392 = vmatprep.subr.mxu0 0.0
      %4393 = vmatpush1.msra.mxu0 0.0
      %4394 = vmatprep.subr.mxu0 0.0
      %4395 = vmatpush1.msra.mxu0 0.0
      %4396 = vmatprep.subr.mxu0 0.0
      %4397 = vmatpush1.msra.mxu0 0.0
      %4398 = vmatprep.mubr.f32.mxu0 0.0
      %4399 = vmatmul.mubr.f32.gmra.mrb[0].mxu0 %v4328
      %v4400 = vpop.f32.mrb[0].mxu0
      %v4401 = vadd.f32 0.0, %v4400
      %v4402 = vpop.f32.mrb[0].mxu0
      %4403 = vdwg.mxu0
      %v4405 = vsel %vm4326, %v4321, 0
      %v4408 = vsel %vm4330, %v4311, 0
      %4410 = vmatprep.subr.mxu0 0.0
      %4411 = vmatpush1.msra.mxu0 %v4310
      %4412 = vmatprep.subr.mxu0 0.0
      %4413 = vmatpush1.msra.mxu0 %v4408
      %4414 = vmatprep.subr.mxu0 0.0
      %4415 = vmatpush1.msra.mxu0 0.0
      %4416 = vmatprep.subr.mxu0 0.0
      %4417 = vmatpush1.msra.mxu0 0.0
      %4418 = vmatprep.subr.mxu0 0.0
      %4419 = vmatpush1.msra.mxu0 0.0
      %4420 = vmatprep.subr.mxu0 0.0
      %4421 = vmatpush1.msra.mxu0 0.0
      %4422 = vmatprep.subr.mxu0 0.0
      %4423 = vmatpush1.msra.mxu0 0.0
      %4424 = vmatprep.subr.mxu0 0.0
      %4425 = vmatpush1.msra.mxu0 0.0
      %4426 = vmatprep.subr.mxu0 0.0
      %4427 = vmatpush1.msra.mxu0 0.0
      %4428 = vmatprep.subr.mxu0 0.0
      %4429 = vmatpush1.msra.mxu0 0.0
      %4430 = vmatprep.subr.mxu0 0.0
      %4431 = vmatpush1.msra.mxu0 0.0
      %4432 = vmatprep.subr.mxu0 0.0
      %4433 = vmatpush1.msra.mxu0 0.0
      %4434 = vmatprep.subr.mxu0 0.0
      %4435 = vmatpush1.msra.mxu0 0.0
      %4436 = vmatprep.subr.mxu0 0.0
      %4437 = vmatpush1.msra.mxu0 0.0
      %4438 = vmatprep.subr.mxu0 0.0
      %4439 = vmatpush1.msra.mxu0 0.0
      %4440 = vmatprep.subr.mxu0 0.0
      %4441 = vmatpush1.msra.mxu0 0.0
      %4442 = vmatprep.subr.mxu0 0.0
      %4443 = vmatpush1.msra.mxu0 0.0
      %4444 = vmatprep.subr.mxu0 0.0
      %4445 = vmatpush1.msra.mxu0 0.0
      %4446 = vmatprep.subr.mxu0 0.0
      %4447 = vmatpush1.msra.mxu0 0.0
      %4448 = vmatprep.subr.mxu0 0.0
      %4449 = vmatpush1.msra.mxu0 0.0
      %4450 = vmatprep.subr.mxu0 0.0
      %4451 = vmatpush1.msra.mxu0 0.0
      %4452 = vmatprep.subr.mxu0 0.0
      %4453 = vmatpush1.msra.mxu0 0.0
      %4454 = vmatprep.subr.mxu0 0.0
      %4455 = vmatpush1.msra.mxu0 0.0
      %4456 = vmatprep.subr.mxu0 0.0
      %4457 = vmatpush1.msra.mxu0 0.0
      %4458 = vmatprep.subr.mxu0 0.0
      %4459 = vmatpush1.msra.mxu0 0.0
      %4460 = vmatprep.subr.mxu0 0.0
      %4461 = vmatpush1.msra.mxu0 0.0
      %4462 = vmatprep.subr.mxu0 0.0
      %4463 = vmatpush1.msra.mxu0 0.0
      %4464 = vmatprep.subr.mxu0 0.0
      %4465 = vmatpush1.msra.mxu0 0.0
      %4466 = vmatprep.subr.mxu0 0.0
      %4467 = vmatpush1.msra.mxu0 0.0
      %4468 = vmatprep.subr.mxu0 0.0
      %4469 = vmatpush1.msra.mxu0 0.0
      %4470 = vmatprep.subr.mxu0 0.0
      %4471 = vmatpush1.msra.mxu0 0.0
      %4472 = vmatprep.subr.mxu0 0.0
      %4473 = vmatpush1.msra.mxu0 0.0
      %4474 = vmatprep.mubr.f32.mxu0 0.0
      %4475 = vmatmul.mubr.f32.gmra.mrb[0].mxu0 %v4405
      %v4476 = vpop.f32.mrb[0].mxu0
      %v4477 = vadd.f32 0.0, %v4476
      %v4478 = vpop.f32.mrb[0].mxu0
      %4479 = vdwg.mxu0
      %v4481 = vsel %vm4326, %v4322, 0
      %v4484 = vsel %vm4330, %v4313, 0
      %4486 = vmatprep.subr.mxu0 0.0
      %4487 = vmatpush1.msra.mxu0 %v4312
      %4488 = vmatprep.subr.mxu0 0.0
      %4489 = vmatpush1.msra.mxu0 %v4484
      %4490 = vmatprep.subr.mxu0 0.0
      %4491 = vmatpush1.msra.mxu0 0.0
      %4492 = vmatprep.subr.mxu0 0.0
      %4493 = vmatpush1.msra.mxu0 0.0
      %4494 = vmatprep.subr.mxu0 0.0
      %4495 = vmatpush1.msra.mxu0 0.0
      %4496 = vmatprep.subr.mxu0 0.0
      %4497 = vmatpush1.msra.mxu0 0.0
      %4498 = vmatprep.subr.mxu0 0.0
      %4499 = vmatpush1.msra.mxu0 0.0
      %4500 = vmatprep.subr.mxu0 0.0
      %4501 = vmatpush1.msra.mxu0 0.0
      %4502 = vmatprep.subr.mxu0 0.0
      %4503 = vmatpush1.msra.mxu0 0.0
      %4504 = vmatprep.subr.mxu0 0.0
      %4505 = vmatpush1.msra.mxu0 0.0
      %4506 = vmatprep.subr.mxu0 0.0
      %4507 = vmatpush1.msra.mxu0 0.0
      %4508 = vmatprep.subr.mxu0 0.0
      %4509 = vmatpush1.msra.mxu0 0.0
      %4510 = vmatprep.subr.mxu0 0.0
      %4511 = vmatpush1.msra.mxu0 0.0
      %4512 = vmatprep.subr.mxu0 0.0
      %4513 = vmatpush1.msra.mxu0 0.0
      %4514 = vmatprep.subr.mxu0 0.0
      %4515 = vmatpush1.msra.mxu0 0.0
      %4516 = vmatprep.subr.mxu0 0.0
      %4517 = vmatpush1.msra.mxu0 0.0
      %4518 = vmatprep.subr.mxu0 0.0
      %4519 = vmatpush1.msra.mxu0 0.0
      %4520 = vmatprep.subr.mxu0 0.0
      %4521 = vmatpush1.msra.mxu0 0.0
      %4522 = vmatprep.subr.mxu0 0.0
      %4523 = vmatpush1.msra.mxu0 0.0
      %4524 = vmatprep.subr.mxu0 0.0
      %4525 = vmatpush1.msra.mxu0 0.0
      %4526 = vmatprep.subr.mxu0 0.0
      %4527 = vmatpush1.msra.mxu0 0.0
      %4528 = vmatprep.subr.mxu0 0.0
      %4529 = vmatpush1.msra.mxu0 0.0
      %4530 = vmatprep.subr.mxu0 0.0
      %4531 = vmatpush1.msra.mxu0 0.0
      %4532 = vmatprep.subr.mxu0 0.0
      %4533 = vmatpush1.msra.mxu0 0.0
      %4534 = vmatprep.subr.mxu0 0.0
      %4535 = vmatpush1.msra.mxu0 0.0
      %4536 = vmatprep.subr.mxu0 0.0
      %4537 = vmatpush1.msra.mxu0 0.0
      %4538 = vmatprep.subr.mxu0 0.0
      %4539 = vmatpush1.msra.mxu0 0.0
      %4540 = vmatprep.subr.mxu0 0.0
      %4541 = vmatpush1.msra.mxu0 0.0
      %4542 = vmatprep.subr.mxu0 0.0
      %4543 = vmatpush1.msra.mxu0 0.0
      %4544 = vmatprep.subr.mxu0 0.0
      %4545 = vmatpush1.msra.mxu0 0.0
      %4546 = vmatprep.subr.mxu0 0.0
      %4547 = vmatpush1.msra.mxu0 0.0
      %4548 = vmatprep.subr.mxu0 0.0
      %4549 = vmatpush1.msra.mxu0 0.0
      %4550 = vmatprep.mubr.f32.mxu0 0.0
      %4551 = vmatmul.mubr.f32.gmra.mrb[0].mxu0 %v4481
      %v4552 = vpop.f32.mrb[0].mxu0
      %v4553 = vadd.f32 0.0, %v4552
      %v4554 = vpop.f32.mrb[0].mxu0
      %4555 = vdwg.mxu0
      %v4557 = vsel %vm4326, %v4323, 0
      %v4560 = vsel %vm4330, %v4315, 0
      %4562 = vmatprep.subr.mxu0 0.0
      %4563 = vmatpush1.msra.mxu0 %v4314
      %4564 = vmatprep.subr.mxu0 0.0
      %4565 = vmatpush1.msra.mxu0 %v4560
      %4566 = vmatprep.subr.mxu0 0.0
      %4567 = vmatpush1.msra.mxu0 0.0
      %4568 = vmatprep.subr.mxu0 0.0
      %4569 = vmatpush1.msra.mxu0 0.0
      %4570 = vmatprep.subr.mxu0 0.0
      %4571 = vmatpush1.msra.mxu0 0.0
      %4572 = vmatprep.subr.mxu0 0.0
      %4573 = vmatpush1.msra.mxu0 0.0
      %4574 = vmatprep.subr.mxu0 0.0
      %4575 = vmatpush1.msra.mxu0 0.0
      %4576 = vmatprep.subr.mxu0 0.0
      %4577 = vmatpush1.msra.mxu0 0.0
      %4578 = vmatprep.subr.mxu0 0.0
      %4579 = vmatpush1.msra.mxu0 0.0
      %4580 = vmatprep.subr.mxu0 0.0
      %4581 = vmatpush1.msra.mxu0 0.0
      %4582 = vmatprep.subr.mxu0 0.0
      %4583 = vmatpush1.msra.mxu0 0.0
      %4584 = vmatprep.subr.mxu0 0.0
      %4585 = vmatpush1.msra.mxu0 0.0
      %4586 = vmatprep.subr.mxu0 0.0
      %4587 = vmatpush1.msra.mxu0 0.0
      %4588 = vmatprep.subr.mxu0 0.0
      %4589 = vmatpush1.msra.mxu0 0.0
      %4590 = vmatprep.subr.mxu0 0.0
      %4591 = vmatpush1.msra.mxu0 0.0
      %4592 = vmatprep.subr.mxu0 0.0
      %4593 = vmatpush1.msra.mxu0 0.0
      %4594 = vmatprep.subr.mxu0 0.0
      %4595 = vmatpush1.msra.mxu0 0.0
      %4596 = vmatprep.subr.mxu0 0.0
      %4597 = vmatpush1.msra.mxu0 0.0
      %4598 = vmatprep.subr.mxu0 0.0
      %4599 = vmatpush1.msra.mxu0 0.0
      %4600 = vmatprep.subr.mxu0 0.0
      %4601 = vmatpush1.msra.mxu0 0.0
      %4602 = vmatprep.subr.mxu0 0.0
      %4603 = vmatpush1.msra.mxu0 0.0
      %4604 = vmatprep.subr.mxu0 0.0
      %4605 = vmatpush1.msra.mxu0 0.0
      %4606 = vmatprep.subr.mxu0 0.0
      %4607 = vmatpush1.msra.mxu0 0.0
      %4608 = vmatprep.subr.mxu0 0.0
      %4609 = vmatpush1.msra.mxu0 0.0
      %4610 = vmatprep.subr.mxu0 0.0
      %4611 = vmatpush1.msra.mxu0 0.0
      %4612 = vmatprep.subr.mxu0 0.0
      %4613 = vmatpush1.msra.mxu0 0.0
      %4614 = vmatprep.subr.mxu0 0.0
      %4615 = vmatpush1.msra.mxu0 0.0
      %4616 = vmatprep.subr.mxu0 0.0
      %4617 = vmatpush1.msra.mxu0 0.0
      %4618 = vmatprep.subr.mxu0 0.0
      %4619 = vmatpush1.msra.mxu0 0.0
      %4620 = vmatprep.subr.mxu0 0.0
      %4621 = vmatpush1.msra.mxu0 0.0
      %4622 = vmatprep.subr.mxu0 0.0
      %4623 = vmatpush1.msra.mxu0 0.0
      %4624 = vmatprep.subr.mxu0 0.0
      %4625 = vmatpush1.msra.mxu0 0.0
      %4626 = vmatprep.mubr.f32.mxu0 0.0
      %4627 = vmatmul.mubr.f32.gmra.mrb[0].mxu0 %v4557
      %v4628 = vpop.f32.mrb[0].mxu0
      %v4629 = vadd.f32 0.0, %v4628
      %v4630 = vpop.f32.mrb[0].mxu0
      %4631 = vdwg.mxu0
      %v4633 = vsel %vm4326, %v4324, 0
      %v4636 = vsel %vm4330, %v4317, 0
      %4638 = vmatprep.subr.mxu0 0.0
      %4639 = vmatpush1.msra.mxu0 %v4316
      %4640 = vmatprep.subr.mxu0 0.0
      %4641 = vmatpush1.msra.mxu0 %v4636
      %4642 = vmatprep.subr.mxu0 0.0
      %4643 = vmatpush1.msra.mxu0 0.0
      %4644 = vmatprep.subr.mxu0 0.0
      %4645 = vmatpush1.msra.mxu0 0.0
      %4646 = vmatprep.subr.mxu0 0.0
      %4647 = vmatpush1.msra.mxu0 0.0
      %4648 = vmatprep.subr.mxu0 0.0
      %4649 = vmatpush1.msra.mxu0 0.0
      %4650 = vmatprep.subr.mxu0 0.0
      %4651 = vmatpush1.msra.mxu0 0.0
      %4652 = vmatprep.subr.mxu0 0.0
      %4653 = vmatpush1.msra.mxu0 0.0
      %4654 = vmatprep.subr.mxu0 0.0
      %4655 = vmatpush1.msra.mxu0 0.0
      %4656 = vmatprep.subr.mxu0 0.0
      %4657 = vmatpush1.msra.mxu0 0.0
      %4658 = vmatprep.subr.mxu0 0.0
      %4659 = vmatpush1.msra.mxu0 0.0
      %4660 = vmatprep.subr.mxu0 0.0
      %4661 = vmatpush1.msra.mxu0 0.0
      %4662 = vmatprep.subr.mxu0 0.0
      %4663 = vmatpush1.msra.mxu0 0.0
      %4664 = vmatprep.subr.mxu0 0.0
      %4665 = vmatpush1.msra.mxu0 0.0
      %4666 = vmatprep.subr.mxu0 0.0
      %4667 = vmatpush1.msra.mxu0 0.0
      %4668 = vmatprep.subr.mxu0 0.0
      %4669 = vmatpush1.msra.mxu0 0.0
      %4670 = vmatprep.subr.mxu0 0.0
      %4671 = vmatpush1.msra.mxu0 0.0
      %4672 = vmatprep.subr.mxu0 0.0
      %4673 = vmatpush1.msra.mxu0 0.0
      %4674 = vmatprep.subr.mxu0 0.0
      %4675 = vmatpush1.msra.mxu0 0.0
      %4676 = vmatprep.subr.mxu0 0.0
      %4677 = vmatpush1.msra.mxu0 0.0
      %4678 = vmatprep.subr.mxu0 0.0
      %4679 = vmatpush1.msra.mxu0 0.0
      %4680 = vmatprep.subr.mxu0 0.0
      %4681 = vmatpush1.msra.mxu0 0.0
      %4682 = vmatprep.subr.mxu0 0.0
      %4683 = vmatpush1.msra.mxu0 0.0
      %4684 = vmatprep.subr.mxu0 0.0
      %4685 = vmatpush1.msra.mxu0 0.0
      %4686 = vmatprep.subr.mxu0 0.0
      %4687 = vmatpush1.msra.mxu0 0.0
      %4688 = vmatprep.subr.mxu0 0.0
      %4689 = vmatpush1.msra.mxu0 0.0
      %4690 = vmatprep.subr.mxu0 0.0
      %4691 = vmatpush1.msra.mxu0 0.0
      %4692 = vmatprep.subr.mxu0 0.0
      %4693 = vmatpush1.msra.mxu0 0.0
      %4694 = vmatprep.subr.mxu0 0.0
      %4695 = vmatpush1.msra.mxu0 0.0
      %4696 = vmatprep.subr.mxu0 0.0
      %4697 = vmatpush1.msra.mxu0 0.0
      %4698 = vmatprep.subr.mxu0 0.0
      %4699 = vmatpush1.msra.mxu0 0.0
      %4700 = vmatprep.subr.mxu0 0.0
      %4701 = vmatpush1.msra.mxu0 0.0
      %4702 = vmatprep.mubr.f32.mxu0 0.0
      %4703 = vmatmul.mubr.f32.gmra.mrb[0].mxu0 %v4633
      %v4704 = vpop.f32.mrb[0].mxu0
      %v4705 = vadd.f32 0.0, %v4704
      %v4706 = vpop.f32.mrb[0].mxu0
      %4707 = vdwg.mxu0
      %v4709 = vsel %vm4326, %v4325, 0
      %v4712 = vsel %vm4330, %v4319, 0
      %4714 = vmatprep.subr.mxu0 0.0
      %4715 = vmatpush1.msra.mxu0 %v4318
      %4716 = vmatprep.subr.mxu0 0.0
      %4717 = vmatpush1.msra.mxu0 %v4712
      %4718 = vmatprep.subr.mxu0 0.0
      %4719 = vmatpush1.msra.mxu0 0.0
      %4720 = vmatprep.subr.mxu0 0.0
      %4721 = vmatpush1.msra.mxu0 0.0
      %4722 = vmatprep.subr.mxu0 0.0
      %4723 = vmatpush1.msra.mxu0 0.0
      %4724 = vmatprep.subr.mxu0 0.0
      %4725 = vmatpush1.msra.mxu0 0.0
      %4726 = vmatprep.subr.mxu0 0.0
      %4727 = vmatpush1.msra.mxu0 0.0
      %4728 = vmatprep.subr.mxu0 0.0
      %4729 = vmatpush1.msra.mxu0 0.0
      %4730 = vmatprep.subr.mxu0 0.0
      %4731 = vmatpush1.msra.mxu0 0.0
      %4732 = vmatprep.subr.mxu0 0.0
      %4733 = vmatpush1.msra.mxu0 0.0
      %4734 = vmatprep.subr.mxu0 0.0
      %4735 = vmatpush1.msra.mxu0 0.0
      %4736 = vmatprep.subr.mxu0 0.0
      %4737 = vmatpush1.msra.mxu0 0.0
      %4738 = vmatprep.subr.mxu0 0.0
      %4739 = vmatpush1.msra.mxu0 0.0
      %4740 = vmatprep.subr.mxu0 0.0
      %4741 = vmatpush1.msra.mxu0 0.0
      %4742 = vmatprep.subr.mxu0 0.0
      %4743 = vmatpush1.msra.mxu0 0.0
      %4744 = vmatprep.subr.mxu0 0.0
      %4745 = vmatpush1.msra.mxu0 0.0
      %4746 = vmatprep.subr.mxu0 0.0
      %4747 = vmatpush1.msra.mxu0 0.0
      %4748 = vmatprep.subr.mxu0 0.0
      %4749 = vmatpush1.msra.mxu0 0.0
      %4750 = vmatprep.subr.mxu0 0.0
      %4751 = vmatpush1.msra.mxu0 0.0
      %4752 = vmatprep.subr.mxu0 0.0
      %4753 = vmatpush1.msra.mxu0 0.0
      %4754 = vmatprep.subr.mxu0 0.0
      %4755 = vmatpush1.msra.mxu0 0.0
      %4756 = vmatprep.subr.mxu0 0.0
      %4757 = vmatpush1.msra.mxu0 0.0
      %4758 = vmatprep.subr.mxu0 0.0
      %4759 = vmatpush1.msra.mxu0 0.0
      %4760 = vmatprep.subr.mxu0 0.0
      %4761 = vmatpush1.msra.mxu0 0.0
      %4762 = vmatprep.subr.mxu0 0.0
      %4763 = vmatpush1.msra.mxu0 0.0
      %4764 = vmatprep.subr.mxu0 0.0
      %4765 = vmatpush1.msra.mxu0 0.0
      %4766 = vmatprep.subr.mxu0 0.0
      %4767 = vmatpush1.msra.mxu0 0.0
      %4768 = vmatprep.subr.mxu0 0.0
      %4769 = vmatpush1.msra.mxu0 0.0
      %4770 = vmatprep.subr.mxu0 0.0
      %4771 = vmatpush1.msra.mxu0 0.0
      %4772 = vmatprep.subr.mxu0 0.0
      %4773 = vmatpush1.msra.mxu0 0.0
      %4774 = vmatprep.subr.mxu0 0.0
      %4775 = vmatpush1.msra.mxu0 0.0
      %4776 = vmatprep.subr.mxu0 0.0
      %4777 = vmatpush1.msra.mxu0 0.0
      %4778 = vmatprep.mubr.f32.mxu0 0.0
      %4779 = vmatmul.mubr.f32.gmra.mrb[0].mxu0 %v4709
      %v4780 = vpop.f32.mrb[0].mxu0
      %v4781 = vadd.f32 0.0, %v4780
      %v4782 = vpop.f32.mrb[0].mxu0
      %4783 = vdwg.mxu0
      %v4784 = vld [vmem:[%s4] sm:$0xff]
      %v4785 = vld [vmem:[%s4 + $0x8] sm:$0x1f]
      %v4786 = vld [vmem:[%s4 + $0x10] sm:$0xff]
      %v4787 = vld [vmem:[%s4 + $0x18] sm:$0x1f]
      %v4788 = vld [vmem:[%s4 + $0x20] sm:$0xff]
      %v4789 = vld [vmem:[%s4 + $0x28] sm:$0x1f]
      %v4790 = vld [vmem:[%s4 + $0x30] sm:$0xff]
      %v4791 = vld [vmem:[%s4 + $0x38] sm:$0x1f]
      %v4792 = vld [vmem:[%s4 + $0x40] sm:$0xff]
      %v4793 = vld [vmem:[%s4 + $0x48] sm:$0x1f]
      %v4794 = vld [vmem:[%s4 + $0x50] sm:$0xff]
      %v4795 = vld [vmem:[%s4 + $0x58] sm:$0x1f]
      %v4797 = vsel %vm4326, %v4401, 0
      %v4800 = vsel %vm4330, %v4785, 0
      %4802 = vmatprep.subr.mxu0 0.0
      %4803 = vmatpush1.msra.mxu0 %v4784
      %4804 = vmatprep.subr.mxu0 0.0
      %4805 = vmatpush1.msra.mxu0 %v4800
      %4806 = vmatprep.subr.mxu0 0.0
      %4807 = vmatpush1.msra.mxu0 0.0
      %4808 = vmatprep.subr.mxu0 0.0
      %4809 = vmatpush1.msra.mxu0 0.0
      %4810 = vmatprep.subr.mxu0 0.0
      %4811 = vmatpush1.msra.mxu0 0.0
      %4812 = vmatprep.subr.mxu0 0.0
      %4813 = vmatpush1.msra.mxu0 0.0
      %4814 = vmatprep.subr.mxu0 0.0
      %4815 = vmatpush1.msra.mxu0 0.0
      %4816 = vmatprep.subr.mxu0 0.0
      %4817 = vmatpush1.msra.mxu0 0.0
      %4818 = vmatprep.subr.mxu0 0.0
      %4819 = vmatpush1.msra.mxu0 0.0
      %4820 = vmatprep.subr.mxu0 0.0
      %4821 = vmatpush1.msra.mxu0 0.0
      %4822 = vmatprep.subr.mxu0 0.0
      %4823 = vmatpush1.msra.mxu0 0.0
      %4824 = vmatprep.subr.mxu0 0.0
      %4825 = vmatpush1.msra.mxu0 0.0
      %4826 = vmatprep.subr.mxu0 0.0
      %4827 = vmatpush1.msra.mxu0 0.0
      %4828 = vmatprep.subr.mxu0 0.0
      %4829 = vmatpush1.msra.mxu0 0.0
      %4830 = vmatprep.subr.mxu0 0.0
      %4831 = vmatpush1.msra.mxu0 0.0
      %4832 = vmatprep.subr.mxu0 0.0
      %4833 = vmatpush1.msra.mxu0 0.0
      %4834 = vmatprep.subr.mxu0 0.0
      %4835 = vmatpush1.msra.mxu0 0.0
      %4836 = vmatprep.subr.mxu0 0.0
      %4837 = vmatpush1.msra.mxu0 0.0
      %4838 = vmatprep.subr.mxu0 0.0
      %4839 = vmatpush1.msra.mxu0 0.0
      %4840 = vmatprep.subr.mxu0 0.0
      %4841 = vmatpush1.msra.mxu0 0.0
      %4842 = vmatprep.subr.mxu0 0.0
      %4843 = vmatpush1.msra.mxu0 0.0
      %4844 = vmatprep.subr.mxu0 0.0
      %4845 = vmatpush1.msra.mxu0 0.0
      %4846 = vmatprep.subr.mxu0 0.0
      %4847 = vmatpush1.msra.mxu0 0.0
      %4848 = vmatprep.subr.mxu0 0.0
      %4849 = vmatpush1.msra.mxu0 0.0
      %4850 = vmatprep.subr.mxu0 0.0
      %4851 = vmatpush1.msra.mxu0 0.0
      %4852 = vmatprep.subr.mxu0 0.0
      %4853 = vmatpush1.msra.mxu0 0.0
      %4854 = vmatprep.subr.mxu0 0.0
      %4855 = vmatpush1.msra.mxu0 0.0
      %4856 = vmatprep.subr.mxu0 0.0
      %4857 = vmatpush1.msra.mxu0 0.0
      %4858 = vmatprep.subr.mxu0 0.0
      %4859 = vmatpush1.msra.mxu0 0.0
      %4860 = vmatprep.subr.mxu0 0.0
      %4861 = vmatpush1.msra.mxu0 0.0
      %4862 = vmatprep.subr.mxu0 0.0
      %4863 = vmatpush1.msra.mxu0 0.0
      %4864 = vmatprep.subr.mxu0 0.0
      %4865 = vmatpush1.msra.mxu0 0.0
      %4866 = vmatprep.mubr.f32.mxu0 0.0
      %4867 = vmatmul.mubr.f32.gmra.mrb[0].mxu0 %v4797
      %v4868 = vpop.f32.mrb[0].mxu0
      %v4869 = vadd.f32 0.0, %v4868
      %v4870 = vpop.f32.mrb[0].mxu0
      %4871 = vdwg.mxu0
      %v4873 = vsel %vm4326, %v4477, 0
      %v4876 = vsel %vm4330, %v4787, 0
      %4878 = vmatprep.subr.mxu0 0.0
      %4879 = vmatpush1.msra.mxu0 %v4786
      %4880 = vmatprep.subr.mxu0 0.0
      %4881 = vmatpush1.msra.mxu0 %v4876
      %4882 = vmatprep.subr.mxu0 0.0
      %4883 = vmatpush1.msra.mxu0 0.0
      %4884 = vmatprep.subr.mxu0 0.0
      %4885 = vmatpush1.msra.mxu0 0.0
      %4886 = vmatprep.subr.mxu0 0.0
      %4887 = vmatpush1.msra.mxu0 0.0
      %4888 = vmatprep.subr.mxu0 0.0
      %4889 = vmatpush1.msra.mxu0 0.0
      %4890 = vmatprep.subr.mxu0 0.0
      %4891 = vmatpush1.msra.mxu0 0.0
      %4892 = vmatprep.subr.mxu0 0.0
      %4893 = vmatpush1.msra.mxu0 0.0
      %4894 = vmatprep.subr.mxu0 0.0
      %4895 = vmatpush1.msra.mxu0 0.0
      %4896 = vmatprep.subr.mxu0 0.0
      %4897 = vmatpush1.msra.mxu0 0.0
      %4898 = vmatprep.subr.mxu0 0.0
      %4899 = vmatpush1.msra.mxu0 0.0
      %4900 = vmatprep.subr.mxu0 0.0
      %4901 = vmatpush1.msra.mxu0 0.0
      %4902 = vmatprep.subr.mxu0 0.0
      %4903 = vmatpush1.msra.mxu0 0.0
      %4904 = vmatprep.subr.mxu0 0.0
      %4905 = vmatpush1.msra.mxu0 0.0
      %4906 = vmatprep.subr.mxu0 0.0
      %4907 = vmatpush1.msra.mxu0 0.0
      %4908 = vmatprep.subr.mxu0 0.0
      %4909 = vmatpush1.msra.mxu0 0.0
      %4910 = vmatprep.subr.mxu0 0.0
      %4911 = vmatpush1.msra.mxu0 0.0
      %4912 = vmatprep.subr.mxu0 0.0
      %4913 = vmatpush1.msra.mxu0 0.0
      %4914 = vmatprep.subr.mxu0 0.0
      %4915 = vmatpush1.msra.mxu0 0.0
      %4916 = vmatprep.subr.mxu0 0.0
      %4917 = vmatpush1.msra.mxu0 0.0
      %4918 = vmatprep.subr.mxu0 0.0
      %4919 = vmatpush1.msra.mxu0 0.0
      %4920 = vmatprep.subr.mxu0 0.0
      %4921 = vmatpush1.msra.mxu0 0.0
      %4922 = vmatprep.subr.mxu0 0.0
      %4923 = vmatpush1.msra.mxu0 0.0
      %4924 = vmatprep.subr.mxu0 0.0
      %4925 = vmatpush1.msra.mxu0 0.0
      %4926 = vmatprep.subr.mxu0 0.0
      %4927 = vmatpush1.msra.mxu0 0.0
      %4928 = vmatprep.subr.mxu0 0.0
      %4929 = vmatpush1.msra.mxu0 0.0
      %4930 = vmatprep.subr.mxu0 0.0
      %4931 = vmatpush1.msra.mxu0 0.0
      %4932 = vmatprep.subr.mxu0 0.0
      %4933 = vmatpush1.msra.mxu0 0.0
      %4934 = vmatprep.subr.mxu0 0.0
      %4935 = vmatpush1.msra.mxu0 0.0
      %4936 = vmatprep.subr.mxu0 0.0
      %4937 = vmatpush1.msra.mxu0 0.0
      %4938 = vmatprep.subr.mxu0 0.0
      %4939 = vmatpush1.msra.mxu0 0.0
      %4940 = vmatprep.subr.mxu0 0.0
      %4941 = vmatpush1.msra.mxu0 0.0
      %4942 = vmatprep.mubr.f32.mxu0 0.0
      %4943 = vmatmul.mubr.f32.gmra.mrb[0].mxu0 %v4873
      %v4944 = vpop.f32.mrb[0].mxu0
      %v4945 = vadd.f32 0.0, %v4944
      %v4946 = vpop.f32.mrb[0].mxu0
      %4947 = vdwg.mxu0
      %v4949 = vsel %vm4326, %v4553, 0
      %v4952 = vsel %vm4330, %v4789, 0
      %4954 = vmatprep.subr.mxu0 0.0
      %4955 = vmatpush1.msra.mxu0 %v4788
      %4956 = vmatprep.subr.mxu0 0.0
      %4957 = vmatpush1.msra.mxu0 %v4952
      %4958 = vmatprep.subr.mxu0 0.0
      %4959 = vmatpush1.msra.mxu0 0.0
      %4960 = vmatprep.subr.mxu0 0.0
      %4961 = vmatpush1.msra.mxu0 0.0
      %4962 = vmatprep.subr.mxu0 0.0
      %4963 = vmatpush1.msra.mxu0 0.0
      %4964 = vmatprep.subr.mxu0 0.0
      %4965 = vmatpush1.msra.mxu0 0.0
      %4966 = vmatprep.subr.mxu0 0.0
      %4967 = vmatpush1.msra.mxu0 0.0
      %4968 = vmatprep.subr.mxu0 0.0
      %4969 = vmatpush1.msra.mxu0 0.0
      %4970 = vmatprep.subr.mxu0 0.0
      %4971 = vmatpush1.msra.mxu0 0.0
      %4972 = vmatprep.subr.mxu0 0.0
      %4973 = vmatpush1.msra.mxu0 0.0
      %4974 = vmatprep.subr.mxu0 0.0
      %4975 = vmatpush1.msra.mxu0 0.0
      %4976 = vmatprep.subr.mxu0 0.0
      %4977 = vmatpush1.msra.mxu0 0.0
      %4978 = vmatprep.subr.mxu0 0.0
      %4979 = vmatpush1.msra.mxu0 0.0
      %4980 = vmatprep.subr.mxu0 0.0
      %4981 = vmatpush1.msra.mxu0 0.0
      %4982 = vmatprep.subr.mxu0 0.0
      %4983 = vmatpush1.msra.mxu0 0.0
      %4984 = vmatprep.subr.mxu0 0.0
      %4985 = vmatpush1.msra.mxu0 0.0
      %4986 = vmatprep.subr.mxu0 0.0
      %4987 = vmatpush1.msra.mxu0 0.0
      %4988 = vmatprep.subr.mxu0 0.0
      %4989 = vmatpush1.msra.mxu0 0.0
      %4990 = vmatprep.subr.mxu0 0.0
      %4991 = vmatpush1.msra.mxu0 0.0
      %4992 = vmatprep.subr.mxu0 0.0
      %4993 = vmatpush1.msra.mxu0 0.0
      %4994 = vmatprep.subr.mxu0 0.0
      %4995 = vmatpush1.msra.mxu0 0.0
      %4996 = vmatprep.subr.mxu0 0.0
      %4997 = vmatpush1.msra.mxu0 0.0
      %4998 = vmatprep.subr.mxu0 0.0
      %4999 = vmatpush1.msra.mxu0 0.0
      %5000 = vmatprep.subr.mxu0 0.0
      %5001 = vmatpush1.msra.mxu0 0.0
      %5002 = vmatprep.subr.mxu0 0.0
      %5003 = vmatpush1.msra.mxu0 0.0
      %5004 = vmatprep.subr.mxu0 0.0
      %5005 = vmatpush1.msra.mxu0 0.0
      %5006 = vmatprep.subr.mxu0 0.0
      %5007 = vmatpush1.msra.mxu0 0.0
      %5008 = vmatprep.subr.mxu0 0.0
      %5009 = vmatpush1.msra.mxu0 0.0
      %5010 = vmatprep.subr.mxu0 0.0
      %5011 = vmatpush1.msra.mxu0 0.0
      %5012 = vmatprep.subr.mxu0 0.0
      %5013 = vmatpush1.msra.mxu0 0.0
      %5014 = vmatprep.subr.mxu0 0.0
      %5015 = vmatpush1.msra.mxu0 0.0
      %5016 = vmatprep.subr.mxu0 0.0
      %5017 = vmatpush1.msra.mxu0 0.0
      %5018 = vmatprep.mubr.f32.mxu0 0.0
      %5019 = vmatmul.mubr.f32.gmra.mrb[0].mxu0 %v4949
      %v5020 = vpop.f32.mrb[0].mxu0
      %v5021 = vadd.f32 0.0, %v5020
      %v5022 = vpop.f32.mrb[0].mxu0
      %5023 = vdwg.mxu0
      %v5025 = vsel %vm4326, %v4629, 0
      %v5028 = vsel %vm4330, %v4791, 0
      %5030 = vmatprep.subr.mxu0 0.0
      %5031 = vmatpush1.msra.mxu0 %v4790
      %5032 = vmatprep.subr.mxu0 0.0
      %5033 = vmatpush1.msra.mxu0 %v5028
      %5034 = vmatprep.subr.mxu0 0.0
      %5035 = vmatpush1.msra.mxu0 0.0
      %5036 = vmatprep.subr.mxu0 0.0
      %5037 = vmatpush1.msra.mxu0 0.0
      %5038 = vmatprep.subr.mxu0 0.0
      %5039 = vmatpush1.msra.mxu0 0.0
      %5040 = vmatprep.subr.mxu0 0.0
      %5041 = vmatpush1.msra.mxu0 0.0
      %5042 = vmatprep.subr.mxu0 0.0
      %5043 = vmatpush1.msra.mxu0 0.0
      %5044 = vmatprep.subr.mxu0 0.0
      %5045 = vmatpush1.msra.mxu0 0.0
      %5046 = vmatprep.subr.mxu0 0.0
      %5047 = vmatpush1.msra.mxu0 0.0
      %5048 = vmatprep.subr.mxu0 0.0
      %5049 = vmatpush1.msra.mxu0 0.0
      %5050 = vmatprep.subr.mxu0 0.0
      %5051 = vmatpush1.msra.mxu0 0.0
      %5052 = vmatprep.subr.mxu0 0.0
      %5053 = vmatpush1.msra.mxu0 0.0
      %5054 = vmatprep.subr.mxu0 0.0
      %5055 = vmatpush1.msra.mxu0 0.0
      %5056 = vmatprep.subr.mxu0 0.0
      %5057 = vmatpush1.msra.mxu0 0.0
      %5058 = vmatprep.subr.mxu0 0.0
      %5059 = vmatpush1.msra.mxu0 0.0
      %5060 = vmatprep.subr.mxu0 0.0
      %5061 = vmatpush1.msra.mxu0 0.0
      %5062 = vmatprep.subr.mxu0 0.0
      %5063 = vmatpush1.msra.mxu0 0.0
      %5064 = vmatprep.subr.mxu0 0.0
      %5065 = vmatpush1.msra.mxu0 0.0
      %5066 = vmatprep.subr.mxu0 0.0
      %5067 = vmatpush1.msra.mxu0 0.0
      %5068 = vmatprep.subr.mxu0 0.0
      %5069 = vmatpush1.msra.mxu0 0.0
      %5070 = vmatprep.subr.mxu0 0.0
      %5071 = vmatpush1.msra.mxu0 0.0
      %5072 = vmatprep.subr.mxu0 0.0
      %5073 = vmatpush1.msra.mxu0 0.0
      %5074 = vmatprep.subr.mxu0 0.0
      %5075 = vmatpush1.msra.mxu0 0.0
      %5076 = vmatprep.subr.mxu0 0.0
      %5077 = vmatpush1.msra.mxu0 0.0
      %5078 = vmatprep.subr.mxu0 0.0
      %5079 = vmatpush1.msra.mxu0 0.0
      %5080 = vmatprep.subr.mxu0 0.0
      %5081 = vmatpush1.msra.mxu0 0.0
      %5082 = vmatprep.subr.mxu0 0.0
      %5083 = vmatpush1.msra.mxu0 0.0
      %5084 = vmatprep.subr.mxu0 0.0
      %5085 = vmatpush1.msra.mxu0 0.0
      %5086 = vmatprep.subr.mxu0 0.0
      %5087 = vmatpush1.msra.mxu0 0.0
      %5088 = vmatprep.subr.mxu0 0.0
      %5089 = vmatpush1.msra.mxu0 0.0
      %5090 = vmatprep.subr.mxu0 0.0
      %5091 = vmatpush1.msra.mxu0 0.0
      %5092 = vmatprep.subr.mxu0 0.0
      %5093 = vmatpush1.msra.mxu0 0.0
      %5094 = vmatprep.mubr.f32.mxu0 0.0
      %5095 = vmatmul.mubr.f32.gmra.mrb[0].mxu0 %v5025
      %v5096 = vpop.f32.mrb[0].mxu0
      %v5097 = vadd.f32 0.0, %v5096
      %v5098 = vpop.f32.mrb[0].mxu0
      %5099 = vdwg.mxu0
      %v5101 = vsel %vm4326, %v4705, 0
      %v5104 = vsel %vm4330, %v4793, 0
      %5106 = vmatprep.subr.mxu0 0.0
      %5107 = vmatpush1.msra.mxu0 %v4792
      %5108 = vmatprep.subr.mxu0 0.0
      %5109 = vmatpush1.msra.mxu0 %v5104
      %5110 = vmatprep.subr.mxu0 0.0
      %5111 = vmatpush1.msra.mxu0 0.0
      %5112 = vmatprep.subr.mxu0 0.0
      %5113 = vmatpush1.msra.mxu0 0.0
      %5114 = vmatprep.subr.mxu0 0.0
      %5115 = vmatpush1.msra.mxu0 0.0
      %5116 = vmatprep.subr.mxu0 0.0
      %5117 = vmatpush1.msra.mxu0 0.0
      %5118 = vmatprep.subr.mxu0 0.0
      %5119 = vmatpush1.msra.mxu0 0.0
      %5120 = vmatprep.subr.mxu0 0.0
      %5121 = vmatpush1.msra.mxu0 0.0
      %5122 = vmatprep.subr.mxu0 0.0
      %5123 = vmatpush1.msra.mxu0 0.0
      %5124 = vmatprep.subr.mxu0 0.0
      %5125 = vmatpush1.msra.mxu0 0.0
      %5126 = vmatprep.subr.mxu0 0.0
      %5127 = vmatpush1.msra.mxu0 0.0
      %5128 = vmatprep.subr.mxu0 0.0
      %5129 = vmatpush1.msra.mxu0 0.0
      %5130 = vmatprep.subr.mxu0 0.0
      %5131 = vmatpush1.msra.mxu0 0.0
      %5132 = vmatprep.subr.mxu0 0.0
      %5133 = vmatpush1.msra.mxu0 0.0
      %5134 = vmatprep.subr.mxu0 0.0
      %5135 = vmatpush1.msra.mxu0 0.0
      %5136 = vmatprep.subr.mxu0 0.0
      %5137 = vmatpush1.msra.mxu0 0.0
      %5138 = vmatprep.subr.mxu0 0.0
      %5139 = vmatpush1.msra.mxu0 0.0
      %5140 = vmatprep.subr.mxu0 0.0
      %5141 = vmatpush1.msra.mxu0 0.0
      %5142 = vmatprep.subr.mxu0 0.0
      %5143 = vmatpush1.msra.mxu0 0.0
      %5144 = vmatprep.subr.mxu0 0.0
      %5145 = vmatpush1.msra.mxu0 0.0
      %5146 = vmatprep.subr.mxu0 0.0
      %5147 = vmatpush1.msra.mxu0 0.0
      %5148 = vmatprep.subr.mxu0 0.0
      %5149 = vmatpush1.msra.mxu0 0.0
      %5150 = vmatprep.subr.mxu0 0.0
      %5151 = vmatpush1.msra.mxu0 0.0
      %5152 = vmatprep.subr.mxu0 0.0
      %5153 = vmatpush1.msra.mxu0 0.0
      %5154 = vmatprep.subr.mxu0 0.0
      %5155 = vmatpush1.msra.mxu0 0.0
      %5156 = vmatprep.subr.mxu0 0.0
      %5157 = vmatpush1.msra.mxu0 0.0
      %5158 = vmatprep.subr.mxu0 0.0
      %5159 = vmatpush1.msra.mxu0 0.0
      %5160 = vmatprep.subr.mxu0 0.0
      %5161 = vmatpush1.msra.mxu0 0.0
      %5162 = vmatprep.subr.mxu0 0.0
      %5163 = vmatpush1.msra.mxu0 0.0
      %5164 = vmatprep.subr.mxu0 0.0
      %5165 = vmatpush1.msra.mxu0 0.0
      %5166 = vmatprep.subr.mxu0 0.0
      %5167 = vmatpush1.msra.mxu0 0.0
      %5168 = vmatprep.subr.mxu0 0.0
      %5169 = vmatpush1.msra.mxu0 0.0
      %5170 = vmatprep.mubr.f32.mxu0 0.0
      %5171 = vmatmul.mubr.f32.gmra.mrb[0].mxu0 %v5101
      %v5172 = vpop.f32.mrb[0].mxu0
      %v5173 = vadd.f32 0.0, %v5172
      %v5174 = vpop.f32.mrb[0].mxu0
      %5175 = vdwg.mxu0
      %v5177 = vsel %vm4326, %v4781, 0
      %v5180 = vsel %vm4330, %v4795, 0
      %5182 = vmatprep.subr.mxu0 0.0
      %5183 = vmatpush1.msra.mxu0 %v4794
      %5184 = vmatprep.subr.mxu0 0.0
      %5185 = vmatpush1.msra.mxu0 %v5180
      %5186 = vmatprep.subr.mxu0 0.0
      %5187 = vmatpush1.msra.mxu0 0.0
      %5188 = vmatprep.subr.mxu0 0.0
      %5189 = vmatpush1.msra.mxu0 0.0
      %5190 = vmatprep.subr.mxu0 0.0
      %5191 = vmatpush1.msra.mxu0 0.0
      %5192 = vmatprep.subr.mxu0 0.0
      %5193 = vmatpush1.msra.mxu0 0.0
      %5194 = vmatprep.subr.mxu0 0.0
      %5195 = vmatpush1.msra.mxu0 0.0
      %5196 = vmatprep.subr.mxu0 0.0
      %5197 = vmatpush1.msra.mxu0 0.0
      %5198 = vmatprep.subr.mxu0 0.0
      %5199 = vmatpush1.msra.mxu0 0.0
      %5200 = vmatprep.subr.mxu0 0.0
      %5201 = vmatpush1.msra.mxu0 0.0
      %5202 = vmatprep.subr.mxu0 0.0
      %5203 = vmatpush1.msra.mxu0 0.0
      %5204 = vmatprep.subr.mxu0 0.0
      %5205 = vmatpush1.msra.mxu0 0.0
      %5206 = vmatprep.subr.mxu0 0.0
      %5207 = vmatpush1.msra.mxu0 0.0
      %5208 = vmatprep.subr.mxu0 0.0
      %5209 = vmatpush1.msra.mxu0 0.0
      %5210 = vmatprep.subr.mxu0 0.0
      %5211 = vmatpush1.msra.mxu0 0.0
      %5212 = vmatprep.subr.mxu0 0.0
      %5213 = vmatpush1.msra.mxu0 0.0
      %5214 = vmatprep.subr.mxu0 0.0
      %5215 = vmatpush1.msra.mxu0 0.0
      %5216 = vmatprep.subr.mxu0 0.0
      %5217 = vmatpush1.msra.mxu0 0.0
      %5218 = vmatprep.subr.mxu0 0.0
      %5219 = vmatpush1.msra.mxu0 0.0
      %5220 = vmatprep.subr.mxu0 0.0
      %5221 = vmatpush1.msra.mxu0 0.0
      %5222 = vmatprep.subr.mxu0 0.0
      %5223 = vmatpush1.msra.mxu0 0.0
      %5224 = vmatprep.subr.mxu0 0.0
      %5225 = vmatpush1.msra.mxu0 0.0
      %5226 = vmatprep.subr.mxu0 0.0
      %5227 = vmatpush1.msra.mxu0 0.0
      %5228 = vmatprep.subr.mxu0 0.0
      %5229 = vmatpush1.msra.mxu0 0.0
      %5230 = vmatprep.subr.mxu0 0.0
      %5231 = vmatpush1.msra.mxu0 0.0
      %5232 = vmatprep.subr.mxu0 0.0
      %5233 = vmatpush1.msra.mxu0 0.0
      %5234 = vmatprep.subr.mxu0 0.0
      %5235 = vmatpush1.msra.mxu0 0.0
      %5236 = vmatprep.subr.mxu0 0.0
      %5237 = vmatpush1.msra.mxu0 0.0
      %5238 = vmatprep.subr.mxu0 0.0
      %5239 = vmatpush1.msra.mxu0 0.0
      %5240 = vmatprep.subr.mxu0 0.0
      %5241 = vmatpush1.msra.mxu0 0.0
      %5242 = vmatprep.subr.mxu0 0.0
      %5243 = vmatpush1.msra.mxu0 0.0
      %5244 = vmatprep.subr.mxu0 0.0
      %5245 = vmatpush1.msra.mxu0 0.0
      %5246 = vmatprep.mubr.f32.mxu0 0.0
      %5247 = vmatmul.mubr.f32.gmra.mrb[0].mxu0 %v5177
      %v5248 = vpop.f32.mrb[0].mxu0
      %v5249 = vadd.f32 0.0, %v5248
      %v5250 = vpop.f32.mrb[0].mxu0
      %5251 = vdwg.mxu0
      %vm5252 = vcmask 55296
      %5253 = vst.msk [vmem:[%s224] sm:$0x7f] %vm5252, %v4869
      %5254 = vst.msk [vmem:[%s224 + $0x8] sm:$0x7f] %vm5252, %v4945
      %5255 = vst.msk [vmem:[%s224 + $0x10] sm:$0x7f] %vm5252, %v5021
      %5256 = vst.msk [vmem:[%s224 + $0x18] sm:$0x7f] %vm5252, %v5097
      %5257 = vst.msk [vmem:[%s224 + $0x20] sm:$0x7f] %vm5252, %v5173
      %5258 = vst.msk [vmem:[%s224 + $0x28] sm:$0x7f] %vm5252, %v5249
      %p5259 = scmp.lt.s32.totalorder %s16, 1
      %s5260 = scalar_select %p5259, %s16, 1
      %s5261 = smul.addr %s5260, 6
      %s5262 = smul.addr %s5261, 8
      %s5263 = scalar_lea.vmem %s5, %s5262
      // Predicated region
      $region41: #{tpu_custom_call.1} parent=39 // pred_check
        %p5264 = pneg %p144
      $region42: #{tpu_custom_call.1} parent=39 // pred_check_branch
        %5266 = sbr.rel (%p5264) target = $region44
      $region43: #{tpu_custom_call.1} parent=39 // pred_region
        _
      $region44: #{tpu_custom_call.1} parent=39 // pred_fallthru
        _
    $region40: #{tpu_custom_call.1} parent=5 // pred_fallthru
      _
    %p5267 = scmp.le.s32.totalorder 2, %s11
    // Predicated region
    $region45: #{tpu_custom_call.1} parent=5 // pred_check
      %p5268 = pneg %p5267
    $region46: #{tpu_custom_call.1} parent=5 // pred_check_branch
      %5270 = sbr.rel (%p5268) target = $region48
    $region47: #{tpu_custom_call.1} parent=5 // pred_region
      %s5271 = ssub.s32 %s11, 2
      // Predicated region
      $region49: #{tpu_custom_call.1} parent=47 // pred_check
        %p5272 = pneg %p150
      $region50: #{tpu_custom_call.1} parent=47 // pred_check_branch
        %5274 = sbr.rel (%p5272) target = $region52
      $region51: #{tpu_custom_call.1} parent=47 // pred_region
        %p5275 = scmp.lt.s32.totalorder %s17, 1
        %s5276 = scalar_select %p5275, %s17, 1
        %s5277 = smul.addr %s5276, 6
        %s5278 = smul.addr %s5277, 8
        %s5279 = scalar_lea.vmem %s5, %s5278
      $region52: #{tpu_custom_call.1} parent=47 // pred_fallthru
        _
    $region48: #{tpu_custom_call.1} parent=5 // pred_fallthru
      _
  $region6: #{tpu_custom_call.1} parent=0 // loop_footer
    %s15 = sadd.s32 1, %s11
  $region7: #{tpu_custom_call.1} parent=0 // loop_footer_branch
    %10 = sbr.rel target = $region3
  $region8: #{tpu_custom_call.1} parent=0 // loop_exit
    _

</llo_original>
